<compile_context>
chip_gen: v7x
topology: tpu7x:2x2x1
jax: 0.10.0
libtpu: 0.0.40
codegen_flags: <defaults>
</compile_context>

<pallas_src>
import jax
import jax.numpy as jnp
from jax.experimental import pallas as pl
from jax.experimental.pallas import tpu as pltpu


def _round_up(n, m):
    return ((n + m - 1) // m) * m


# ---------------------------------------------------------------------------
# Kernel
# ---------------------------------------------------------------------------
def _make_kernel(out_dims):
    """Build the fused 6-layer kernel. `out_dims` are static layer widths."""

    def kernel(x_ref, w1_ref, w2_ref, w34_ref, w5_ref, w6_ref, b_ref, o_ref):
        h = x_ref[...]  # f32 (TILE_M, D_pad)
        n3, n4 = out_dims[2], out_dims[3]
        ws = (
            w1_ref[...],                     # (D_pad, 1024)
            w2_ref[...],                     # (1024, 512)
            w34_ref[:, :n3],                 # (512, 512)  encoder_output
            w34_ref[:, n3:n3 + n4],          # (512, 512)  decoder_hidden1
            w5_ref[...],                     # (512, 1024)
            w6_ref[...],                     # (1024, D_pad)
        )
        # Unrolled at trace time: bf16 operands into the MXU, f32 accumulation,
        # f32 bias + ReLU epilogue.  Activations never leave VMEM.
        for j, (w, n) in enumerate(zip(ws, out_dims)):
            acc = jnp.dot(h.astype(w.dtype), w,
                          preferred_element_type=jnp.float32)
            h = jnp.maximum(acc + b_ref[j:j + 1, :n], 0.0)
        o_ref[...] = h.astype(o_ref.dtype)

    return kernel


# ---------------------------------------------------------------------------
# Parameter init / packing (packing runs ONCE, outside the hot path)
# ---------------------------------------------------------------------------
def init_linear_params(key, in_features, out_features, w_dtype=jnp.bfloat16):
    """PyTorch-style default init: U(-1/sqrt(in), 1/sqrt(in))."""
    kw, kb = jax.random.split(key)
    bound = 1.0 / (in_features ** 0.5)
    # Stored pre-transposed: (in, out); bf16 to halve HBM weight traffic.
    w_t = jax.random.uniform(
        kw, (in_features, out_features), jnp.float32, minval=-bound, maxval=bound
    ).astype(w_dtype)
    b = jax.random.uniform(
        kb, (out_features,), jnp.float32, minval=-bound, maxval=bound
    )
    return w_t, b


def init_autoencoder_params(key, input_shape):
    dims = [
        (input_shape, 1024),  # encoder_hidden_layer1
        (1024, 512),          # encoder_hidden_layer2
        (512, 512),           # encoder_output_layer
        (512, 512),           # decoder_hidden_layer1
        (512, 1024),          # decoder_hidden_layer2
        (1024, input_shape),  # decoder_output_layer
    ]
    keys = jax.random.split(key, len(dims))
    return [init_linear_params(k, i, o) for k, (i, o) in zip(keys, dims)]


def pack_params(params):
    """Pad / pack raw per-layer params into kernel-ready buffers (run once)."""
    (w1, b1), (w2, b2), (w3, b3), (w4, b4), (w5, b5), (w6, b6) = params
    d = w1.shape[0]                     # original input_shape
    d_pad = _round_up(max(d, 128), 128)

    # Pad first-layer K and last-layer N to the lane-dense feature width.
    w1p = jnp.pad(w1, ((0, d_pad - d), (0, 0)))
    w6p = jnp.pad(w6, ((0, 0), (0, d_pad - d)))
    b6p = jnp.pad(b6, (0, d_pad - d))

    # Pack the two 512x512 weights into one buffer (fewer DMA descriptors).
    w34 = jnp.concatenate([w3, w4], axis=1)          # (512, 1024) bf16

    # Pack all six biases into one padded f32 array, one row per layer.
    out_dims = (w1p.shape[1], w2.shape[1], w3.shape[1],
                w4.shape[1], w5.shape[1], w6p.shape[1])
    width = _round_up(max(out_dims), 128)
    biases = (b1, b2, b3, b4, b5, b6p)
    b_pack = jnp.zeros((len(biases), width), jnp.float32)
    for j, b in enumerate(biases):
        b_pack = b_pack.at[j, :b.shape[0]].set(b.astype(jnp.float32))

    return {"w1": w1p, "w2": w2, "w34": w34, "w5": w5, "w6": w6p, "b": b_pack}


# ---------------------------------------------------------------------------
# Forward
# ---------------------------------------------------------------------------
@jax.jit
def autoencoder_forward(packed, x):
    """Matches Autoencoder.forward: flatten, then 6 x (Linear -> ReLU)."""
    h = x.reshape(x.shape[0], -1).astype(jnp.float32)   # x.view(x.size(0), -1)
    m, d = h.shape

    w1, w2, w34, w5, w6 = (packed["w1"], packed["w2"], packed["w34"],
                           packed["w5"], packed["w6"])
    b_pack = packed["b"]
    d_pad = w1.shape[0]
    out_dims = (w1.shape[1], w2.shape[1], w34.shape[1] // 2,
                w34.shape[1] // 2, w5.shape[1], w6.shape[1])

    # Row tile: up to 256 rows per grid step; pad batch & features with zeros.
    tile_m = min(256, _round_up(m, 8))
    m_pad = _round_up(m, tile_m)
    h_pad = jnp.pad(h, ((0, m_pad - m), (0, d_pad - d)))

    def resident(shape):  # full-array block, same block every grid step
        return pl.BlockSpec(shape, lambda i: (0,) * len(shape))

    out = pl.pallas_call(
        _make_kernel(out_dims),
        out_shape=jax.ShapeDtypeStruct((m_pad, d_pad), jnp.float32),
        grid=(m_pad // tile_m,),
        in_specs=[
            pl.BlockSpec((tile_m, d_pad), lambda i: (i, 0)),   # x tile
            resident(w1.shape),
            resident(w2.shape),
            resident(w34.shape),
            resident(w5.shape),
            resident(w6.shape),
            resident(b_pack.shape),
        ],
        out_specs=pl.BlockSpec((tile_m, d_pad), lambda i: (i, 0)),
        compiler_params=pltpu.CompilerParams(
            dimension_semantics=("parallel",),        # engages both v7x TCs
            vmem_limit_bytes=32 * 1024 * 1024,
        ),
    )(h_pad, w1, w2, w34, w5, w6, b_pack)

    return out[:m, :d]


def autoencoder_reference(params, x):
    """Plain-JAX reference with the same precision path as the kernel."""
    h = x.reshape(x.shape[0], -1).astype(jnp.float32)
    for w_t, b in params:
        acc = jnp.dot(h.astype(w_t.dtype), w_t, preferred_element_type=jnp.float32)
        h = jnp.maximum(acc + b, 0.0)
    return h


# TODO(synk): the PyTorch `fit` training loop (loss/backward/optimizer) is not
# part of the forward pass and is not translated.


if __name__ == "__main__":
    key = jax.random.PRNGKey(0)

    # --- Primary check: input_shape=256 (1x16x16 images), batch=8 ------------
    input_shape = 256
    batch = 8
    k_params, k_x, k2_params, k2_x = jax.random.split(key, 4)

    params = init_autoencoder_params(k_params, input_shape)
    packed = pack_params(params)
    x = jax.random.normal(k_x, (batch, 1, 16, 16), dtype=jnp.float32)

    out = jax.block_until_ready(autoencoder_forward(packed, x))
    assert out.shape == (batch, input_shape), out.shape
    assert out.dtype == jnp.float32
    ref = autoencoder_reference(params, x)
    assert jnp.allclose(out, ref, atol=2e-2, rtol=2e-2), (
        float(jnp.max(jnp.abs(out - ref)))
    )

    # --- Grid / padding check: non-128 feature width, batch > TILE_M ---------
    input_shape2 = 200
    batch2 = 384
    params2 = init_autoencoder_params(k2_params, input_shape2)
    packed2 = pack_params(params2)
    x2 = jax.random.normal(k2_x, (batch2, input_shape2), dtype=jnp.float32)

    out2 = jax.block_until_ready(autoencoder_forward(packed2, x2))
    assert out2.shape == (batch2, input_shape2), out2.shape
    ref2 = autoencoder_reference(params2, x2)
    assert jnp.allclose(out2, ref2, atol=2e-2, rtol=2e-2), (
        float(jnp.max(jnp.abs(out2 - ref2)))
    )

    print("KERNEL_OK")
</pallas_src>

<mosaic_0001>
module attributes {stable_mosaic.version = 11 : i64} {
  func.func @kernel(%arg0: i32, %arg1: memref<8x256xf32, #tpu.memory_space<vmem>>, %arg2: memref<256x1024xbf16, #tpu.memory_space<vmem>>, %arg3: memref<1024x512xbf16, #tpu.memory_space<vmem>>, %arg4: memref<512x1024xbf16, #tpu.memory_space<vmem>>, %arg5: memref<512x1024xbf16, #tpu.memory_space<vmem>>, %arg6: memref<1024x256xbf16, #tpu.memory_space<vmem>>, %arg7: memref<6x1024xf32, #tpu.memory_space<vmem>>, %arg8: memref<8x256xf32, #tpu.memory_space<vmem>>) attributes {dimension_semantics = [#tpu.dimension_semantics<parallel>], iteration_bounds = array<i64: 1>, scalar_prefetch = 0 : i64, scratch_operands = 0 : i64, tpu.core_type = #tpu.core_type<tc>, window_params = [{transform_indices = @transform_0, window_bounds = array<i64: 8, 256>}, {pipeline_mode = #tpu.pipeline_mode<synchronous>, transform_indices = @transform_1, window_bounds = array<i64: 256, 1024>}, {pipeline_mode = #tpu.pipeline_mode<synchronous>, transform_indices = @transform_2, window_bounds = array<i64: 1024, 512>}, {pipeline_mode = #tpu.pipeline_mode<synchronous>, transform_indices = @transform_3, window_bounds = array<i64: 512, 1024>}, {pipeline_mode = #tpu.pipeline_mode<synchronous>, transform_indices = @transform_4, window_bounds = array<i64: 512, 1024>}, {pipeline_mode = #tpu.pipeline_mode<synchronous>, transform_indices = @transform_5, window_bounds = array<i64: 1024, 256>}, {pipeline_mode = #tpu.pipeline_mode<synchronous>, transform_indices = @transform_6, window_bounds = array<i64: 6, 1024>}, {transform_indices = @transform_7, window_bounds = array<i64: 8, 256>}]} {
    %c0 = arith.constant 0 : index
    %c0_0 = arith.constant 0 : index
    %0 = vector.load %arg1[%c0, %c0_0] : memref<8x256xf32, #tpu.memory_space<vmem>>, vector<8x256xf32>
    %c0_1 = arith.constant 0 : index
    %c0_2 = arith.constant 0 : index
    %1 = vector.load %arg2[%c0_1, %c0_2] : memref<256x1024xbf16, #tpu.memory_space<vmem>>, vector<256x1024xbf16>
    %c0_3 = arith.constant 0 : index
    %c0_4 = arith.constant 0 : index
    %2 = vector.load %arg3[%c0_3, %c0_4] : memref<1024x512xbf16, #tpu.memory_space<vmem>>, vector<1024x512xbf16>
    %c0_5 = arith.constant 0 : index
    %c0_6 = arith.constant 0 : index
    %3 = vector.load %arg4[%c0_5, %c0_6] : memref<512x1024xbf16, #tpu.memory_space<vmem>>, vector<512x512xbf16>
    %c0_7 = arith.constant 0 : index
    %c512 = arith.constant 512 : index
    %4 = vector.load %arg4[%c0_7, %c512] : memref<512x1024xbf16, #tpu.memory_space<vmem>>, vector<512x512xbf16>
    %c0_8 = arith.constant 0 : index
    %c0_9 = arith.constant 0 : index
    %5 = vector.load %arg5[%c0_8, %c0_9] : memref<512x1024xbf16, #tpu.memory_space<vmem>>, vector<512x1024xbf16>
    %c0_10 = arith.constant 0 : index
    %c0_11 = arith.constant 0 : index
    %6 = vector.load %arg6[%c0_10, %c0_11] : memref<1024x256xbf16, #tpu.memory_space<vmem>>, vector<1024x256xbf16>
    %7 = arith.truncf %0 : vector<8x256xf32> to vector<8x256xbf16>
    %cst = arith.constant dense<0.000000e+00> : vector<8x1024xf32>
    %8 = tpu.matmul %7, %1, %cst {dimension_numbers = #tpu.dot_dimension_numbers<[1], [0], [0], [1], [0, 0, 1, 1], [], []>} : vector<8x256xbf16>, vector<256x1024xbf16>, vector<8x1024xf32> -> vector<8x1024xf32>
    %c0_12 = arith.constant 0 : index
    %c0_13 = arith.constant 0 : index
    %9 = vector.load %arg7[%c0_12, %c0_13] : memref<6x1024xf32, #tpu.memory_space<vmem>>, vector<1x1024xf32>
    %10 = vector.broadcast %9 : vector<1x1024xf32> to vector<8x1024xf32>
    %11 = arith.addf %8, %10 : vector<8x1024xf32>
    %cst_14 = arith.constant 0.000000e+00 : f32
    %12 = vector.broadcast %cst_14 : f32 to vector<8x1024xf32>
    %13 = arith.maximumf %11, %12 : vector<8x1024xf32>
    %14 = arith.truncf %13 : vector<8x1024xf32> to vector<8x1024xbf16>
    %cst_15 = arith.constant dense<0.000000e+00> : vector<8x512xf32>
    %15 = tpu.matmul %14, %2, %cst_15 {dimension_numbers = #tpu.dot_dimension_numbers<[1], [0], [0], [1], [0, 0, 1, 1], [], []>} : vector<8x1024xbf16>, vector<1024x512xbf16>, vector<8x512xf32> -> vector<8x512xf32>
    %c1 = arith.constant 1 : index
    %c0_16 = arith.constant 0 : index
    %16 = vector.load %arg7[%c1, %c0_16] : memref<6x1024xf32, #tpu.memory_space<vmem>>, vector<1x512xf32>
    %17 = vector.broadcast %16 : vector<1x512xf32> to vector<8x512xf32>
    %18 = arith.addf %15, %17 : vector<8x512xf32>
    %cst_17 = arith.constant 0.000000e+00 : f32
    %19 = vector.broadcast %cst_17 : f32 to vector<8x512xf32>
    %20 = arith.maximumf %18, %19 : vector<8x512xf32>
    %21 = arith.truncf %20 : vector<8x512xf32> to vector<8x512xbf16>
    %cst_18 = arith.constant dense<0.000000e+00> : vector<8x512xf32>
    %22 = tpu.matmul %21, %3, %cst_18 {dimension_numbers = #tpu.dot_dimension_numbers<[1], [0], [0], [1], [0, 0, 1, 1], [], []>} : vector<8x512xbf16>, vector<512x512xbf16>, vector<8x512xf32> -> vector<8x512xf32>
    %c2 = arith.constant 2 : index
    %c0_19 = arith.constant 0 : index
    %23 = vector.load %arg7[%c2, %c0_19] : memref<6x1024xf32, #tpu.memory_space<vmem>>, vector<1x512xf32>
    %24 = vector.broadcast %23 : vector<1x512xf32> to vector<8x512xf32>
    %25 = arith.addf %22, %24 : vector<8x512xf32>
    %cst_20 = arith.constant 0.000000e+00 : f32
    %26 = vector.broadcast %cst_20 : f32 to vector<8x512xf32>
    %27 = arith.maximumf %25, %26 : vector<8x512xf32>
    %28 = arith.truncf %27 : vector<8x512xf32> to vector<8x512xbf16>
    %cst_21 = arith.constant dense<0.000000e+00> : vector<8x512xf32>
    %29 = tpu.matmul %28, %4, %cst_21 {dimension_numbers = #tpu.dot_dimension_numbers<[1], [0], [0], [1], [0, 0, 1, 1], [], []>} : vector<8x512xbf16>, vector<512x512xbf16>, vector<8x512xf32> -> vector<8x512xf32>
    %c3 = arith.constant 3 : index
    %c0_22 = arith.constant 0 : index
    %30 = vector.load %arg7[%c3, %c0_22] : memref<6x1024xf32, #tpu.memory_space<vmem>>, vector<1x512xf32>
    %31 = vector.broadcast %30 : vector<1x512xf32> to vector<8x512xf32>
    %32 = arith.addf %29, %31 : vector<8x512xf32>
    %cst_23 = arith.constant 0.000000e+00 : f32
    %33 = vector.broadcast %cst_23 : f32 to vector<8x512xf32>
    %34 = arith.maximumf %32, %33 : vector<8x512xf32>
    %35 = arith.truncf %34 : vector<8x512xf32> to vector<8x512xbf16>
    %cst_24 = arith.constant dense<0.000000e+00> : vector<8x1024xf32>
    %36 = tpu.matmul %35, %5, %cst_24 {dimension_numbers = #tpu.dot_dimension_numbers<[1], [0], [0], [1], [0, 0, 1, 1], [], []>} : vector<8x512xbf16>, vector<512x1024xbf16>, vector<8x1024xf32> -> vector<8x1024xf32>
    %c4 = arith.constant 4 : index
    %c0_25 = arith.constant 0 : index
    %37 = vector.load %arg7[%c4, %c0_25] : memref<6x1024xf32, #tpu.memory_space<vmem>>, vector<1x1024xf32>
    %38 = vector.broadcast %37 : vector<1x1024xf32> to vector<8x1024xf32>
    %39 = arith.addf %36, %38 : vector<8x1024xf32>
    %cst_26 = arith.constant 0.000000e+00 : f32
    %40 = vector.broadcast %cst_26 : f32 to vector<8x1024xf32>
    %41 = arith.maximumf %39, %40 : vector<8x1024xf32>
    %42 = arith.truncf %41 : vector<8x1024xf32> to vector<8x1024xbf16>
    %cst_27 = arith.constant dense<0.000000e+00> : vector<8x256xf32>
    %43 = tpu.matmul %42, %6, %cst_27 {dimension_numbers = #tpu.dot_dimension_numbers<[1], [0], [0], [1], [0, 0, 1, 1], [], []>} : vector<8x1024xbf16>, vector<1024x256xbf16>, vector<8x256xf32> -> vector<8x256xf32>
    %c5 = arith.constant 5 : index
    %c0_28 = arith.constant 0 : index
    %44 = vector.load %arg7[%c5, %c0_28] : memref<6x1024xf32, #tpu.memory_space<vmem>>, vector<1x256xf32>
    %45 = vector.broadcast %44 : vector<1x256xf32> to vector<8x256xf32>
    %46 = arith.addf %43, %45 : vector<8x256xf32>
    %cst_29 = arith.constant 0.000000e+00 : f32
    %47 = vector.broadcast %cst_29 : f32 to vector<8x256xf32>
    %48 = arith.maximumf %46, %47 : vector<8x256xf32>
    %c0_30 = arith.constant 0 : index
    %c0_31 = arith.constant 0 : index
    %49 = vector.load %arg8[%c0_30, %c0_31] : memref<8x256xf32, #tpu.memory_space<vmem>>, vector<8x256xf32>
    tpu.vector_store %arg8[%c0_30, %c0_31], %48 {strides = array<i32>} : memref<8x256xf32, #tpu.memory_space<vmem>>, vector<8x256xf32>,
    return
  }
  func.func @transform_0(%arg0: i32) -> (i32, i32) {
    %c0_i32 = arith.constant 0 : i32
    %c0_i32_0 = arith.constant 0 : i32
    return %arg0, %c0_i32 : i32, i32
  }
  func.func @transform_1(%arg0: i32) -> (i32, i32) {
    %c0_i32 = arith.constant 0 : i32
    %c0_i32_0 = arith.constant 0 : i32
    %c0_i32_1 = arith.constant 0 : i32
    return %c0_i32, %c0_i32_0 : i32, i32
  }
  func.func @transform_2(%arg0: i32) -> (i32, i32) {
    %c0_i32 = arith.constant 0 : i32
    %c0_i32_0 = arith.constant 0 : i32
    %c0_i32_1 = arith.constant 0 : i32
    return %c0_i32, %c0_i32_0 : i32, i32
  }
  func.func @transform_3(%arg0: i32) -> (i32, i32) {
    %c0_i32 = arith.constant 0 : i32
    %c0_i32_0 = arith.constant 0 : i32
    %c0_i32_1 = arith.constant 0 : i32
    return %c0_i32, %c0_i32_0 : i32, i32
  }
  func.func @transform_4(%arg0: i32) -> (i32, i32) {
    %c0_i32 = arith.constant 0 : i32
    %c0_i32_0 = arith.constant 0 : i32
    %c0_i32_1 = arith.constant 0 : i32
    return %c0_i32, %c0_i32_0 : i32, i32
  }
  func.func @transform_5(%arg0: i32) -> (i32, i32) {
    %c0_i32 = arith.constant 0 : i32
    %c0_i32_0 = arith.constant 0 : i32
    %c0_i32_1 = arith.constant 0 : i32
    return %c0_i32, %c0_i32_0 : i32, i32
  }
  func.func @transform_6(%arg0: i32) -> (i32, i32) {
    %c0_i32 = arith.constant 0 : i32
    %c0_i32_0 = arith.constant 0 : i32
    %c0_i32_1 = arith.constant 0 : i32
    return %c0_i32, %c0_i32_0 : i32, i32
  }
  func.func @transform_7(%arg0: i32) -> (i32, i32) {
    %c0_i32 = arith.constant 0 : i32
    %c0_i32_0 = arith.constant 0 : i32
    return %arg0, %c0_i32 : i32, i32
  }
}

</mosaic_0001>

<llo_original>
// kernel: autoencoder_forward.1
$region0: #{autoencoder_forward.1}
  #allocation0 [shape = 'u32[]', space=smem, size = 0x4, offset = 0x4, fixed_abs, tag = 'smem constant byte address 0x4 - core index']
  #allocation1 [shape = 'u32[144,128]{1,0:T(1,128)}', space=vmem, size = 0x12000, scoped, tag = 'internal scratch']
  %s0 = inlined_call_operand.vmem [shape: f32[8,256], index: 0, kind: input, shape index: {}]
  %s1 = inlined_call_operand.hbm [shape: bf16[256,1024], index: 1, kind: input, shape index: {}]
  %s2 = inlined_call_operand.hbm [shape: bf16[1024,512], index: 2, kind: input, shape index: {}]
  %s3 = inlined_call_operand.hbm [shape: bf16[512,1024], index: 3, kind: input, shape index: {}]
  %s4 = inlined_call_operand.hbm [shape: bf16[512,1024], index: 4, kind: input, shape index: {}]
  %s5 = inlined_call_operand.hbm [shape: bf16[1024,256], index: 5, kind: input, shape index: {}]
  %s6 = inlined_call_operand.vmem [shape: f32[6,1024], index: 6, kind: input, shape index: {}]
  %s7 = inlined_call_operand.hbm [shape: f32[8,256], index: 7, kind: output, shape index: {}]
  %s8 = sld [smem:[#allocation0]]
  $region58: #{autoencoder_forward.1} parent=0
    _
  %s10 = ssub.s32 1, %s8
  %s11 = scalar_select 0, %s10, %s8
  $region1: #{autoencoder_forward.1} parent=0
    #allocation2 [shape = 'u8[524288]{0}', space=vmem, size = 0x80000, scoped, tag = 'input window, operand 1, single buffered']
    #allocation3 [shape = 's32[1]{0}', space=sflag, size = 0x4, scoped, tag = 'scoped memory for autoencoder_forward.1']
    #allocation4 [shape = 's32[1]{0}', space=sflag, size = 0x4, scoped, tag = 'scoped memory for autoencoder_forward.1']
    #allocation5 [shape = 'u8[1048576]{0}', space=vmem, size = 0x100000, scoped, tag = 'input window, operand 2, single buffered']
    #allocation6 [shape = 's32[1]{0}', space=sflag, size = 0x4, scoped, tag = 'scoped memory for autoencoder_forward.1']
    #allocation7 [shape = 'u8[1048576]{0}', space=vmem, size = 0x100000, scoped, tag = 'input window, operand 3, single buffered']
    #allocation8 [shape = 'u8[1048576]{0}', space=vmem, size = 0x100000, scoped, tag = 'input window, operand 4, single buffered']
    #allocation9 [shape = 's32[1]{0}', space=sflag, size = 0x4, scoped, tag = 'scoped memory for autoencoder_forward.1']
    #allocation10 [shape = 'u8[524288]{0}', space=vmem, size = 0x80000, scoped, tag = 'input window, operand 5, single buffered']
    #allocation11 [shape = 'u8[8192]{0}', space=vmem, size = 0x2000, scoped, tag = 'output window, operand 0, single buffered']
    %12 = vsyncpa [#allocation3], 0
    %13 = vsyncpa [#allocation6], 0
    %14 = vsyncpa [#allocation9], 0
    %15 = vsyncpa [#allocation4], 0
    // Predicated region
    $region2: #{autoencoder_forward.1} parent=1 // pred_check
      _
    $region3: #{autoencoder_forward.1} parent=1 // pred_check_branch
      %17 = sbr.rel (0) target = $region5
    $region4: #{autoencoder_forward.1} parent=1 // pred_region
      _
    $region5: #{autoencoder_forward.1} parent=1 // pred_fallthru
      _
    // Predicated region
    $region6: #{autoencoder_forward.1} parent=1 // pred_check
      _
    $region7: #{autoencoder_forward.1} parent=1 // pred_check_branch
      %19 = sbr.rel (0) target = $region9
    $region8: #{autoencoder_forward.1} parent=1 // pred_region
      %s21 = ssub.s32 16384, 16384
      %22 = vsyncadd [#allocation3], %s21
      %s23 = sshll.u32 [#allocation2], 4
      %s24 = int_to_ptr.vmem [resolvable:$true] %s23
      %29 = dma.hbm_to_vmem [thread:$0]  %s1, 16384, %s24, [#allocation3], 512, 512, 32
    $region9: #{autoencoder_forward.1} parent=1 // pred_fallthru
      _
    // Predicated region
    $region10: #{autoencoder_forward.1} parent=1 // pred_check
      _
    $region11: #{autoencoder_forward.1} parent=1 // pred_check_branch
      %31 = sbr.rel (0) target = $region13
    $region12: #{autoencoder_forward.1} parent=1 // pred_region
      %s33 = ssub.s32 32768, 32768
      %34 = vsyncadd [#allocation6], %s33
      %s35 = sshll.u32 [#allocation5], 4
      %s36 = int_to_ptr.vmem [resolvable:$true] %s35
      %41 = dma.hbm_to_vmem [thread:$0]  %s2, 32768, %s36, [#allocation6], 256, 256, 16
    $region13: #{autoencoder_forward.1} parent=1 // pred_fallthru
      _
    // Predicated region
    $region14: #{autoencoder_forward.1} parent=1 // pred_check
      _
    $region15: #{autoencoder_forward.1} parent=1 // pred_check_branch
      %43 = sbr.rel (0) target = $region17
    $region16: #{autoencoder_forward.1} parent=1 // pred_region
      %s45 = ssub.s32 32768, 32768
      %46 = vsyncadd [#allocation6], %s45
      %s47 = sshll.u32 [#allocation7], 4
      %s48 = int_to_ptr.vmem [resolvable:$true] %s47
      %53 = dma.hbm_to_vmem [thread:$0]  %s3, 32768, %s48, [#allocation6], 512, 512, 32
    $region17: #{autoencoder_forward.1} parent=1 // pred_fallthru
      _
    // Predicated region
    $region18: #{autoencoder_forward.1} parent=1 // pred_check
      _
    $region19: #{autoencoder_forward.1} parent=1 // pred_check_branch
      %55 = sbr.rel (0) target = $region21
    $region20: #{autoencoder_forward.1} parent=1 // pred_region
      %s57 = ssub.s32 32768, 32768
      %58 = vsyncadd [#allocation9], %s57
      %s59 = sshll.u32 [#allocation8], 4
      %s60 = int_to_ptr.vmem [resolvable:$true] %s59
      %65 = dma.hbm_to_vmem [thread:$0]  %s4, 32768, %s60, [#allocation9], 512, 512, 32
    $region21: #{autoencoder_forward.1} parent=1 // pred_fallthru
      _
    // Predicated region
    $region22: #{autoencoder_forward.1} parent=1 // pred_check
      _
    $region23: #{autoencoder_forward.1} parent=1 // pred_check_branch
      %67 = sbr.rel (0) target = $region25
    $region24: #{autoencoder_forward.1} parent=1 // pred_region
      %s69 = ssub.s32 16384, 16384
      %70 = vsyncadd [#allocation9], %s69
      %s71 = sshll.u32 [#allocation10], 4
      %s72 = int_to_ptr.vmem [resolvable:$true] %s71
      %77 = dma.hbm_to_vmem [thread:$0]  %s5, 16384, %s72, [#allocation9], 128, 128, 8
    $region25: #{autoencoder_forward.1} parent=1 // pred_fallthru
      _
    // Predicated region
    $region26: #{autoencoder_forward.1} parent=1 // pred_check
      _
    $region27: #{autoencoder_forward.1} parent=1 // pred_check_branch
      %79 = sbr.rel (0) target = $region29
    $region28: #{autoencoder_forward.1} parent=1 // pred_region
      _
    $region29: #{autoencoder_forward.1} parent=1 // pred_fallthru
      _
    // Predicated region
    $region30: #{autoencoder_forward.1} parent=1 // pred_check
      _
    $region31: #{autoencoder_forward.1} parent=1 // pred_check_branch
      %81 = sbr.rel (0) target = $region33
    $region32: #{autoencoder_forward.1} parent=1 // pred_region
      %82 = dma.done [#allocation3], 16384
    $region33: #{autoencoder_forward.1} parent=1 // pred_fallthru
      _
    // Predicated region
    $region34: #{autoencoder_forward.1} parent=1 // pred_check
      _
    $region35: #{autoencoder_forward.1} parent=1 // pred_check_branch
      %84 = sbr.rel (0) target = $region37
    $region36: #{autoencoder_forward.1} parent=1 // pred_region
      %85 = dma.done [#allocation6], 32768
    $region37: #{autoencoder_forward.1} parent=1 // pred_fallthru
      _
    // Predicated region
    $region38: #{autoencoder_forward.1} parent=1 // pred_check
      _
    $region39: #{autoencoder_forward.1} parent=1 // pred_check_branch
      %87 = sbr.rel (0) target = $region41
    $region40: #{autoencoder_forward.1} parent=1 // pred_region
      %88 = dma.done [#allocation6], 32768
    $region41: #{autoencoder_forward.1} parent=1 // pred_fallthru
      _
    // Predicated region
    $region42: #{autoencoder_forward.1} parent=1 // pred_check
      _
    $region43: #{autoencoder_forward.1} parent=1 // pred_check_branch
      %90 = sbr.rel (0) target = $region45
    $region44: #{autoencoder_forward.1} parent=1 // pred_region
      %91 = dma.done [#allocation9], 32768
    $region45: #{autoencoder_forward.1} parent=1 // pred_fallthru
      _
    // Predicated region
    $region46: #{autoencoder_forward.1} parent=1 // pred_check
      _
    $region47: #{autoencoder_forward.1} parent=1 // pred_check_branch
      %93 = sbr.rel (0) target = $region49
    $region48: #{autoencoder_forward.1} parent=1 // pred_region
      %94 = dma.done [#allocation9], 16384
    $region49: #{autoencoder_forward.1} parent=1 // pred_fallthru
      _
    %v95 = vld [vmem:[%s0] sm:$0xff]
    %v96 = vld [vmem:[%s0 + $0x8] sm:$0xff]
    %v97 = vld [vmem:[#allocation2] sm:$0xff]
    %v98 = vld [vmem:[#allocation2 + $0x8] sm:$0xff]
    %v99 = vld [vmem:[#allocation2 + $0x10] sm:$0xff]
    %v100 = vld [vmem:[#allocation2 + $0x18] sm:$0xff]
    %v101 = vld [vmem:[#allocation2 + $0x20] sm:$0xff]
    %v102 = vld [vmem:[#allocation2 + $0x28] sm:$0xff]
    %v103 = vld [vmem:[#allocation2 + $0x30] sm:$0xff]
    %v104 = vld [vmem:[#allocation2 + $0x38] sm:$0xff]
    %v105 = vld [vmem:[#allocation2 + $0x40] sm:$0xff]
    %v106 = vld [vmem:[#allocation2 + $0x48] sm:$0xff]
    %v107 = vld [vmem:[#allocation2 + $0x50] sm:$0xff]
    %v108 = vld [vmem:[#allocation2 + $0x58] sm:$0xff]
    %v109 = vld [vmem:[#allocation2 + $0x60] sm:$0xff]
    %v110 = vld [vmem:[#allocation2 + $0x68] sm:$0xff]
    %v111 = vld [vmem:[#allocation2 + $0x70] sm:$0xff]
    %v112 = vld [vmem:[#allocation2 + $0x78] sm:$0xff]
    %v113 = vld [vmem:[#allocation2 + $0x80] sm:$0xff]
    %v114 = vld [vmem:[#allocation2 + $0x88] sm:$0xff]
    %v115 = vld [vmem:[#allocation2 + $0x90] sm:$0xff]
    %v116 = vld [vmem:[#allocation2 + $0x98] sm:$0xff]
    %v117 = vld [vmem:[#allocation2 + $0xa0] sm:$0xff]
    %v118 = vld [vmem:[#allocation2 + $0xa8] sm:$0xff]
    %v119 = vld [vmem:[#allocation2 + $0xb0] sm:$0xff]
    %v120 = vld [vmem:[#allocation2 + $0xb8] sm:$0xff]
    %v121 = vld [vmem:[#allocation2 + $0xc0] sm:$0xff]
    %v122 = vld [vmem:[#allocation2 + $0xc8] sm:$0xff]
    %v123 = vld [vmem:[#allocation2 + $0xd0] sm:$0xff]
    %v124 = vld [vmem:[#allocation2 + $0xd8] sm:$0xff]
    %v125 = vld [vmem:[#allocation2 + $0xe0] sm:$0xff]
    %v126 = vld [vmem:[#allocation2 + $0xe8] sm:$0xff]
    %v127 = vld [vmem:[#allocation2 + $0xf0] sm:$0xff]
    %v128 = vld [vmem:[#allocation2 + $0xf8] sm:$0xff]
    %v129 = vld [vmem:[#allocation2 + $0x100] sm:$0xff]
    %v130 = vld [vmem:[#allocation2 + $0x108] sm:$0xff]
    %v131 = vld [vmem:[#allocation2 + $0x110] sm:$0xff]
    %v132 = vld [vmem:[#allocation2 + $0x118] sm:$0xff]
    %v133 = vld [vmem:[#allocation2 + $0x120] sm:$0xff]
    %v134 = vld [vmem:[#allocation2 + $0x128] sm:$0xff]
    %v135 = vld [vmem:[#allocation2 + $0x130] sm:$0xff]
    %v136 = vld [vmem:[#allocation2 + $0x138] sm:$0xff]
    %v137 = vld [vmem:[#allocation2 + $0x140] sm:$0xff]
    %v138 = vld [vmem:[#allocation2 + $0x148] sm:$0xff]
    %v139 = vld [vmem:[#allocation2 + $0x150] sm:$0xff]
    %v140 = vld [vmem:[#allocation2 + $0x158] sm:$0xff]
    %v141 = vld [vmem:[#allocation2 + $0x160] sm:$0xff]
    %v142 = vld [vmem:[#allocation2 + $0x168] sm:$0xff]
    %v143 = vld [vmem:[#allocation2 + $0x170] sm:$0xff]
    %v144 = vld [vmem:[#allocation2 + $0x178] sm:$0xff]
    %v145 = vld [vmem:[#allocation2 + $0x180] sm:$0xff]
    %v146 = vld [vmem:[#allocation2 + $0x188] sm:$0xff]
    %v147 = vld [vmem:[#allocation2 + $0x190] sm:$0xff]
    %v148 = vld [vmem:[#allocation2 + $0x198] sm:$0xff]
    %v149 = vld [vmem:[#allocation2 + $0x1a0] sm:$0xff]
    %v150 = vld [vmem:[#allocation2 + $0x1a8] sm:$0xff]
    %v151 = vld [vmem:[#allocation2 + $0x1b0] sm:$0xff]
    %v152 = vld [vmem:[#allocation2 + $0x1b8] sm:$0xff]
    %v153 = vld [vmem:[#allocation2 + $0x1c0] sm:$0xff]
    %v154 = vld [vmem:[#allocation2 + $0x1c8] sm:$0xff]
    %v155 = vld [vmem:[#allocation2 + $0x1d0] sm:$0xff]
    %v156 = vld [vmem:[#allocation2 + $0x1d8] sm:$0xff]
    %v157 = vld [vmem:[#allocation2 + $0x1e0] sm:$0xff]
    %v158 = vld [vmem:[#allocation2 + $0x1e8] sm:$0xff]
    %v159 = vld [vmem:[#allocation2 + $0x1f0] sm:$0xff]
    %v160 = vld [vmem:[#allocation2 + $0x1f8] sm:$0xff]
    %v161 = vld [vmem:[#allocation2 + $0x200] sm:$0xff]
    %v162 = vld [vmem:[#allocation2 + $0x208] sm:$0xff]
    %v163 = vld [vmem:[#allocation2 + $0x210] sm:$0xff]
    %v164 = vld [vmem:[#allocation2 + $0x218] sm:$0xff]
    %v165 = vld [vmem:[#allocation2 + $0x220] sm:$0xff]
    %v166 = vld [vmem:[#allocation2 + $0x228] sm:$0xff]
    %v167 = vld [vmem:[#allocation2 + $0x230] sm:$0xff]
    %v168 = vld [vmem:[#allocation2 + $0x238] sm:$0xff]
    %v169 = vld [vmem:[#allocation2 + $0x240] sm:$0xff]
    %v170 = vld [vmem:[#allocation2 + $0x248] sm:$0xff]
    %v171 = vld [vmem:[#allocation2 + $0x250] sm:$0xff]
    %v172 = vld [vmem:[#allocation2 + $0x258] sm:$0xff]
    %v173 = vld [vmem:[#allocation2 + $0x260] sm:$0xff]
    %v174 = vld [vmem:[#allocation2 + $0x268] sm:$0xff]
    %v175 = vld [vmem:[#allocation2 + $0x270] sm:$0xff]
    %v176 = vld [vmem:[#allocation2 + $0x278] sm:$0xff]
    %v177 = vld [vmem:[#allocation2 + $0x280] sm:$0xff]
    %v178 = vld [vmem:[#allocation2 + $0x288] sm:$0xff]
    %v179 = vld [vmem:[#allocation2 + $0x290] sm:$0xff]
    %v180 = vld [vmem:[#allocation2 + $0x298] sm:$0xff]
    %v181 = vld [vmem:[#allocation2 + $0x2a0] sm:$0xff]
    %v182 = vld [vmem:[#allocation2 + $0x2a8] sm:$0xff]
    %v183 = vld [vmem:[#allocation2 + $0x2b0] sm:$0xff]
    %v184 = vld [vmem:[#allocation2 + $0x2b8] sm:$0xff]
    %v185 = vld [vmem:[#allocation2 + $0x2c0] sm:$0xff]
    %v186 = vld [vmem:[#allocation2 + $0x2c8] sm:$0xff]
    %v187 = vld [vmem:[#allocation2 + $0x2d0] sm:$0xff]
    %v188 = vld [vmem:[#allocation2 + $0x2d8] sm:$0xff]
    %v189 = vld [vmem:[#allocation2 + $0x2e0] sm:$0xff]
    %v190 = vld [vmem:[#allocation2 + $0x2e8] sm:$0xff]
    %v191 = vld [vmem:[#allocation2 + $0x2f0] sm:$0xff]
    %v192 = vld [vmem:[#allocation2 + $0x2f8] sm:$0xff]
    %v193 = vld [vmem:[#allocation2 + $0x300] sm:$0xff]
    %v194 = vld [vmem:[#allocation2 + $0x308] sm:$0xff]
    %v195 = vld [vmem:[#allocation2 + $0x310] sm:$0xff]
    %v196 = vld [vmem:[#allocation2 + $0x318] sm:$0xff]
    %v197 = vld [vmem:[#allocation2 + $0x320] sm:$0xff]
    %v198 = vld [vmem:[#allocation2 + $0x328] sm:$0xff]
    %v199 = vld [vmem:[#allocation2 + $0x330] sm:$0xff]
    %v200 = vld [vmem:[#allocation2 + $0x338] sm:$0xff]
    %v201 = vld [vmem:[#allocation2 + $0x340] sm:$0xff]
    %v202 = vld [vmem:[#allocation2 + $0x348] sm:$0xff]
    %v203 = vld [vmem:[#allocation2 + $0x350] sm:$0xff]
    %v204 = vld [vmem:[#allocation2 + $0x358] sm:$0xff]
    %v205 = vld [vmem:[#allocation2 + $0x360] sm:$0xff]
    %v206 = vld [vmem:[#allocation2 + $0x368] sm:$0xff]
    %v207 = vld [vmem:[#allocation2 + $0x370] sm:$0xff]
    %v208 = vld [vmem:[#allocation2 + $0x378] sm:$0xff]
    %v209 = vld [vmem:[#allocation2 + $0x380] sm:$0xff]
    %v210 = vld [vmem:[#allocation2 + $0x388] sm:$0xff]
    %v211 = vld [vmem:[#allocation2 + $0x390] sm:$0xff]
    %v212 = vld [vmem:[#allocation2 + $0x398] sm:$0xff]
    %v213 = vld [vmem:[#allocation2 + $0x3a0] sm:$0xff]
    %v214 = vld [vmem:[#allocation2 + $0x3a8] sm:$0xff]
    %v215 = vld [vmem:[#allocation2 + $0x3b0] sm:$0xff]
    %v216 = vld [vmem:[#allocation2 + $0x3b8] sm:$0xff]
    %v217 = vld [vmem:[#allocation2 + $0x3c0] sm:$0xff]
    %v218 = vld [vmem:[#allocation2 + $0x3c8] sm:$0xff]
    %v219 = vld [vmem:[#allocation2 + $0x3d0] sm:$0xff]
    %v220 = vld [vmem:[#allocation2 + $0x3d8] sm:$0xff]
    %v221 = vld [vmem:[#allocation2 + $0x3e0] sm:$0xff]
    %v222 = vld [vmem:[#allocation2 + $0x3e8] sm:$0xff]
    %v223 = vld [vmem:[#allocation2 + $0x3f0] sm:$0xff]
    %v224 = vld [vmem:[#allocation2 + $0x3f8] sm:$0xff]
    %v225 = vld [vmem:[#allocation5] sm:$0xff]
    %v226 = vld [vmem:[#allocation5 + $0x8] sm:$0xff]
    %v227 = vld [vmem:[#allocation5 + $0x10] sm:$0xff]
    %v228 = vld [vmem:[#allocation5 + $0x18] sm:$0xff]
    %v229 = vld [vmem:[#allocation5 + $0x20] sm:$0xff]
    %v230 = vld [vmem:[#allocation5 + $0x28] sm:$0xff]
    %v231 = vld [vmem:[#allocation5 + $0x30] sm:$0xff]
    %v232 = vld [vmem:[#allocation5 + $0x38] sm:$0xff]
    %v233 = vld [vmem:[#allocation5 + $0x40] sm:$0xff]
    %v234 = vld [vmem:[#allocation5 + $0x48] sm:$0xff]
    %v235 = vld [vmem:[#allocation5 + $0x50] sm:$0xff]
    %v236 = vld [vmem:[#allocation5 + $0x58] sm:$0xff]
    %v237 = vld [vmem:[#allocation5 + $0x60] sm:$0xff]
    %v238 = vld [vmem:[#allocation5 + $0x68] sm:$0xff]
    %v239 = vld [vmem:[#allocation5 + $0x70] sm:$0xff]
    %v240 = vld [vmem:[#allocation5 + $0x78] sm:$0xff]
    %v241 = vld [vmem:[#allocation5 + $0x80] sm:$0xff]
    %v242 = vld [vmem:[#allocation5 + $0x88] sm:$0xff]
    %v243 = vld [vmem:[#allocation5 + $0x90] sm:$0xff]
    %v244 = vld [vmem:[#allocation5 + $0x98] sm:$0xff]
    %v245 = vld [vmem:[#allocation5 + $0xa0] sm:$0xff]
    %v246 = vld [vmem:[#allocation5 + $0xa8] sm:$0xff]
    %v247 = vld [vmem:[#allocation5 + $0xb0] sm:$0xff]
    %v248 = vld [vmem:[#allocation5 + $0xb8] sm:$0xff]
    %v249 = vld [vmem:[#allocation5 + $0xc0] sm:$0xff]
    %v250 = vld [vmem:[#allocation5 + $0xc8] sm:$0xff]
    %v251 = vld [vmem:[#allocation5 + $0xd0] sm:$0xff]
    %v252 = vld [vmem:[#allocation5 + $0xd8] sm:$0xff]
    %v253 = vld [vmem:[#allocation5 + $0xe0] sm:$0xff]
    %v254 = vld [vmem:[#allocation5 + $0xe8] sm:$0xff]
    %v255 = vld [vmem:[#allocation5 + $0xf0] sm:$0xff]
    %v256 = vld [vmem:[#allocation5 + $0xf8] sm:$0xff]
    %v257 = vld [vmem:[#allocation5 + $0x100] sm:$0xff]
    %v258 = vld [vmem:[#allocation5 + $0x108] sm:$0xff]
    %v259 = vld [vmem:[#allocation5 + $0x110] sm:$0xff]
    %v260 = vld [vmem:[#allocation5 + $0x118] sm:$0xff]
    %v261 = vld [vmem:[#allocation5 + $0x120] sm:$0xff]
    %v262 = vld [vmem:[#allocation5 + $0x128] sm:$0xff]
    %v263 = vld [vmem:[#allocation5 + $0x130] sm:$0xff]
    %v264 = vld [vmem:[#allocation5 + $0x138] sm:$0xff]
    %v265 = vld [vmem:[#allocation5 + $0x140] sm:$0xff]
    %v266 = vld [vmem:[#allocation5 + $0x148] sm:$0xff]
    %v267 = vld [vmem:[#allocation5 + $0x150] sm:$0xff]
    %v268 = vld [vmem:[#allocation5 + $0x158] sm:$0xff]
    %v269 = vld [vmem:[#allocation5 + $0x160] sm:$0xff]
    %v270 = vld [vmem:[#allocation5 + $0x168] sm:$0xff]
    %v271 = vld [vmem:[#allocation5 + $0x170] sm:$0xff]
    %v272 = vld [vmem:[#allocation5 + $0x178] sm:$0xff]
    %v273 = vld [vmem:[#allocation5 + $0x180] sm:$0xff]
    %v274 = vld [vmem:[#allocation5 + $0x188] sm:$0xff]
    %v275 = vld [vmem:[#allocation5 + $0x190] sm:$0xff]
    %v276 = vld [vmem:[#allocation5 + $0x198] sm:$0xff]
    %v277 = vld [vmem:[#allocation5 + $0x1a0] sm:$0xff]
    %v278 = vld [vmem:[#allocation5 + $0x1a8] sm:$0xff]
    %v279 = vld [vmem:[#allocation5 + $0x1b0] sm:$0xff]
    %v280 = vld [vmem:[#allocation5 + $0x1b8] sm:$0xff]
    %v281 = vld [vmem:[#allocation5 + $0x1c0] sm:$0xff]
    %v282 = vld [vmem:[#allocation5 + $0x1c8] sm:$0xff]
    %v283 = vld [vmem:[#allocation5 + $0x1d0] sm:$0xff]
    %v284 = vld [vmem:[#allocation5 + $0x1d8] sm:$0xff]
    %v285 = vld [vmem:[#allocation5 + $0x1e0] sm:$0xff]
    %v286 = vld [vmem:[#allocation5 + $0x1e8] sm:$0xff]
    %v287 = vld [vmem:[#allocation5 + $0x1f0] sm:$0xff]
    %v288 = vld [vmem:[#allocation5 + $0x1f8] sm:$0xff]
    %v289 = vld [vmem:[#allocation5 + $0x200] sm:$0xff]
    %v290 = vld [vmem:[#allocation5 + $0x208] sm:$0xff]
    %v291 = vld [vmem:[#allocation5 + $0x210] sm:$0xff]
    %v292 = vld [vmem:[#allocation5 + $0x218] sm:$0xff]
    %v293 = vld [vmem:[#allocation5 + $0x220] sm:$0xff]
    %v294 = vld [vmem:[#allocation5 + $0x228] sm:$0xff]
    %v295 = vld [vmem:[#allocation5 + $0x230] sm:$0xff]
    %v296 = vld [vmem:[#allocation5 + $0x238] sm:$0xff]
    %v297 = vld [vmem:[#allocation5 + $0x240] sm:$0xff]
    %v298 = vld [vmem:[#allocation5 + $0x248] sm:$0xff]
    %v299 = vld [vmem:[#allocation5 + $0x250] sm:$0xff]
    %v300 = vld [vmem:[#allocation5 + $0x258] sm:$0xff]
    %v301 = vld [vmem:[#allocation5 + $0x260] sm:$0xff]
    %v302 = vld [vmem:[#allocation5 + $0x268] sm:$0xff]
    %v303 = vld [vmem:[#allocation5 + $0x270] sm:$0xff]
    %v304 = vld [vmem:[#allocation5 + $0x278] sm:$0xff]
    %v305 = vld [vmem:[#allocation5 + $0x280] sm:$0xff]
    %v306 = vld [vmem:[#allocation5 + $0x288] sm:$0xff]
    %v307 = vld [vmem:[#allocation5 + $0x290] sm:$0xff]
    %v308 = vld [vmem:[#allocation5 + $0x298] sm:$0xff]
    %v309 = vld [vmem:[#allocation5 + $0x2a0] sm:$0xff]
    %v310 = vld [vmem:[#allocation5 + $0x2a8] sm:$0xff]
    %v311 = vld [vmem:[#allocation5 + $0x2b0] sm:$0xff]
    %v312 = vld [vmem:[#allocation5 + $0x2b8] sm:$0xff]
    %v313 = vld [vmem:[#allocation5 + $0x2c0] sm:$0xff]
    %v314 = vld [vmem:[#allocation5 + $0x2c8] sm:$0xff]
    %v315 = vld [vmem:[#allocation5 + $0x2d0] sm:$0xff]
    %v316 = vld [vmem:[#allocation5 + $0x2d8] sm:$0xff]
    %v317 = vld [vmem:[#allocation5 + $0x2e0] sm:$0xff]
    %v318 = vld [vmem:[#allocation5 + $0x2e8] sm:$0xff]
    %v319 = vld [vmem:[#allocation5 + $0x2f0] sm:$0xff]
    %v320 = vld [vmem:[#allocation5 + $0x2f8] sm:$0xff]
    %v321 = vld [vmem:[#allocation5 + $0x300] sm:$0xff]
    %v322 = vld [vmem:[#allocation5 + $0x308] sm:$0xff]
    %v323 = vld [vmem:[#allocation5 + $0x310] sm:$0xff]
    %v324 = vld [vmem:[#allocation5 + $0x318] sm:$0xff]
    %v325 = vld [vmem:[#allocation5 + $0x320] sm:$0xff]
    %v326 = vld [vmem:[#allocation5 + $0x328] sm:$0xff]
    %v327 = vld [vmem:[#allocation5 + $0x330] sm:$0xff]
    %v328 = vld [vmem:[#allocation5 + $0x338] sm:$0xff]
    %v329 = vld [vmem:[#allocation5 + $0x340] sm:$0xff]
    %v330 = vld [vmem:[#allocation5 + $0x348] sm:$0xff]
    %v331 = vld [vmem:[#allocation5 + $0x350] sm:$0xff]
    %v332 = vld [vmem:[#allocation5 + $0x358] sm:$0xff]
    %v333 = vld [vmem:[#allocation5 + $0x360] sm:$0xff]
    %v334 = vld [vmem:[#allocation5 + $0x368] sm:$0xff]
    %v335 = vld [vmem:[#allocation5 + $0x370] sm:$0xff]
    %v336 = vld [vmem:[#allocation5 + $0x378] sm:$0xff]
    %v337 = vld [vmem:[#allocation5 + $0x380] sm:$0xff]
    %v338 = vld [vmem:[#allocation5 + $0x388] sm:$0xff]
    %v339 = vld [vmem:[#allocation5 + $0x390] sm:$0xff]
    %v340 = vld [vmem:[#allocation5 + $0x398] sm:$0xff]
    %v341 = vld [vmem:[#allocation5 + $0x3a0] sm:$0xff]
    %v342 = vld [vmem:[#allocation5 + $0x3a8] sm:$0xff]
    %v343 = vld [vmem:[#allocation5 + $0x3b0] sm:$0xff]
    %v344 = vld [vmem:[#allocation5 + $0x3b8] sm:$0xff]
    %v345 = vld [vmem:[#allocation5 + $0x3c0] sm:$0xff]
    %v346 = vld [vmem:[#allocation5 + $0x3c8] sm:$0xff]
    %v347 = vld [vmem:[#allocation5 + $0x3d0] sm:$0xff]
    %v348 = vld [vmem:[#allocation5 + $0x3d8] sm:$0xff]
    %v349 = vld [vmem:[#allocation5 + $0x3e0] sm:$0xff]
    %v350 = vld [vmem:[#allocation5 + $0x3e8] sm:$0xff]
    %v351 = vld [vmem:[#allocation5 + $0x3f0] sm:$0xff]
    %v352 = vld [vmem:[#allocation5 + $0x3f8] sm:$0xff]
    %v353 = vld [vmem:[#allocation5 + $0x400] sm:$0xff]
    %v354 = vld [vmem:[#allocation5 + $0x408] sm:$0xff]
    %v355 = vld [vmem:[#allocation5 + $0x410] sm:$0xff]
    %v356 = vld [vmem:[#allocation5 + $0x418] sm:$0xff]
    %v357 = vld [vmem:[#allocation5 + $0x420] sm:$0xff]
    %v358 = vld [vmem:[#allocation5 + $0x428] sm:$0xff]
    %v359 = vld [vmem:[#allocation5 + $0x430] sm:$0xff]
    %v360 = vld [vmem:[#allocation5 + $0x438] sm:$0xff]
    %v361 = vld [vmem:[#allocation5 + $0x440] sm:$0xff]
    %v362 = vld [vmem:[#allocation5 + $0x448] sm:$0xff]
    %v363 = vld [vmem:[#allocation5 + $0x450] sm:$0xff]
    %v364 = vld [vmem:[#allocation5 + $0x458] sm:$0xff]
    %v365 = vld [vmem:[#allocation5 + $0x460] sm:$0xff]
    %v366 = vld [vmem:[#allocation5 + $0x468] sm:$0xff]
    %v367 = vld [vmem:[#allocation5 + $0x470] sm:$0xff]
    %v368 = vld [vmem:[#allocation5 + $0x478] sm:$0xff]
    %v369 = vld [vmem:[#allocation5 + $0x480] sm:$0xff]
    %v370 = vld [vmem:[#allocation5 + $0x488] sm:$0xff]
    %v371 = vld [vmem:[#allocation5 + $0x490] sm:$0xff]
    %v372 = vld [vmem:[#allocation5 + $0x498] sm:$0xff]
    %v373 = vld [vmem:[#allocation5 + $0x4a0] sm:$0xff]
    %v374 = vld [vmem:[#allocation5 + $0x4a8] sm:$0xff]
    %v375 = vld [vmem:[#allocation5 + $0x4b0] sm:$0xff]
    %v376 = vld [vmem:[#allocation5 + $0x4b8] sm:$0xff]
    %v377 = vld [vmem:[#allocation5 + $0x4c0] sm:$0xff]
    %v378 = vld [vmem:[#allocation5 + $0x4c8] sm:$0xff]
    %v379 = vld [vmem:[#allocation5 + $0x4d0] sm:$0xff]
    %v380 = vld [vmem:[#allocation5 + $0x4d8] sm:$0xff]
    %v381 = vld [vmem:[#allocation5 + $0x4e0] sm:$0xff]
    %v382 = vld [vmem:[#allocation5 + $0x4e8] sm:$0xff]
    %v383 = vld [vmem:[#allocation5 + $0x4f0] sm:$0xff]
    %v384 = vld [vmem:[#allocation5 + $0x4f8] sm:$0xff]
    %v385 = vld [vmem:[#allocation5 + $0x500] sm:$0xff]
    %v386 = vld [vmem:[#allocation5 + $0x508] sm:$0xff]
    %v387 = vld [vmem:[#allocation5 + $0x510] sm:$0xff]
    %v388 = vld [vmem:[#allocation5 + $0x518] sm:$0xff]
    %v389 = vld [vmem:[#allocation5 + $0x520] sm:$0xff]
    %v390 = vld [vmem:[#allocation5 + $0x528] sm:$0xff]
    %v391 = vld [vmem:[#allocation5 + $0x530] sm:$0xff]
    %v392 = vld [vmem:[#allocation5 + $0x538] sm:$0xff]
    %v393 = vld [vmem:[#allocation5 + $0x540] sm:$0xff]
    %v394 = vld [vmem:[#allocation5 + $0x548] sm:$0xff]
    %v395 = vld [vmem:[#allocation5 + $0x550] sm:$0xff]
    %v396 = vld [vmem:[#allocation5 + $0x558] sm:$0xff]
    %v397 = vld [vmem:[#allocation5 + $0x560] sm:$0xff]
    %v398 = vld [vmem:[#allocation5 + $0x568] sm:$0xff]
    %v399 = vld [vmem:[#allocation5 + $0x570] sm:$0xff]
    %v400 = vld [vmem:[#allocation5 + $0x578] sm:$0xff]
    %v401 = vld [vmem:[#allocation5 + $0x580] sm:$0xff]
    %v402 = vld [vmem:[#allocation5 + $0x588] sm:$0xff]
    %v403 = vld [vmem:[#allocation5 + $0x590] sm:$0xff]
    %v404 = vld [vmem:[#allocation5 + $0x598] sm:$0xff]
    %v405 = vld [vmem:[#allocation5 + $0x5a0] sm:$0xff]
    %v406 = vld [vmem:[#allocation5 + $0x5a8] sm:$0xff]
    %v407 = vld [vmem:[#allocation5 + $0x5b0] sm:$0xff]
    %v408 = vld [vmem:[#allocation5 + $0x5b8] sm:$0xff]
    %v409 = vld [vmem:[#allocation5 + $0x5c0] sm:$0xff]
    %v410 = vld [vmem:[#allocation5 + $0x5c8] sm:$0xff]
    %v411 = vld [vmem:[#allocation5 + $0x5d0] sm:$0xff]
    %v412 = vld [vmem:[#allocation5 + $0x5d8] sm:$0xff]
    %v413 = vld [vmem:[#allocation5 + $0x5e0] sm:$0xff]
    %v414 = vld [vmem:[#allocation5 + $0x5e8] sm:$0xff]
    %v415 = vld [vmem:[#allocation5 + $0x5f0] sm:$0xff]
    %v416 = vld [vmem:[#allocation5 + $0x5f8] sm:$0xff]
    %v417 = vld [vmem:[#allocation5 + $0x600] sm:$0xff]
    %v418 = vld [vmem:[#allocation5 + $0x608] sm:$0xff]
    %v419 = vld [vmem:[#allocation5 + $0x610] sm:$0xff]
    %v420 = vld [vmem:[#allocation5 + $0x618] sm:$0xff]
    %v421 = vld [vmem:[#allocation5 + $0x620] sm:$0xff]
    %v422 = vld [vmem:[#allocation5 + $0x628] sm:$0xff]
    %v423 = vld [vmem:[#allocation5 + $0x630] sm:$0xff]
    %v424 = vld [vmem:[#allocation5 + $0x638] sm:$0xff]
    %v425 = vld [vmem:[#allocation5 + $0x640] sm:$0xff]
    %v426 = vld [vmem:[#allocation5 + $0x648] sm:$0xff]
    %v427 = vld [vmem:[#allocation5 + $0x650] sm:$0xff]
    %v428 = vld [vmem:[#allocation5 + $0x658] sm:$0xff]
    %v429 = vld [vmem:[#allocation5 + $0x660] sm:$0xff]
    %v430 = vld [vmem:[#allocation5 + $0x668] sm:$0xff]
    %v431 = vld [vmem:[#allocation5 + $0x670] sm:$0xff]
    %v432 = vld [vmem:[#allocation5 + $0x678] sm:$0xff]
    %v433 = vld [vmem:[#allocation5 + $0x680] sm:$0xff]
    %v434 = vld [vmem:[#allocation5 + $0x688] sm:$0xff]
    %v435 = vld [vmem:[#allocation5 + $0x690] sm:$0xff]
    %v436 = vld [vmem:[#allocation5 + $0x698] sm:$0xff]
    %v437 = vld [vmem:[#allocation5 + $0x6a0] sm:$0xff]
    %v438 = vld [vmem:[#allocation5 + $0x6a8] sm:$0xff]
    %v439 = vld [vmem:[#allocation5 + $0x6b0] sm:$0xff]
    %v440 = vld [vmem:[#allocation5 + $0x6b8] sm:$0xff]
    %v441 = vld [vmem:[#allocation5 + $0x6c0] sm:$0xff]
    %v442 = vld [vmem:[#allocation5 + $0x6c8] sm:$0xff]
    %v443 = vld [vmem:[#allocation5 + $0x6d0] sm:$0xff]
    %v444 = vld [vmem:[#allocation5 + $0x6d8] sm:$0xff]
    %v445 = vld [vmem:[#allocation5 + $0x6e0] sm:$0xff]
    %v446 = vld [vmem:[#allocation5 + $0x6e8] sm:$0xff]
    %v447 = vld [vmem:[#allocation5 + $0x6f0] sm:$0xff]
    %v448 = vld [vmem:[#allocation5 + $0x6f8] sm:$0xff]
    %v449 = vld [vmem:[#allocation5 + $0x700] sm:$0xff]
    %v450 = vld [vmem:[#allocation5 + $0x708] sm:$0xff]
    %v451 = vld [vmem:[#allocation5 + $0x710] sm:$0xff]
    %v452 = vld [vmem:[#allocation5 + $0x718] sm:$0xff]
    %v453 = vld [vmem:[#allocation5 + $0x720] sm:$0xff]
    %v454 = vld [vmem:[#allocation5 + $0x728] sm:$0xff]
    %v455 = vld [vmem:[#allocation5 + $0x730] sm:$0xff]
    %v456 = vld [vmem:[#allocation5 + $0x738] sm:$0xff]
    %v457 = vld [vmem:[#allocation5 + $0x740] sm:$0xff]
    %v458 = vld [vmem:[#allocation5 + $0x748] sm:$0xff]
    %v459 = vld [vmem:[#allocation5 + $0x750] sm:$0xff]
    %v460 = vld [vmem:[#allocation5 + $0x758] sm:$0xff]
    %v461 = vld [vmem:[#allocation5 + $0x760] sm:$0xff]
    %v462 = vld [vmem:[#allocation5 + $0x768] sm:$0xff]
    %v463 = vld [vmem:[#allocation5 + $0x770] sm:$0xff]
    %v464 = vld [vmem:[#allocation5 + $0x778] sm:$0xff]
    %v465 = vld [vmem:[#allocation5 + $0x780] sm:$0xff]
    %v466 = vld [vmem:[#allocation5 + $0x788] sm:$0xff]
    %v467 = vld [vmem:[#allocation5 + $0x790] sm:$0xff]
    %v468 = vld [vmem:[#allocation5 + $0x798] sm:$0xff]
    %v469 = vld [vmem:[#allocation5 + $0x7a0] sm:$0xff]
    %v470 = vld [vmem:[#allocation5 + $0x7a8] sm:$0xff]
    %v471 = vld [vmem:[#allocation5 + $0x7b0] sm:$0xff]
    %v472 = vld [vmem:[#allocation5 + $0x7b8] sm:$0xff]
    %v473 = vld [vmem:[#allocation5 + $0x7c0] sm:$0xff]
    %v474 = vld [vmem:[#allocation5 + $0x7c8] sm:$0xff]
    %v475 = vld [vmem:[#allocation5 + $0x7d0] sm:$0xff]
    %v476 = vld [vmem:[#allocation5 + $0x7d8] sm:$0xff]
    %v477 = vld [vmem:[#allocation5 + $0x7e0] sm:$0xff]
    %v478 = vld [vmem:[#allocation5 + $0x7e8] sm:$0xff]
    %v479 = vld [vmem:[#allocation5 + $0x7f0] sm:$0xff]
    %v480 = vld [vmem:[#allocation5 + $0x7f8] sm:$0xff]
    %v481 = vld [vmem:[#allocation7] sm:$0xff]
    %v482 = vld [vmem:[#allocation7 + $0x8] sm:$0xff]
    %v483 = vld [vmem:[#allocation7 + $0x20] sm:$0xff]
    %v484 = vld [vmem:[#allocation7 + $0x28] sm:$0xff]
    %v485 = vld [vmem:[#allocation7 + $0x40] sm:$0xff]
    %v486 = vld [vmem:[#allocation7 + $0x48] sm:$0xff]
    %v487 = vld [vmem:[#allocation7 + $0x60] sm:$0xff]
    %v488 = vld [vmem:[#allocation7 + $0x68] sm:$0xff]
    %v489 = vld [vmem:[#allocation7 + $0x80] sm:$0xff]
    %v490 = vld [vmem:[#allocation7 + $0x88] sm:$0xff]
    %v491 = vld [vmem:[#allocation7 + $0xa0] sm:$0xff]
    %v492 = vld [vmem:[#allocation7 + $0xa8] sm:$0xff]
    %v493 = vld [vmem:[#allocation7 + $0xc0] sm:$0xff]
    %v494 = vld [vmem:[#allocation7 + $0xc8] sm:$0xff]
    %v495 = vld [vmem:[#allocation7 + $0xe0] sm:$0xff]
    %v496 = vld [vmem:[#allocation7 + $0xe8] sm:$0xff]
    %v497 = vld [vmem:[#allocation7 + $0x100] sm:$0xff]
    %v498 = vld [vmem:[#allocation7 + $0x108] sm:$0xff]
    %v499 = vld [vmem:[#allocation7 + $0x120] sm:$0xff]
    %v500 = vld [vmem:[#allocation7 + $0x128] sm:$0xff]
    %v501 = vld [vmem:[#allocation7 + $0x140] sm:$0xff]
    %v502 = vld [vmem:[#allocation7 + $0x148] sm:$0xff]
    %v503 = vld [vmem:[#allocation7 + $0x160] sm:$0xff]
    %v504 = vld [vmem:[#allocation7 + $0x168] sm:$0xff]
    %v505 = vld [vmem:[#allocation7 + $0x180] sm:$0xff]
    %v506 = vld [vmem:[#allocation7 + $0x188] sm:$0xff]
    %v507 = vld [vmem:[#allocation7 + $0x1a0] sm:$0xff]
    %v508 = vld [vmem:[#allocation7 + $0x1a8] sm:$0xff]
    %v509 = vld [vmem:[#allocation7 + $0x1c0] sm:$0xff]
    %v510 = vld [vmem:[#allocation7 + $0x1c8] sm:$0xff]
    %v511 = vld [vmem:[#allocation7 + $0x1e0] sm:$0xff]
    %v512 = vld [vmem:[#allocation7 + $0x1e8] sm:$0xff]
    %v513 = vld [vmem:[#allocation7 + $0x200] sm:$0xff]
    %v514 = vld [vmem:[#allocation7 + $0x208] sm:$0xff]
    %v515 = vld [vmem:[#allocation7 + $0x220] sm:$0xff]
    %v516 = vld [vmem:[#allocation7 + $0x228] sm:$0xff]
    %v517 = vld [vmem:[#allocation7 + $0x240] sm:$0xff]
    %v518 = vld [vmem:[#allocation7 + $0x248] sm:$0xff]
    %v519 = vld [vmem:[#allocation7 + $0x260] sm:$0xff]
    %v520 = vld [vmem:[#allocation7 + $0x268] sm:$0xff]
    %v521 = vld [vmem:[#allocation7 + $0x280] sm:$0xff]
    %v522 = vld [vmem:[#allocation7 + $0x288] sm:$0xff]
    %v523 = vld [vmem:[#allocation7 + $0x2a0] sm:$0xff]
    %v524 = vld [vmem:[#allocation7 + $0x2a8] sm:$0xff]
    %v525 = vld [vmem:[#allocation7 + $0x2c0] sm:$0xff]
    %v526 = vld [vmem:[#allocation7 + $0x2c8] sm:$0xff]
    %v527 = vld [vmem:[#allocation7 + $0x2e0] sm:$0xff]
    %v528 = vld [vmem:[#allocation7 + $0x2e8] sm:$0xff]
    %v529 = vld [vmem:[#allocation7 + $0x300] sm:$0xff]
    %v530 = vld [vmem:[#allocation7 + $0x308] sm:$0xff]
    %v531 = vld [vmem:[#allocation7 + $0x320] sm:$0xff]
    %v532 = vld [vmem:[#allocation7 + $0x328] sm:$0xff]
    %v533 = vld [vmem:[#allocation7 + $0x340] sm:$0xff]
    %v534 = vld [vmem:[#allocation7 + $0x348] sm:$0xff]
    %v535 = vld [vmem:[#allocation7 + $0x360] sm:$0xff]
    %v536 = vld [vmem:[#allocation7 + $0x368] sm:$0xff]
    %v537 = vld [vmem:[#allocation7 + $0x380] sm:$0xff]
    %v538 = vld [vmem:[#allocation7 + $0x388] sm:$0xff]
    %v539 = vld [vmem:[#allocation7 + $0x3a0] sm:$0xff]
    %v540 = vld [vmem:[#allocation7 + $0x3a8] sm:$0xff]
    %v541 = vld [vmem:[#allocation7 + $0x3c0] sm:$0xff]
    %v542 = vld [vmem:[#allocation7 + $0x3c8] sm:$0xff]
    %v543 = vld [vmem:[#allocation7 + $0x3e0] sm:$0xff]
    %v544 = vld [vmem:[#allocation7 + $0x3e8] sm:$0xff]
    %v545 = vld [vmem:[#allocation7 + $0x400] sm:$0xff]
    %v546 = vld [vmem:[#allocation7 + $0x408] sm:$0xff]
    %v547 = vld [vmem:[#allocation7 + $0x420] sm:$0xff]
    %v548 = vld [vmem:[#allocation7 + $0x428] sm:$0xff]
    %v549 = vld [vmem:[#allocation7 + $0x440] sm:$0xff]
    %v550 = vld [vmem:[#allocation7 + $0x448] sm:$0xff]
    %v551 = vld [vmem:[#allocation7 + $0x460] sm:$0xff]
    %v552 = vld [vmem:[#allocation7 + $0x468] sm:$0xff]
    %v553 = vld [vmem:[#allocation7 + $0x480] sm:$0xff]
    %v554 = vld [vmem:[#allocation7 + $0x488] sm:$0xff]
    %v555 = vld [vmem:[#allocation7 + $0x4a0] sm:$0xff]
    %v556 = vld [vmem:[#allocation7 + $0x4a8] sm:$0xff]
    %v557 = vld [vmem:[#allocation7 + $0x4c0] sm:$0xff]
    %v558 = vld [vmem:[#allocation7 + $0x4c8] sm:$0xff]
    %v559 = vld [vmem:[#allocation7 + $0x4e0] sm:$0xff]
    %v560 = vld [vmem:[#allocation7 + $0x4e8] sm:$0xff]
    %v561 = vld [vmem:[#allocation7 + $0x500] sm:$0xff]
    %v562 = vld [vmem:[#allocation7 + $0x508] sm:$0xff]
    %v563 = vld [vmem:[#allocation7 + $0x520] sm:$0xff]
    %v564 = vld [vmem:[#allocation7 + $0x528] sm:$0xff]
    %v565 = vld [vmem:[#allocation7 + $0x540] sm:$0xff]
    %v566 = vld [vmem:[#allocation7 + $0x548] sm:$0xff]
    %v567 = vld [vmem:[#allocation7 + $0x560] sm:$0xff]
    %v568 = vld [vmem:[#allocation7 + $0x568] sm:$0xff]
    %v569 = vld [vmem:[#allocation7 + $0x580] sm:$0xff]
    %v570 = vld [vmem:[#allocation7 + $0x588] sm:$0xff]
    %v571 = vld [vmem:[#allocation7 + $0x5a0] sm:$0xff]
    %v572 = vld [vmem:[#allocation7 + $0x5a8] sm:$0xff]
    %v573 = vld [vmem:[#allocation7 + $0x5c0] sm:$0xff]
    %v574 = vld [vmem:[#allocation7 + $0x5c8] sm:$0xff]
    %v575 = vld [vmem:[#allocation7 + $0x5e0] sm:$0xff]
    %v576 = vld [vmem:[#allocation7 + $0x5e8] sm:$0xff]
    %v577 = vld [vmem:[#allocation7 + $0x600] sm:$0xff]
    %v578 = vld [vmem:[#allocation7 + $0x608] sm:$0xff]
    %v579 = vld [vmem:[#allocation7 + $0x620] sm:$0xff]
    %v580 = vld [vmem:[#allocation7 + $0x628] sm:$0xff]
    %v581 = vld [vmem:[#allocation7 + $0x640] sm:$0xff]
    %v582 = vld [vmem:[#allocation7 + $0x648] sm:$0xff]
    %v583 = vld [vmem:[#allocation7 + $0x660] sm:$0xff]
    %v584 = vld [vmem:[#allocation7 + $0x668] sm:$0xff]
    %v585 = vld [vmem:[#allocation7 + $0x680] sm:$0xff]
    %v586 = vld [vmem:[#allocation7 + $0x688] sm:$0xff]
    %v587 = vld [vmem:[#allocation7 + $0x6a0] sm:$0xff]
    %v588 = vld [vmem:[#allocation7 + $0x6a8] sm:$0xff]
    %v589 = vld [vmem:[#allocation7 + $0x6c0] sm:$0xff]
    %v590 = vld [vmem:[#allocation7 + $0x6c8] sm:$0xff]
    %v591 = vld [vmem:[#allocation7 + $0x6e0] sm:$0xff]
    %v592 = vld [vmem:[#allocation7 + $0x6e8] sm:$0xff]
    %v593 = vld [vmem:[#allocation7 + $0x700] sm:$0xff]
    %v594 = vld [vmem:[#allocation7 + $0x708] sm:$0xff]
    %v595 = vld [vmem:[#allocation7 + $0x720] sm:$0xff]
    %v596 = vld [vmem:[#allocation7 + $0x728] sm:$0xff]
    %v597 = vld [vmem:[#allocation7 + $0x740] sm:$0xff]
    %v598 = vld [vmem:[#allocation7 + $0x748] sm:$0xff]
    %v599 = vld [vmem:[#allocation7 + $0x760] sm:$0xff]
    %v600 = vld [vmem:[#allocation7 + $0x768] sm:$0xff]
    %v601 = vld [vmem:[#allocation7 + $0x780] sm:$0xff]
    %v602 = vld [vmem:[#allocation7 + $0x788] sm:$0xff]
    %v603 = vld [vmem:[#allocation7 + $0x7a0] sm:$0xff]
    %v604 = vld [vmem:[#allocation7 + $0x7a8] sm:$0xff]
    %v605 = vld [vmem:[#allocation7 + $0x7c0] sm:$0xff]
    %v606 = vld [vmem:[#allocation7 + $0x7c8] sm:$0xff]
    %v607 = vld [vmem:[#allocation7 + $0x7e0] sm:$0xff]
    %v608 = vld [vmem:[#allocation7 + $0x7e8] sm:$0xff]
    %v609 = vld [vmem:[#allocation7 + $0x10] sm:$0xff]
    %v610 = vld [vmem:[#allocation7 + $0x18] sm:$0xff]
    %v611 = vld [vmem:[#allocation7 + $0x30] sm:$0xff]
    %v612 = vld [vmem:[#allocation7 + $0x38] sm:$0xff]
    %v613 = vld [vmem:[#allocation7 + $0x50] sm:$0xff]
    %v614 = vld [vmem:[#allocation7 + $0x58] sm:$0xff]
    %v615 = vld [vmem:[#allocation7 + $0x70] sm:$0xff]
    %v616 = vld [vmem:[#allocation7 + $0x78] sm:$0xff]
    %v617 = vld [vmem:[#allocation7 + $0x90] sm:$0xff]
    %v618 = vld [vmem:[#allocation7 + $0x98] sm:$0xff]
    %v619 = vld [vmem:[#allocation7 + $0xb0] sm:$0xff]
    %v620 = vld [vmem:[#allocation7 + $0xb8] sm:$0xff]
    %v621 = vld [vmem:[#allocation7 + $0xd0] sm:$0xff]
    %v622 = vld [vmem:[#allocation7 + $0xd8] sm:$0xff]
    %v623 = vld [vmem:[#allocation7 + $0xf0] sm:$0xff]
    %v624 = vld [vmem:[#allocation7 + $0xf8] sm:$0xff]
    %v625 = vld [vmem:[#allocation7 + $0x110] sm:$0xff]
    %v626 = vld [vmem:[#allocation7 + $0x118] sm:$0xff]
    %v627 = vld [vmem:[#allocation7 + $0x130] sm:$0xff]
    %v628 = vld [vmem:[#allocation7 + $0x138] sm:$0xff]
    %v629 = vld [vmem:[#allocation7 + $0x150] sm:$0xff]
    %v630 = vld [vmem:[#allocation7 + $0x158] sm:$0xff]
    %v631 = vld [vmem:[#allocation7 + $0x170] sm:$0xff]
    %v632 = vld [vmem:[#allocation7 + $0x178] sm:$0xff]
    %v633 = vld [vmem:[#allocation7 + $0x190] sm:$0xff]
    %v634 = vld [vmem:[#allocation7 + $0x198] sm:$0xff]
    %v635 = vld [vmem:[#allocation7 + $0x1b0] sm:$0xff]
    %v636 = vld [vmem:[#allocation7 + $0x1b8] sm:$0xff]
    %v637 = vld [vmem:[#allocation7 + $0x1d0] sm:$0xff]
    %v638 = vld [vmem:[#allocation7 + $0x1d8] sm:$0xff]
    %v639 = vld [vmem:[#allocation7 + $0x1f0] sm:$0xff]
    %v640 = vld [vmem:[#allocation7 + $0x1f8] sm:$0xff]
    %v641 = vld [vmem:[#allocation7 + $0x210] sm:$0xff]
    %v642 = vld [vmem:[#allocation7 + $0x218] sm:$0xff]
    %v643 = vld [vmem:[#allocation7 + $0x230] sm:$0xff]
    %v644 = vld [vmem:[#allocation7 + $0x238] sm:$0xff]
    %v645 = vld [vmem:[#allocation7 + $0x250] sm:$0xff]
    %v646 = vld [vmem:[#allocation7 + $0x258] sm:$0xff]
    %v647 = vld [vmem:[#allocation7 + $0x270] sm:$0xff]
    %v648 = vld [vmem:[#allocation7 + $0x278] sm:$0xff]
    %v649 = vld [vmem:[#allocation7 + $0x290] sm:$0xff]
    %v650 = vld [vmem:[#allocation7 + $0x298] sm:$0xff]
    %v651 = vld [vmem:[#allocation7 + $0x2b0] sm:$0xff]
    %v652 = vld [vmem:[#allocation7 + $0x2b8] sm:$0xff]
    %v653 = vld [vmem:[#allocation7 + $0x2d0] sm:$0xff]
    %v654 = vld [vmem:[#allocation7 + $0x2d8] sm:$0xff]
    %v655 = vld [vmem:[#allocation7 + $0x2f0] sm:$0xff]
    %v656 = vld [vmem:[#allocation7 + $0x2f8] sm:$0xff]
    %v657 = vld [vmem:[#allocation7 + $0x310] sm:$0xff]
    %v658 = vld [vmem:[#allocation7 + $0x318] sm:$0xff]
    %v659 = vld [vmem:[#allocation7 + $0x330] sm:$0xff]
    %v660 = vld [vmem:[#allocation7 + $0x338] sm:$0xff]
    %v661 = vld [vmem:[#allocation7 + $0x350] sm:$0xff]
    %v662 = vld [vmem:[#allocation7 + $0x358] sm:$0xff]
    %v663 = vld [vmem:[#allocation7 + $0x370] sm:$0xff]
    %v664 = vld [vmem:[#allocation7 + $0x378] sm:$0xff]
    %v665 = vld [vmem:[#allocation7 + $0x390] sm:$0xff]
    %v666 = vld [vmem:[#allocation7 + $0x398] sm:$0xff]
    %v667 = vld [vmem:[#allocation7 + $0x3b0] sm:$0xff]
    %v668 = vld [vmem:[#allocation7 + $0x3b8] sm:$0xff]
    %v669 = vld [vmem:[#allocation7 + $0x3d0] sm:$0xff]
    %v670 = vld [vmem:[#allocation7 + $0x3d8] sm:$0xff]
    %v671 = vld [vmem:[#allocation7 + $0x3f0] sm:$0xff]
    %v672 = vld [vmem:[#allocation7 + $0x3f8] sm:$0xff]
    %v673 = vld [vmem:[#allocation7 + $0x410] sm:$0xff]
    %v674 = vld [vmem:[#allocation7 + $0x418] sm:$0xff]
    %v675 = vld [vmem:[#allocation7 + $0x430] sm:$0xff]
    %v676 = vld [vmem:[#allocation7 + $0x438] sm:$0xff]
    %v677 = vld [vmem:[#allocation7 + $0x450] sm:$0xff]
    %v678 = vld [vmem:[#allocation7 + $0x458] sm:$0xff]
    %v679 = vld [vmem:[#allocation7 + $0x470] sm:$0xff]
    %v680 = vld [vmem:[#allocation7 + $0x478] sm:$0xff]
    %v681 = vld [vmem:[#allocation7 + $0x490] sm:$0xff]
    %v682 = vld [vmem:[#allocation7 + $0x498] sm:$0xff]
    %v683 = vld [vmem:[#allocation7 + $0x4b0] sm:$0xff]
    %v684 = vld [vmem:[#allocation7 + $0x4b8] sm:$0xff]
    %v685 = vld [vmem:[#allocation7 + $0x4d0] sm:$0xff]
    %v686 = vld [vmem:[#allocation7 + $0x4d8] sm:$0xff]
    %v687 = vld [vmem:[#allocation7 + $0x4f0] sm:$0xff]
    %v688 = vld [vmem:[#allocation7 + $0x4f8] sm:$0xff]
    %v689 = vld [vmem:[#allocation7 + $0x510] sm:$0xff]
    %v690 = vld [vmem:[#allocation7 + $0x518] sm:$0xff]
    %v691 = vld [vmem:[#allocation7 + $0x530] sm:$0xff]
    %v692 = vld [vmem:[#allocation7 + $0x538] sm:$0xff]
    %v693 = vld [vmem:[#allocation7 + $0x550] sm:$0xff]
    %v694 = vld [vmem:[#allocation7 + $0x558] sm:$0xff]
    %v695 = vld [vmem:[#allocation7 + $0x570] sm:$0xff]
    %v696 = vld [vmem:[#allocation7 + $0x578] sm:$0xff]
    %v697 = vld [vmem:[#allocation7 + $0x590] sm:$0xff]
    %v698 = vld [vmem:[#allocation7 + $0x598] sm:$0xff]
    %v699 = vld [vmem:[#allocation7 + $0x5b0] sm:$0xff]
    %v700 = vld [vmem:[#allocation7 + $0x5b8] sm:$0xff]
    %v701 = vld [vmem:[#allocation7 + $0x5d0] sm:$0xff]
    %v702 = vld [vmem:[#allocation7 + $0x5d8] sm:$0xff]
    %v703 = vld [vmem:[#allocation7 + $0x5f0] sm:$0xff]
    %v704 = vld [vmem:[#allocation7 + $0x5f8] sm:$0xff]
    %v705 = vld [vmem:[#allocation7 + $0x610] sm:$0xff]
    %v706 = vld [vmem:[#allocation7 + $0x618] sm:$0xff]
    %v707 = vld [vmem:[#allocation7 + $0x630] sm:$0xff]
    %v708 = vld [vmem:[#allocation7 + $0x638] sm:$0xff]
    %v709 = vld [vmem:[#allocation7 + $0x650] sm:$0xff]
    %v710 = vld [vmem:[#allocation7 + $0x658] sm:$0xff]
    %v711 = vld [vmem:[#allocation7 + $0x670] sm:$0xff]
    %v712 = vld [vmem:[#allocation7 + $0x678] sm:$0xff]
    %v713 = vld [vmem:[#allocation7 + $0x690] sm:$0xff]
    %v714 = vld [vmem:[#allocation7 + $0x698] sm:$0xff]
    %v715 = vld [vmem:[#allocation7 + $0x6b0] sm:$0xff]
    %v716 = vld [vmem:[#allocation7 + $0x6b8] sm:$0xff]
    %v717 = vld [vmem:[#allocation7 + $0x6d0] sm:$0xff]
    %v718 = vld [vmem:[#allocation7 + $0x6d8] sm:$0xff]
    %v719 = vld [vmem:[#allocation7 + $0x6f0] sm:$0xff]
    %v720 = vld [vmem:[#allocation7 + $0x6f8] sm:$0xff]
    %v721 = vld [vmem:[#allocation7 + $0x710] sm:$0xff]
    %v722 = vld [vmem:[#allocation7 + $0x718] sm:$0xff]
    %v723 = vld [vmem:[#allocation7 + $0x730] sm:$0xff]
    %v724 = vld [vmem:[#allocation7 + $0x738] sm:$0xff]
    %v725 = vld [vmem:[#allocation7 + $0x750] sm:$0xff]
    %v726 = vld [vmem:[#allocation7 + $0x758] sm:$0xff]
    %v727 = vld [vmem:[#allocation7 + $0x770] sm:$0xff]
    %v728 = vld [vmem:[#allocation7 + $0x778] sm:$0xff]
    %v729 = vld [vmem:[#allocation7 + $0x790] sm:$0xff]
    %v730 = vld [vmem:[#allocation7 + $0x798] sm:$0xff]
    %v731 = vld [vmem:[#allocation7 + $0x7b0] sm:$0xff]
    %v732 = vld [vmem:[#allocation7 + $0x7b8] sm:$0xff]
    %v733 = vld [vmem:[#allocation7 + $0x7d0] sm:$0xff]
    %v734 = vld [vmem:[#allocation7 + $0x7d8] sm:$0xff]
    %v735 = vld [vmem:[#allocation7 + $0x7f0] sm:$0xff]
    %v736 = vld [vmem:[#allocation7 + $0x7f8] sm:$0xff]
    %v737 = vld [vmem:[#allocation8] sm:$0xff]
    %v738 = vld [vmem:[#allocation8 + $0x8] sm:$0xff]
    %v739 = vld [vmem:[#allocation8 + $0x10] sm:$0xff]
    %v740 = vld [vmem:[#allocation8 + $0x18] sm:$0xff]
    %v741 = vld [vmem:[#allocation8 + $0x20] sm:$0xff]
    %v742 = vld [vmem:[#allocation8 + $0x28] sm:$0xff]
    %v743 = vld [vmem:[#allocation8 + $0x30] sm:$0xff]
    %v744 = vld [vmem:[#allocation8 + $0x38] sm:$0xff]
    %v745 = vld [vmem:[#allocation8 + $0x40] sm:$0xff]
    %v746 = vld [vmem:[#allocation8 + $0x48] sm:$0xff]
    %v747 = vld [vmem:[#allocation8 + $0x50] sm:$0xff]
    %v748 = vld [vmem:[#allocation8 + $0x58] sm:$0xff]
    %v749 = vld [vmem:[#allocation8 + $0x60] sm:$0xff]
    %v750 = vld [vmem:[#allocation8 + $0x68] sm:$0xff]
    %v751 = vld [vmem:[#allocation8 + $0x70] sm:$0xff]
    %v752 = vld [vmem:[#allocation8 + $0x78] sm:$0xff]
    %v753 = vld [vmem:[#allocation8 + $0x80] sm:$0xff]
    %v754 = vld [vmem:[#allocation8 + $0x88] sm:$0xff]
    %v755 = vld [vmem:[#allocation8 + $0x90] sm:$0xff]
    %v756 = vld [vmem:[#allocation8 + $0x98] sm:$0xff]
    %v757 = vld [vmem:[#allocation8 + $0xa0] sm:$0xff]
    %v758 = vld [vmem:[#allocation8 + $0xa8] sm:$0xff]
    %v759 = vld [vmem:[#allocation8 + $0xb0] sm:$0xff]
    %v760 = vld [vmem:[#allocation8 + $0xb8] sm:$0xff]
    %v761 = vld [vmem:[#allocation8 + $0xc0] sm:$0xff]
    %v762 = vld [vmem:[#allocation8 + $0xc8] sm:$0xff]
    %v763 = vld [vmem:[#allocation8 + $0xd0] sm:$0xff]
    %v764 = vld [vmem:[#allocation8 + $0xd8] sm:$0xff]
    %v765 = vld [vmem:[#allocation8 + $0xe0] sm:$0xff]
    %v766 = vld [vmem:[#allocation8 + $0xe8] sm:$0xff]
    %v767 = vld [vmem:[#allocation8 + $0xf0] sm:$0xff]
    %v768 = vld [vmem:[#allocation8 + $0xf8] sm:$0xff]
    %v769 = vld [vmem:[#allocation8 + $0x100] sm:$0xff]
    %v770 = vld [vmem:[#allocation8 + $0x108] sm:$0xff]
    %v771 = vld [vmem:[#allocation8 + $0x110] sm:$0xff]
    %v772 = vld [vmem:[#allocation8 + $0x118] sm:$0xff]
    %v773 = vld [vmem:[#allocation8 + $0x120] sm:$0xff]
    %v774 = vld [vmem:[#allocation8 + $0x128] sm:$0xff]
    %v775 = vld [vmem:[#allocation8 + $0x130] sm:$0xff]
    %v776 = vld [vmem:[#allocation8 + $0x138] sm:$0xff]
    %v777 = vld [vmem:[#allocation8 + $0x140] sm:$0xff]
    %v778 = vld [vmem:[#allocation8 + $0x148] sm:$0xff]
    %v779 = vld [vmem:[#allocation8 + $0x150] sm:$0xff]
    %v780 = vld [vmem:[#allocation8 + $0x158] sm:$0xff]
    %v781 = vld [vmem:[#allocation8 + $0x160] sm:$0xff]
    %v782 = vld [vmem:[#allocation8 + $0x168] sm:$0xff]
    %v783 = vld [vmem:[#allocation8 + $0x170] sm:$0xff]
    %v784 = vld [vmem:[#allocation8 + $0x178] sm:$0xff]
    %v785 = vld [vmem:[#allocation8 + $0x180] sm:$0xff]
    %v786 = vld [vmem:[#allocation8 + $0x188] sm:$0xff]
    %v787 = vld [vmem:[#allocation8 + $0x190] sm:$0xff]
    %v788 = vld [vmem:[#allocation8 + $0x198] sm:$0xff]
    %v789 = vld [vmem:[#allocation8 + $0x1a0] sm:$0xff]
    %v790 = vld [vmem:[#allocation8 + $0x1a8] sm:$0xff]
    %v791 = vld [vmem:[#allocation8 + $0x1b0] sm:$0xff]
    %v792 = vld [vmem:[#allocation8 + $0x1b8] sm:$0xff]
    %v793 = vld [vmem:[#allocation8 + $0x1c0] sm:$0xff]
    %v794 = vld [vmem:[#allocation8 + $0x1c8] sm:$0xff]
    %v795 = vld [vmem:[#allocation8 + $0x1d0] sm:$0xff]
    %v796 = vld [vmem:[#allocation8 + $0x1d8] sm:$0xff]
    %v797 = vld [vmem:[#allocation8 + $0x1e0] sm:$0xff]
    %v798 = vld [vmem:[#allocation8 + $0x1e8] sm:$0xff]
    %v799 = vld [vmem:[#allocation8 + $0x1f0] sm:$0xff]
    %v800 = vld [vmem:[#allocation8 + $0x1f8] sm:$0xff]
    %v801 = vld [vmem:[#allocation8 + $0x200] sm:$0xff]
    %v802 = vld [vmem:[#allocation8 + $0x208] sm:$0xff]
    %v803 = vld [vmem:[#allocation8 + $0x210] sm:$0xff]
    %v804 = vld [vmem:[#allocation8 + $0x218] sm:$0xff]
    %v805 = vld [vmem:[#allocation8 + $0x220] sm:$0xff]
    %v806 = vld [vmem:[#allocation8 + $0x228] sm:$0xff]
    %v807 = vld [vmem:[#allocation8 + $0x230] sm:$0xff]
    %v808 = vld [vmem:[#allocation8 + $0x238] sm:$0xff]
    %v809 = vld [vmem:[#allocation8 + $0x240] sm:$0xff]
    %v810 = vld [vmem:[#allocation8 + $0x248] sm:$0xff]
    %v811 = vld [vmem:[#allocation8 + $0x250] sm:$0xff]
    %v812 = vld [vmem:[#allocation8 + $0x258] sm:$0xff]
    %v813 = vld [vmem:[#allocation8 + $0x260] sm:$0xff]
    %v814 = vld [vmem:[#allocation8 + $0x268] sm:$0xff]
    %v815 = vld [vmem:[#allocation8 + $0x270] sm:$0xff]
    %v816 = vld [vmem:[#allocation8 + $0x278] sm:$0xff]
    %v817 = vld [vmem:[#allocation8 + $0x280] sm:$0xff]
    %v818 = vld [vmem:[#allocation8 + $0x288] sm:$0xff]
    %v819 = vld [vmem:[#allocation8 + $0x290] sm:$0xff]
    %v820 = vld [vmem:[#allocation8 + $0x298] sm:$0xff]
    %v821 = vld [vmem:[#allocation8 + $0x2a0] sm:$0xff]
    %v822 = vld [vmem:[#allocation8 + $0x2a8] sm:$0xff]
    %v823 = vld [vmem:[#allocation8 + $0x2b0] sm:$0xff]
    %v824 = vld [vmem:[#allocation8 + $0x2b8] sm:$0xff]
    %v825 = vld [vmem:[#allocation8 + $0x2c0] sm:$0xff]
    %v826 = vld [vmem:[#allocation8 + $0x2c8] sm:$0xff]
    %v827 = vld [vmem:[#allocation8 + $0x2d0] sm:$0xff]
    %v828 = vld [vmem:[#allocation8 + $0x2d8] sm:$0xff]
    %v829 = vld [vmem:[#allocation8 + $0x2e0] sm:$0xff]
    %v830 = vld [vmem:[#allocation8 + $0x2e8] sm:$0xff]
    %v831 = vld [vmem:[#allocation8 + $0x2f0] sm:$0xff]
    %v832 = vld [vmem:[#allocation8 + $0x2f8] sm:$0xff]
    %v833 = vld [vmem:[#allocation8 + $0x300] sm:$0xff]
    %v834 = vld [vmem:[#allocation8 + $0x308] sm:$0xff]
    %v835 = vld [vmem:[#allocation8 + $0x310] sm:$0xff]
    %v836 = vld [vmem:[#allocation8 + $0x318] sm:$0xff]
    %v837 = vld [vmem:[#allocation8 + $0x320] sm:$0xff]
    %v838 = vld [vmem:[#allocation8 + $0x328] sm:$0xff]
    %v839 = vld [vmem:[#allocation8 + $0x330] sm:$0xff]
    %v840 = vld [vmem:[#allocation8 + $0x338] sm:$0xff]
    %v841 = vld [vmem:[#allocation8 + $0x340] sm:$0xff]
    %v842 = vld [vmem:[#allocation8 + $0x348] sm:$0xff]
    %v843 = vld [vmem:[#allocation8 + $0x350] sm:$0xff]
    %v844 = vld [vmem:[#allocation8 + $0x358] sm:$0xff]
    %v845 = vld [vmem:[#allocation8 + $0x360] sm:$0xff]
    %v846 = vld [vmem:[#allocation8 + $0x368] sm:$0xff]
    %v847 = vld [vmem:[#allocation8 + $0x370] sm:$0xff]
    %v848 = vld [vmem:[#allocation8 + $0x378] sm:$0xff]
    %v849 = vld [vmem:[#allocation8 + $0x380] sm:$0xff]
    %v850 = vld [vmem:[#allocation8 + $0x388] sm:$0xff]
    %v851 = vld [vmem:[#allocation8 + $0x390] sm:$0xff]
    %v852 = vld [vmem:[#allocation8 + $0x398] sm:$0xff]
    %v853 = vld [vmem:[#allocation8 + $0x3a0] sm:$0xff]
    %v854 = vld [vmem:[#allocation8 + $0x3a8] sm:$0xff]
    %v855 = vld [vmem:[#allocation8 + $0x3b0] sm:$0xff]
    %v856 = vld [vmem:[#allocation8 + $0x3b8] sm:$0xff]
    %v857 = vld [vmem:[#allocation8 + $0x3c0] sm:$0xff]
    %v858 = vld [vmem:[#allocation8 + $0x3c8] sm:$0xff]
    %v859 = vld [vmem:[#allocation8 + $0x3d0] sm:$0xff]
    %v860 = vld [vmem:[#allocation8 + $0x3d8] sm:$0xff]
    %v861 = vld [vmem:[#allocation8 + $0x3e0] sm:$0xff]
    %v862 = vld [vmem:[#allocation8 + $0x3e8] sm:$0xff]
    %v863 = vld [vmem:[#allocation8 + $0x3f0] sm:$0xff]
    %v864 = vld [vmem:[#allocation8 + $0x3f8] sm:$0xff]
    %v865 = vld [vmem:[#allocation8 + $0x400] sm:$0xff]
    %v866 = vld [vmem:[#allocation8 + $0x408] sm:$0xff]
    %v867 = vld [vmem:[#allocation8 + $0x410] sm:$0xff]
    %v868 = vld [vmem:[#allocation8 + $0x418] sm:$0xff]
    %v869 = vld [vmem:[#allocation8 + $0x420] sm:$0xff]
    %v870 = vld [vmem:[#allocation8 + $0x428] sm:$0xff]
    %v871 = vld [vmem:[#allocation8 + $0x430] sm:$0xff]
    %v872 = vld [vmem:[#allocation8 + $0x438] sm:$0xff]
    %v873 = vld [vmem:[#allocation8 + $0x440] sm:$0xff]
    %v874 = vld [vmem:[#allocation8 + $0x448] sm:$0xff]
    %v875 = vld [vmem:[#allocation8 + $0x450] sm:$0xff]
    %v876 = vld [vmem:[#allocation8 + $0x458] sm:$0xff]
    %v877 = vld [vmem:[#allocation8 + $0x460] sm:$0xff]
    %v878 = vld [vmem:[#allocation8 + $0x468] sm:$0xff]
    %v879 = vld [vmem:[#allocation8 + $0x470] sm:$0xff]
    %v880 = vld [vmem:[#allocation8 + $0x478] sm:$0xff]
    %v881 = vld [vmem:[#allocation8 + $0x480] sm:$0xff]
    %v882 = vld [vmem:[#allocation8 + $0x488] sm:$0xff]
    %v883 = vld [vmem:[#allocation8 + $0x490] sm:$0xff]
    %v884 = vld [vmem:[#allocation8 + $0x498] sm:$0xff]
    %v885 = vld [vmem:[#allocation8 + $0x4a0] sm:$0xff]
    %v886 = vld [vmem:[#allocation8 + $0x4a8] sm:$0xff]
    %v887 = vld [vmem:[#allocation8 + $0x4b0] sm:$0xff]
    %v888 = vld [vmem:[#allocation8 + $0x4b8] sm:$0xff]
    %v889 = vld [vmem:[#allocation8 + $0x4c0] sm:$0xff]
    %v890 = vld [vmem:[#allocation8 + $0x4c8] sm:$0xff]
    %v891 = vld [vmem:[#allocation8 + $0x4d0] sm:$0xff]
    %v892 = vld [vmem:[#allocation8 + $0x4d8] sm:$0xff]
    %v893 = vld [vmem:[#allocation8 + $0x4e0] sm:$0xff]
    %v894 = vld [vmem:[#allocation8 + $0x4e8] sm:$0xff]
    %v895 = vld [vmem:[#allocation8 + $0x4f0] sm:$0xff]
    %v896 = vld [vmem:[#allocation8 + $0x4f8] sm:$0xff]
    %v897 = vld [vmem:[#allocation8 + $0x500] sm:$0xff]
    %v898 = vld [vmem:[#allocation8 + $0x508] sm:$0xff]
    %v899 = vld [vmem:[#allocation8 + $0x510] sm:$0xff]
    %v900 = vld [vmem:[#allocation8 + $0x518] sm:$0xff]
    %v901 = vld [vmem:[#allocation8 + $0x520] sm:$0xff]
    %v902 = vld [vmem:[#allocation8 + $0x528] sm:$0xff]
    %v903 = vld [vmem:[#allocation8 + $0x530] sm:$0xff]
    %v904 = vld [vmem:[#allocation8 + $0x538] sm:$0xff]
    %v905 = vld [vmem:[#allocation8 + $0x540] sm:$0xff]
    %v906 = vld [vmem:[#allocation8 + $0x548] sm:$0xff]
    %v907 = vld [vmem:[#allocation8 + $0x550] sm:$0xff]
    %v908 = vld [vmem:[#allocation8 + $0x558] sm:$0xff]
    %v909 = vld [vmem:[#allocation8 + $0x560] sm:$0xff]
    %v910 = vld [vmem:[#allocation8 + $0x568] sm:$0xff]
    %v911 = vld [vmem:[#allocation8 + $0x570] sm:$0xff]
    %v912 = vld [vmem:[#allocation8 + $0x578] sm:$0xff]
    %v913 = vld [vmem:[#allocation8 + $0x580] sm:$0xff]
    %v914 = vld [vmem:[#allocation8 + $0x588] sm:$0xff]
    %v915 = vld [vmem:[#allocation8 + $0x590] sm:$0xff]
    %v916 = vld [vmem:[#allocation8 + $0x598] sm:$0xff]
    %v917 = vld [vmem:[#allocation8 + $0x5a0] sm:$0xff]
    %v918 = vld [vmem:[#allocation8 + $0x5a8] sm:$0xff]
    %v919 = vld [vmem:[#allocation8 + $0x5b0] sm:$0xff]
    %v920 = vld [vmem:[#allocation8 + $0x5b8] sm:$0xff]
    %v921 = vld [vmem:[#allocation8 + $0x5c0] sm:$0xff]
    %v922 = vld [vmem:[#allocation8 + $0x5c8] sm:$0xff]
    %v923 = vld [vmem:[#allocation8 + $0x5d0] sm:$0xff]
    %v924 = vld [vmem:[#allocation8 + $0x5d8] sm:$0xff]
    %v925 = vld [vmem:[#allocation8 + $0x5e0] sm:$0xff]
    %v926 = vld [vmem:[#allocation8 + $0x5e8] sm:$0xff]
    %v927 = vld [vmem:[#allocation8 + $0x5f0] sm:$0xff]
    %v928 = vld [vmem:[#allocation8 + $0x5f8] sm:$0xff]
    %v929 = vld [vmem:[#allocation8 + $0x600] sm:$0xff]
    %v930 = vld [vmem:[#allocation8 + $0x608] sm:$0xff]
    %v931 = vld [vmem:[#allocation8 + $0x610] sm:$0xff]
    %v932 = vld [vmem:[#allocation8 + $0x618] sm:$0xff]
    %v933 = vld [vmem:[#allocation8 + $0x620] sm:$0xff]
    %v934 = vld [vmem:[#allocation8 + $0x628] sm:$0xff]
    %v935 = vld [vmem:[#allocation8 + $0x630] sm:$0xff]
    %v936 = vld [vmem:[#allocation8 + $0x638] sm:$0xff]
    %v937 = vld [vmem:[#allocation8 + $0x640] sm:$0xff]
    %v938 = vld [vmem:[#allocation8 + $0x648] sm:$0xff]
    %v939 = vld [vmem:[#allocation8 + $0x650] sm:$0xff]
    %v940 = vld [vmem:[#allocation8 + $0x658] sm:$0xff]
    %v941 = vld [vmem:[#allocation8 + $0x660] sm:$0xff]
    %v942 = vld [vmem:[#allocation8 + $0x668] sm:$0xff]
    %v943 = vld [vmem:[#allocation8 + $0x670] sm:$0xff]
    %v944 = vld [vmem:[#allocation8 + $0x678] sm:$0xff]
    %v945 = vld [vmem:[#allocation8 + $0x680] sm:$0xff]
    %v946 = vld [vmem:[#allocation8 + $0x688] sm:$0xff]
    %v947 = vld [vmem:[#allocation8 + $0x690] sm:$0xff]
    %v948 = vld [vmem:[#allocation8 + $0x698] sm:$0xff]
    %v949 = vld [vmem:[#allocation8 + $0x6a0] sm:$0xff]
    %v950 = vld [vmem:[#allocation8 + $0x6a8] sm:$0xff]
    %v951 = vld [vmem:[#allocation8 + $0x6b0] sm:$0xff]
    %v952 = vld [vmem:[#allocation8 + $0x6b8] sm:$0xff]
    %v953 = vld [vmem:[#allocation8 + $0x6c0] sm:$0xff]
    %v954 = vld [vmem:[#allocation8 + $0x6c8] sm:$0xff]
    %v955 = vld [vmem:[#allocation8 + $0x6d0] sm:$0xff]
    %v956 = vld [vmem:[#allocation8 + $0x6d8] sm:$0xff]
    %v957 = vld [vmem:[#allocation8 + $0x6e0] sm:$0xff]
    %v958 = vld [vmem:[#allocation8 + $0x6e8] sm:$0xff]
    %v959 = vld [vmem:[#allocation8 + $0x6f0] sm:$0xff]
    %v960 = vld [vmem:[#allocation8 + $0x6f8] sm:$0xff]
    %v961 = vld [vmem:[#allocation8 + $0x700] sm:$0xff]
    %v962 = vld [vmem:[#allocation8 + $0x708] sm:$0xff]
    %v963 = vld [vmem:[#allocation8 + $0x710] sm:$0xff]
    %v964 = vld [vmem:[#allocation8 + $0x718] sm:$0xff]
    %v965 = vld [vmem:[#allocation8 + $0x720] sm:$0xff]
    %v966 = vld [vmem:[#allocation8 + $0x728] sm:$0xff]
    %v967 = vld [vmem:[#allocation8 + $0x730] sm:$0xff]
    %v968 = vld [vmem:[#allocation8 + $0x738] sm:$0xff]
    %v969 = vld [vmem:[#allocation8 + $0x740] sm:$0xff]
    %v970 = vld [vmem:[#allocation8 + $0x748] sm:$0xff]
    %v971 = vld [vmem:[#allocation8 + $0x750] sm:$0xff]
    %v972 = vld [vmem:[#allocation8 + $0x758] sm:$0xff]
    %v973 = vld [vmem:[#allocation8 + $0x760] sm:$0xff]
    %v974 = vld [vmem:[#allocation8 + $0x768] sm:$0xff]
    %v975 = vld [vmem:[#allocation8 + $0x770] sm:$0xff]
    %v976 = vld [vmem:[#allocation8 + $0x778] sm:$0xff]
    %v977 = vld [vmem:[#allocation8 + $0x780] sm:$0xff]
    %v978 = vld [vmem:[#allocation8 + $0x788] sm:$0xff]
    %v979 = vld [vmem:[#allocation8 + $0x790] sm:$0xff]
    %v980 = vld [vmem:[#allocation8 + $0x798] sm:$0xff]
    %v981 = vld [vmem:[#allocation8 + $0x7a0] sm:$0xff]
    %v982 = vld [vmem:[#allocation8 + $0x7a8] sm:$0xff]
    %v983 = vld [vmem:[#allocation8 + $0x7b0] sm:$0xff]
    %v984 = vld [vmem:[#allocation8 + $0x7b8] sm:$0xff]
    %v985 = vld [vmem:[#allocation8 + $0x7c0] sm:$0xff]
    %v986 = vld [vmem:[#allocation8 + $0x7c8] sm:$0xff]
    %v987 = vld [vmem:[#allocation8 + $0x7d0] sm:$0xff]
    %v988 = vld [vmem:[#allocation8 + $0x7d8] sm:$0xff]
    %v989 = vld [vmem:[#allocation8 + $0x7e0] sm:$0xff]
    %v990 = vld [vmem:[#allocation8 + $0x7e8] sm:$0xff]
    %v991 = vld [vmem:[#allocation8 + $0x7f0] sm:$0xff]
    %v992 = vld [vmem:[#allocation8 + $0x7f8] sm:$0xff]
    %v993 = vld [vmem:[#allocation10] sm:$0xff]
    %v994 = vld [vmem:[#allocation10 + $0x8] sm:$0xff]
    %v995 = vld [vmem:[#allocation10 + $0x10] sm:$0xff]
    %v996 = vld [vmem:[#allocation10 + $0x18] sm:$0xff]
    %v997 = vld [vmem:[#allocation10 + $0x20] sm:$0xff]
    %v998 = vld [vmem:[#allocation10 + $0x28] sm:$0xff]
    %v999 = vld [vmem:[#allocation10 + $0x30] sm:$0xff]
    %v1000 = vld [vmem:[#allocation10 + $0x38] sm:$0xff]
    %v1001 = vld [vmem:[#allocation10 + $0x40] sm:$0xff]
    %v1002 = vld [vmem:[#allocation10 + $0x48] sm:$0xff]
    %v1003 = vld [vmem:[#allocation10 + $0x50] sm:$0xff]
    %v1004 = vld [vmem:[#allocation10 + $0x58] sm:$0xff]
    %v1005 = vld [vmem:[#allocation10 + $0x60] sm:$0xff]
    %v1006 = vld [vmem:[#allocation10 + $0x68] sm:$0xff]
    %v1007 = vld [vmem:[#allocation10 + $0x70] sm:$0xff]
    %v1008 = vld [vmem:[#allocation10 + $0x78] sm:$0xff]
    %v1009 = vld [vmem:[#allocation10 + $0x80] sm:$0xff]
    %v1010 = vld [vmem:[#allocation10 + $0x88] sm:$0xff]
    %v1011 = vld [vmem:[#allocation10 + $0x90] sm:$0xff]
    %v1012 = vld [vmem:[#allocation10 + $0x98] sm:$0xff]
    %v1013 = vld [vmem:[#allocation10 + $0xa0] sm:$0xff]
    %v1014 = vld [vmem:[#allocation10 + $0xa8] sm:$0xff]
    %v1015 = vld [vmem:[#allocation10 + $0xb0] sm:$0xff]
    %v1016 = vld [vmem:[#allocation10 + $0xb8] sm:$0xff]
    %v1017 = vld [vmem:[#allocation10 + $0xc0] sm:$0xff]
    %v1018 = vld [vmem:[#allocation10 + $0xc8] sm:$0xff]
    %v1019 = vld [vmem:[#allocation10 + $0xd0] sm:$0xff]
    %v1020 = vld [vmem:[#allocation10 + $0xd8] sm:$0xff]
    %v1021 = vld [vmem:[#allocation10 + $0xe0] sm:$0xff]
    %v1022 = vld [vmem:[#allocation10 + $0xe8] sm:$0xff]
    %v1023 = vld [vmem:[#allocation10 + $0xf0] sm:$0xff]
    %v1024 = vld [vmem:[#allocation10 + $0xf8] sm:$0xff]
    %v1025 = vld [vmem:[#allocation10 + $0x100] sm:$0xff]
    %v1026 = vld [vmem:[#allocation10 + $0x108] sm:$0xff]
    %v1027 = vld [vmem:[#allocation10 + $0x110] sm:$0xff]
    %v1028 = vld [vmem:[#allocation10 + $0x118] sm:$0xff]
    %v1029 = vld [vmem:[#allocation10 + $0x120] sm:$0xff]
    %v1030 = vld [vmem:[#allocation10 + $0x128] sm:$0xff]
    %v1031 = vld [vmem:[#allocation10 + $0x130] sm:$0xff]
    %v1032 = vld [vmem:[#allocation10 + $0x138] sm:$0xff]
    %v1033 = vld [vmem:[#allocation10 + $0x140] sm:$0xff]
    %v1034 = vld [vmem:[#allocation10 + $0x148] sm:$0xff]
    %v1035 = vld [vmem:[#allocation10 + $0x150] sm:$0xff]
    %v1036 = vld [vmem:[#allocation10 + $0x158] sm:$0xff]
    %v1037 = vld [vmem:[#allocation10 + $0x160] sm:$0xff]
    %v1038 = vld [vmem:[#allocation10 + $0x168] sm:$0xff]
    %v1039 = vld [vmem:[#allocation10 + $0x170] sm:$0xff]
    %v1040 = vld [vmem:[#allocation10 + $0x178] sm:$0xff]
    %v1041 = vld [vmem:[#allocation10 + $0x180] sm:$0xff]
    %v1042 = vld [vmem:[#allocation10 + $0x188] sm:$0xff]
    %v1043 = vld [vmem:[#allocation10 + $0x190] sm:$0xff]
    %v1044 = vld [vmem:[#allocation10 + $0x198] sm:$0xff]
    %v1045 = vld [vmem:[#allocation10 + $0x1a0] sm:$0xff]
    %v1046 = vld [vmem:[#allocation10 + $0x1a8] sm:$0xff]
    %v1047 = vld [vmem:[#allocation10 + $0x1b0] sm:$0xff]
    %v1048 = vld [vmem:[#allocation10 + $0x1b8] sm:$0xff]
    %v1049 = vld [vmem:[#allocation10 + $0x1c0] sm:$0xff]
    %v1050 = vld [vmem:[#allocation10 + $0x1c8] sm:$0xff]
    %v1051 = vld [vmem:[#allocation10 + $0x1d0] sm:$0xff]
    %v1052 = vld [vmem:[#allocation10 + $0x1d8] sm:$0xff]
    %v1053 = vld [vmem:[#allocation10 + $0x1e0] sm:$0xff]
    %v1054 = vld [vmem:[#allocation10 + $0x1e8] sm:$0xff]
    %v1055 = vld [vmem:[#allocation10 + $0x1f0] sm:$0xff]
    %v1056 = vld [vmem:[#allocation10 + $0x1f8] sm:$0xff]
    %v1057 = vld [vmem:[#allocation10 + $0x200] sm:$0xff]
    %v1058 = vld [vmem:[#allocation10 + $0x208] sm:$0xff]
    %v1059 = vld [vmem:[#allocation10 + $0x210] sm:$0xff]
    %v1060 = vld [vmem:[#allocation10 + $0x218] sm:$0xff]
    %v1061 = vld [vmem:[#allocation10 + $0x220] sm:$0xff]
    %v1062 = vld [vmem:[#allocation10 + $0x228] sm:$0xff]
    %v1063 = vld [vmem:[#allocation10 + $0x230] sm:$0xff]
    %v1064 = vld [vmem:[#allocation10 + $0x238] sm:$0xff]
    %v1065 = vld [vmem:[#allocation10 + $0x240] sm:$0xff]
    %v1066 = vld [vmem:[#allocation10 + $0x248] sm:$0xff]
    %v1067 = vld [vmem:[#allocation10 + $0x250] sm:$0xff]
    %v1068 = vld [vmem:[#allocation10 + $0x258] sm:$0xff]
    %v1069 = vld [vmem:[#allocation10 + $0x260] sm:$0xff]
    %v1070 = vld [vmem:[#allocation10 + $0x268] sm:$0xff]
    %v1071 = vld [vmem:[#allocation10 + $0x270] sm:$0xff]
    %v1072 = vld [vmem:[#allocation10 + $0x278] sm:$0xff]
    %v1073 = vld [vmem:[#allocation10 + $0x280] sm:$0xff]
    %v1074 = vld [vmem:[#allocation10 + $0x288] sm:$0xff]
    %v1075 = vld [vmem:[#allocation10 + $0x290] sm:$0xff]
    %v1076 = vld [vmem:[#allocation10 + $0x298] sm:$0xff]
    %v1077 = vld [vmem:[#allocation10 + $0x2a0] sm:$0xff]
    %v1078 = vld [vmem:[#allocation10 + $0x2a8] sm:$0xff]
    %v1079 = vld [vmem:[#allocation10 + $0x2b0] sm:$0xff]
    %v1080 = vld [vmem:[#allocation10 + $0x2b8] sm:$0xff]
    %v1081 = vld [vmem:[#allocation10 + $0x2c0] sm:$0xff]
    %v1082 = vld [vmem:[#allocation10 + $0x2c8] sm:$0xff]
    %v1083 = vld [vmem:[#allocation10 + $0x2d0] sm:$0xff]
    %v1084 = vld [vmem:[#allocation10 + $0x2d8] sm:$0xff]
    %v1085 = vld [vmem:[#allocation10 + $0x2e0] sm:$0xff]
    %v1086 = vld [vmem:[#allocation10 + $0x2e8] sm:$0xff]
    %v1087 = vld [vmem:[#allocation10 + $0x2f0] sm:$0xff]
    %v1088 = vld [vmem:[#allocation10 + $0x2f8] sm:$0xff]
    %v1089 = vld [vmem:[#allocation10 + $0x300] sm:$0xff]
    %v1090 = vld [vmem:[#allocation10 + $0x308] sm:$0xff]
    %v1091 = vld [vmem:[#allocation10 + $0x310] sm:$0xff]
    %v1092 = vld [vmem:[#allocation10 + $0x318] sm:$0xff]
    %v1093 = vld [vmem:[#allocation10 + $0x320] sm:$0xff]
    %v1094 = vld [vmem:[#allocation10 + $0x328] sm:$0xff]
    %v1095 = vld [vmem:[#allocation10 + $0x330] sm:$0xff]
    %v1096 = vld [vmem:[#allocation10 + $0x338] sm:$0xff]
    %v1097 = vld [vmem:[#allocation10 + $0x340] sm:$0xff]
    %v1098 = vld [vmem:[#allocation10 + $0x348] sm:$0xff]
    %v1099 = vld [vmem:[#allocation10 + $0x350] sm:$0xff]
    %v1100 = vld [vmem:[#allocation10 + $0x358] sm:$0xff]
    %v1101 = vld [vmem:[#allocation10 + $0x360] sm:$0xff]
    %v1102 = vld [vmem:[#allocation10 + $0x368] sm:$0xff]
    %v1103 = vld [vmem:[#allocation10 + $0x370] sm:$0xff]
    %v1104 = vld [vmem:[#allocation10 + $0x378] sm:$0xff]
    %v1105 = vld [vmem:[#allocation10 + $0x380] sm:$0xff]
    %v1106 = vld [vmem:[#allocation10 + $0x388] sm:$0xff]
    %v1107 = vld [vmem:[#allocation10 + $0x390] sm:$0xff]
    %v1108 = vld [vmem:[#allocation10 + $0x398] sm:$0xff]
    %v1109 = vld [vmem:[#allocation10 + $0x3a0] sm:$0xff]
    %v1110 = vld [vmem:[#allocation10 + $0x3a8] sm:$0xff]
    %v1111 = vld [vmem:[#allocation10 + $0x3b0] sm:$0xff]
    %v1112 = vld [vmem:[#allocation10 + $0x3b8] sm:$0xff]
    %v1113 = vld [vmem:[#allocation10 + $0x3c0] sm:$0xff]
    %v1114 = vld [vmem:[#allocation10 + $0x3c8] sm:$0xff]
    %v1115 = vld [vmem:[#allocation10 + $0x3d0] sm:$0xff]
    %v1116 = vld [vmem:[#allocation10 + $0x3d8] sm:$0xff]
    %v1117 = vld [vmem:[#allocation10 + $0x3e0] sm:$0xff]
    %v1118 = vld [vmem:[#allocation10 + $0x3e8] sm:$0xff]
    %v1119 = vld [vmem:[#allocation10 + $0x3f0] sm:$0xff]
    %v1120 = vld [vmem:[#allocation10 + $0x3f8] sm:$0xff]
    %v1121 = vpack.c.bf16 %v95, %v95
    %v1122 = vpack.c.bf16 %v96, %v96
    %v1123 = vld [vmem:[%s6] ss:$8 sm:$0xf]
    %v1124 = vld [vmem:[%s6] ss:$8 sm:$0xf0]
    %v1125 = vor.u32 %v1123, %v1124
    %v1127 = vlaneseq
    %v1128 = vshrl.u32 %v1127, 7
    %v1129 = vsub.s32 0, %v1128
    %v1130 = vrot.slane %v1125, %v1129
    %v1131 = vlaneseq
    %v1132 = vshrl.u32 %v1131, 7
    %v1133 = vsub.s32 1, %v1132
    %v1134 = vrot.slane %v1125, %v1133
    %v1135 = vlaneseq
    %v1136 = vshrl.u32 %v1135, 7
    %v1137 = vsub.s32 2, %v1136
    %v1138 = vrot.slane %v1125, %v1137
    %v1139 = vlaneseq
    %v1140 = vshrl.u32 %v1139, 7
    %v1141 = vsub.s32 3, %v1140
    %v1142 = vrot.slane %v1125, %v1141
    %v1143 = vlaneseq
    %v1144 = vshrl.u32 %v1143, 7
    %v1145 = vsub.s32 4, %v1144
    %v1146 = vrot.slane %v1125, %v1145
    %v1147 = vlaneseq
    %v1148 = vshrl.u32 %v1147, 7
    %v1149 = vsub.s32 5, %v1148
    %v1150 = vrot.slane %v1125, %v1149
    %v1151 = vlaneseq
    %v1152 = vshrl.u32 %v1151, 7
    %v1153 = vsub.s32 6, %v1152
    %v1154 = vrot.slane %v1125, %v1153
    %v1155 = vlaneseq
    %v1156 = vshrl.u32 %v1155, 7
    %v1157 = vsub.s32 7, %v1156
    %v1158 = vrot.slane %v1125, %v1157
    %v1295 = vunpack.c.l.b16 %v97
    %v1296 = vunpack.c.h.b16 %v97
    %v1297 = vunpack.c.l.b16 %v98
    %v1298 = vunpack.c.h.b16 %v98
    %v1299 = vunpack.c.l.b16 %v99
    %v1300 = vunpack.c.h.b16 %v99
    %v1301 = vunpack.c.l.b16 %v100
    %v1302 = vunpack.c.h.b16 %v100
    %v1303 = vunpack.c.l.b16 %v101
    %v1304 = vunpack.c.h.b16 %v101
    %v1305 = vunpack.c.l.b16 %v102
    %v1306 = vunpack.c.h.b16 %v102
    %v1307 = vunpack.c.l.b16 %v103
    %v1308 = vunpack.c.h.b16 %v103
    %v1309 = vunpack.c.l.b16 %v104
    %v1310 = vunpack.c.h.b16 %v104
    %v1311 = vunpack.c.l.b16 %v105
    %v1312 = vunpack.c.h.b16 %v105
    %v1313 = vunpack.c.l.b16 %v106
    %v1314 = vunpack.c.h.b16 %v106
    %v1315 = vunpack.c.l.b16 %v107
    %v1316 = vunpack.c.h.b16 %v107
    %v1317 = vunpack.c.l.b16 %v108
    %v1318 = vunpack.c.h.b16 %v108
    %v1319 = vunpack.c.l.b16 %v109
    %v1320 = vunpack.c.h.b16 %v109
    %v1321 = vunpack.c.l.b16 %v110
    %v1322 = vunpack.c.h.b16 %v110
    %v1323 = vunpack.c.l.b16 %v111
    %v1324 = vunpack.c.h.b16 %v111
    %v1325 = vunpack.c.l.b16 %v112
    %v1326 = vunpack.c.h.b16 %v112
    %v1327 = vunpack.c.l.b16 %v113
    %v1328 = vunpack.c.h.b16 %v113
    %v1329 = vunpack.c.l.b16 %v114
    %v1330 = vunpack.c.h.b16 %v114
    %v1331 = vunpack.c.l.b16 %v115
    %v1332 = vunpack.c.h.b16 %v115
    %v1333 = vunpack.c.l.b16 %v116
    %v1334 = vunpack.c.h.b16 %v116
    %v1335 = vunpack.c.l.b16 %v117
    %v1336 = vunpack.c.h.b16 %v117
    %v1337 = vunpack.c.l.b16 %v118
    %v1338 = vunpack.c.h.b16 %v118
    %v1339 = vunpack.c.l.b16 %v119
    %v1340 = vunpack.c.h.b16 %v119
    %v1341 = vunpack.c.l.b16 %v120
    %v1342 = vunpack.c.h.b16 %v120
    %v1343 = vunpack.c.l.b16 %v121
    %v1344 = vunpack.c.h.b16 %v121
    %v1345 = vunpack.c.l.b16 %v122
    %v1346 = vunpack.c.h.b16 %v122
    %v1347 = vunpack.c.l.b16 %v123
    %v1348 = vunpack.c.h.b16 %v123
    %v1349 = vunpack.c.l.b16 %v124
    %v1350 = vunpack.c.h.b16 %v124
    %v1351 = vunpack.c.l.b16 %v125
    %v1352 = vunpack.c.h.b16 %v125
    %v1353 = vunpack.c.l.b16 %v126
    %v1354 = vunpack.c.h.b16 %v126
    %v1355 = vunpack.c.l.b16 %v127
    %v1356 = vunpack.c.h.b16 %v127
    %v1357 = vunpack.c.l.b16 %v128
    %v1358 = vunpack.c.h.b16 %v128
    %v1359 = vunpack.c.l.b16 %v129
    %v1360 = vunpack.c.h.b16 %v129
    %v1361 = vunpack.c.l.b16 %v130
    %v1362 = vunpack.c.h.b16 %v130
    %v1363 = vunpack.c.l.b16 %v131
    %v1364 = vunpack.c.h.b16 %v131
    %v1365 = vunpack.c.l.b16 %v132
    %v1366 = vunpack.c.h.b16 %v132
    %v1367 = vunpack.c.l.b16 %v133
    %v1368 = vunpack.c.h.b16 %v133
    %v1369 = vunpack.c.l.b16 %v134
    %v1370 = vunpack.c.h.b16 %v134
    %v1371 = vunpack.c.l.b16 %v135
    %v1372 = vunpack.c.h.b16 %v135
    %v1373 = vunpack.c.l.b16 %v136
    %v1374 = vunpack.c.h.b16 %v136
    %v1375 = vunpack.c.l.b16 %v137
    %v1376 = vunpack.c.h.b16 %v137
    %v1377 = vunpack.c.l.b16 %v138
    %v1378 = vunpack.c.h.b16 %v138
    %v1379 = vunpack.c.l.b16 %v139
    %v1380 = vunpack.c.h.b16 %v139
    %v1381 = vunpack.c.l.b16 %v140
    %v1382 = vunpack.c.h.b16 %v140
    %v1383 = vunpack.c.l.b16 %v141
    %v1384 = vunpack.c.h.b16 %v141
    %v1385 = vunpack.c.l.b16 %v142
    %v1386 = vunpack.c.h.b16 %v142
    %v1387 = vunpack.c.l.b16 %v143
    %v1388 = vunpack.c.h.b16 %v143
    %v1389 = vunpack.c.l.b16 %v144
    %v1390 = vunpack.c.h.b16 %v144
    %v1391 = vunpack.c.l.b16 %v145
    %v1392 = vunpack.c.h.b16 %v145
    %v1393 = vunpack.c.l.b16 %v146
    %v1394 = vunpack.c.h.b16 %v146
    %v1395 = vunpack.c.l.b16 %v147
    %v1396 = vunpack.c.h.b16 %v147
    %v1397 = vunpack.c.l.b16 %v148
    %v1398 = vunpack.c.h.b16 %v148
    %v1399 = vunpack.c.l.b16 %v149
    %v1400 = vunpack.c.h.b16 %v149
    %v1401 = vunpack.c.l.b16 %v150
    %v1402 = vunpack.c.h.b16 %v150
    %v1403 = vunpack.c.l.b16 %v151
    %v1404 = vunpack.c.h.b16 %v151
    %v1405 = vunpack.c.l.b16 %v152
    %v1406 = vunpack.c.h.b16 %v152
    %v1407 = vunpack.c.l.b16 %v153
    %v1408 = vunpack.c.h.b16 %v153
    %v1409 = vunpack.c.l.b16 %v154
    %v1410 = vunpack.c.h.b16 %v154
    %v1411 = vunpack.c.l.b16 %v155
    %v1412 = vunpack.c.h.b16 %v155
    %v1413 = vunpack.c.l.b16 %v156
    %v1414 = vunpack.c.h.b16 %v156
    %v1415 = vunpack.c.l.b16 %v157
    %v1416 = vunpack.c.h.b16 %v157
    %v1417 = vunpack.c.l.b16 %v158
    %v1418 = vunpack.c.h.b16 %v158
    %v1419 = vunpack.c.l.b16 %v159
    %v1420 = vunpack.c.h.b16 %v159
    %v1421 = vunpack.c.l.b16 %v160
    %v1422 = vunpack.c.h.b16 %v160
    %v1423 = vunpack.c.l.b16 %v161
    %v1424 = vunpack.c.h.b16 %v161
    %v1425 = vunpack.c.l.b16 %v162
    %v1426 = vunpack.c.h.b16 %v162
    %v1427 = vunpack.c.l.b16 %v163
    %v1428 = vunpack.c.h.b16 %v163
    %v1429 = vunpack.c.l.b16 %v164
    %v1430 = vunpack.c.h.b16 %v164
    %v1431 = vunpack.c.l.b16 %v165
    %v1432 = vunpack.c.h.b16 %v165
    %v1433 = vunpack.c.l.b16 %v166
    %v1434 = vunpack.c.h.b16 %v166
    %v1435 = vunpack.c.l.b16 %v167
    %v1436 = vunpack.c.h.b16 %v167
    %v1437 = vunpack.c.l.b16 %v168
    %v1438 = vunpack.c.h.b16 %v168
    %v1439 = vunpack.c.l.b16 %v169
    %v1440 = vunpack.c.h.b16 %v169
    %v1441 = vunpack.c.l.b16 %v170
    %v1442 = vunpack.c.h.b16 %v170
    %v1443 = vunpack.c.l.b16 %v171
    %v1444 = vunpack.c.h.b16 %v171
    %v1445 = vunpack.c.l.b16 %v172
    %v1446 = vunpack.c.h.b16 %v172
    %v1447 = vunpack.c.l.b16 %v173
    %v1448 = vunpack.c.h.b16 %v173
    %v1449 = vunpack.c.l.b16 %v174
    %v1450 = vunpack.c.h.b16 %v174
    %v1451 = vunpack.c.l.b16 %v175
    %v1452 = vunpack.c.h.b16 %v175
    %v1453 = vunpack.c.l.b16 %v176
    %v1454 = vunpack.c.h.b16 %v176
    %v1455 = vunpack.c.l.b16 %v177
    %v1456 = vunpack.c.h.b16 %v177
    %v1457 = vunpack.c.l.b16 %v178
    %v1458 = vunpack.c.h.b16 %v178
    %v1459 = vunpack.c.l.b16 %v179
    %v1460 = vunpack.c.h.b16 %v179
    %v1461 = vunpack.c.l.b16 %v180
    %v1462 = vunpack.c.h.b16 %v180
    %v1463 = vunpack.c.l.b16 %v181
    %v1464 = vunpack.c.h.b16 %v181
    %v1465 = vunpack.c.l.b16 %v182
    %v1466 = vunpack.c.h.b16 %v182
    %v1467 = vunpack.c.l.b16 %v183
    %v1468 = vunpack.c.h.b16 %v183
    %v1469 = vunpack.c.l.b16 %v184
    %v1470 = vunpack.c.h.b16 %v184
    %v1471 = vunpack.c.l.b16 %v185
    %v1472 = vunpack.c.h.b16 %v185
    %v1473 = vunpack.c.l.b16 %v186
    %v1474 = vunpack.c.h.b16 %v186
    %v1475 = vunpack.c.l.b16 %v187
    %v1476 = vunpack.c.h.b16 %v187
    %v1477 = vunpack.c.l.b16 %v188
    %v1478 = vunpack.c.h.b16 %v188
    %v1479 = vunpack.c.l.b16 %v189
    %v1480 = vunpack.c.h.b16 %v189
    %v1481 = vunpack.c.l.b16 %v190
    %v1482 = vunpack.c.h.b16 %v190
    %v1483 = vunpack.c.l.b16 %v191
    %v1484 = vunpack.c.h.b16 %v191
    %v1485 = vunpack.c.l.b16 %v192
    %v1486 = vunpack.c.h.b16 %v192
    %v1487 = vunpack.c.l.b16 %v193
    %v1488 = vunpack.c.h.b16 %v193
    %v1489 = vunpack.c.l.b16 %v194
    %v1490 = vunpack.c.h.b16 %v194
    %v1491 = vunpack.c.l.b16 %v195
    %v1492 = vunpack.c.h.b16 %v195
    %v1493 = vunpack.c.l.b16 %v196
    %v1494 = vunpack.c.h.b16 %v196
    %v1495 = vunpack.c.l.b16 %v197
    %v1496 = vunpack.c.h.b16 %v197
    %v1497 = vunpack.c.l.b16 %v198
    %v1498 = vunpack.c.h.b16 %v198
    %v1499 = vunpack.c.l.b16 %v199
    %v1500 = vunpack.c.h.b16 %v199
    %v1501 = vunpack.c.l.b16 %v200
    %v1502 = vunpack.c.h.b16 %v200
    %v1503 = vunpack.c.l.b16 %v201
    %v1504 = vunpack.c.h.b16 %v201
    %v1505 = vunpack.c.l.b16 %v202
    %v1506 = vunpack.c.h.b16 %v202
    %v1507 = vunpack.c.l.b16 %v203
    %v1508 = vunpack.c.h.b16 %v203
    %v1509 = vunpack.c.l.b16 %v204
    %v1510 = vunpack.c.h.b16 %v204
    %v1511 = vunpack.c.l.b16 %v205
    %v1512 = vunpack.c.h.b16 %v205
    %v1513 = vunpack.c.l.b16 %v206
    %v1514 = vunpack.c.h.b16 %v206
    %v1515 = vunpack.c.l.b16 %v207
    %v1516 = vunpack.c.h.b16 %v207
    %v1517 = vunpack.c.l.b16 %v208
    %v1518 = vunpack.c.h.b16 %v208
    %v1519 = vunpack.c.l.b16 %v209
    %v1520 = vunpack.c.h.b16 %v209
    %v1521 = vunpack.c.l.b16 %v210
    %v1522 = vunpack.c.h.b16 %v210
    %v1523 = vunpack.c.l.b16 %v211
    %v1524 = vunpack.c.h.b16 %v211
    %v1525 = vunpack.c.l.b16 %v212
    %v1526 = vunpack.c.h.b16 %v212
    %v1527 = vunpack.c.l.b16 %v213
    %v1528 = vunpack.c.h.b16 %v213
    %v1529 = vunpack.c.l.b16 %v214
    %v1530 = vunpack.c.h.b16 %v214
    %v1531 = vunpack.c.l.b16 %v215
    %v1532 = vunpack.c.h.b16 %v215
    %v1533 = vunpack.c.l.b16 %v216
    %v1534 = vunpack.c.h.b16 %v216
    %v1535 = vunpack.c.l.b16 %v217
    %v1536 = vunpack.c.h.b16 %v217
    %v1537 = vunpack.c.l.b16 %v218
    %v1538 = vunpack.c.h.b16 %v218
    %v1539 = vunpack.c.l.b16 %v219
    %v1540 = vunpack.c.h.b16 %v219
    %v1541 = vunpack.c.l.b16 %v220
    %v1542 = vunpack.c.h.b16 %v220
    %v1543 = vunpack.c.l.b16 %v221
    %v1544 = vunpack.c.h.b16 %v221
    %v1545 = vunpack.c.l.b16 %v222
    %v1546 = vunpack.c.h.b16 %v222
    %v1547 = vunpack.c.l.b16 %v223
    %v1548 = vunpack.c.h.b16 %v223
    %v1549 = vunpack.c.l.b16 %v224
    %v1550 = vunpack.c.h.b16 %v224
    %v1551 = vpack.c.b16 %v1303, %v1295
    %v1552 = vpack.c.b16 %v1304, %v1296
    %v1553 = vpack.c.b16 %v1305, %v1297
    %v1554 = vpack.c.b16 %v1306, %v1298
    %v1555 = vpack.c.b16 %v1307, %v1299
    %v1556 = vpack.c.b16 %v1308, %v1300
    %v1557 = vpack.c.b16 %v1309, %v1301
    %v1558 = vpack.c.b16 %v1310, %v1302
    %v1559 = vpack.c.b16 %v1319, %v1311
    %v1560 = vpack.c.b16 %v1320, %v1312
    %v1561 = vpack.c.b16 %v1321, %v1313
    %v1562 = vpack.c.b16 %v1322, %v1314
    %v1563 = vpack.c.b16 %v1323, %v1315
    %v1564 = vpack.c.b16 %v1324, %v1316
    %v1565 = vpack.c.b16 %v1325, %v1317
    %v1566 = vpack.c.b16 %v1326, %v1318
    %v1567 = vpack.c.b16 %v1335, %v1327
    %v1568 = vpack.c.b16 %v1336, %v1328
    %v1569 = vpack.c.b16 %v1337, %v1329
    %v1570 = vpack.c.b16 %v1338, %v1330
    %v1571 = vpack.c.b16 %v1339, %v1331
    %v1572 = vpack.c.b16 %v1340, %v1332
    %v1573 = vpack.c.b16 %v1341, %v1333
    %v1574 = vpack.c.b16 %v1342, %v1334
    %v1575 = vpack.c.b16 %v1351, %v1343
    %v1576 = vpack.c.b16 %v1352, %v1344
    %v1577 = vpack.c.b16 %v1353, %v1345
    %v1578 = vpack.c.b16 %v1354, %v1346
    %v1579 = vpack.c.b16 %v1355, %v1347
    %v1580 = vpack.c.b16 %v1356, %v1348
    %v1581 = vpack.c.b16 %v1357, %v1349
    %v1582 = vpack.c.b16 %v1358, %v1350
    %v1583 = vpack.c.b16 %v1367, %v1359
    %v1584 = vpack.c.b16 %v1368, %v1360
    %v1585 = vpack.c.b16 %v1369, %v1361
    %v1586 = vpack.c.b16 %v1370, %v1362
    %v1587 = vpack.c.b16 %v1371, %v1363
    %v1588 = vpack.c.b16 %v1372, %v1364
    %v1589 = vpack.c.b16 %v1373, %v1365
    %v1590 = vpack.c.b16 %v1374, %v1366
    %v1591 = vpack.c.b16 %v1383, %v1375
    %v1592 = vpack.c.b16 %v1384, %v1376
    %v1593 = vpack.c.b16 %v1385, %v1377
    %v1594 = vpack.c.b16 %v1386, %v1378
    %v1595 = vpack.c.b16 %v1387, %v1379
    %v1596 = vpack.c.b16 %v1388, %v1380
    %v1597 = vpack.c.b16 %v1389, %v1381
    %v1598 = vpack.c.b16 %v1390, %v1382
    %v1599 = vpack.c.b16 %v1399, %v1391
    %v1600 = vpack.c.b16 %v1400, %v1392
    %v1601 = vpack.c.b16 %v1401, %v1393
    %v1602 = vpack.c.b16 %v1402, %v1394
    %v1603 = vpack.c.b16 %v1403, %v1395
    %v1604 = vpack.c.b16 %v1404, %v1396
    %v1605 = vpack.c.b16 %v1405, %v1397
    %v1606 = vpack.c.b16 %v1406, %v1398
    %v1607 = vpack.c.b16 %v1415, %v1407
    %v1608 = vpack.c.b16 %v1416, %v1408
    %v1609 = vpack.c.b16 %v1417, %v1409
    %v1610 = vpack.c.b16 %v1418, %v1410
    %v1611 = vpack.c.b16 %v1419, %v1411
    %v1612 = vpack.c.b16 %v1420, %v1412
    %v1613 = vpack.c.b16 %v1421, %v1413
    %v1614 = vpack.c.b16 %v1422, %v1414
    %v1615 = vpack.c.b16 %v1431, %v1423
    %v1616 = vpack.c.b16 %v1432, %v1424
    %v1617 = vpack.c.b16 %v1433, %v1425
    %v1618 = vpack.c.b16 %v1434, %v1426
    %v1619 = vpack.c.b16 %v1435, %v1427
    %v1620 = vpack.c.b16 %v1436, %v1428
    %v1621 = vpack.c.b16 %v1437, %v1429
    %v1622 = vpack.c.b16 %v1438, %v1430
    %v1623 = vpack.c.b16 %v1447, %v1439
    %v1624 = vpack.c.b16 %v1448, %v1440
    %v1625 = vpack.c.b16 %v1449, %v1441
    %v1626 = vpack.c.b16 %v1450, %v1442
    %v1627 = vpack.c.b16 %v1451, %v1443
    %v1628 = vpack.c.b16 %v1452, %v1444
    %v1629 = vpack.c.b16 %v1453, %v1445
    %v1630 = vpack.c.b16 %v1454, %v1446
    %v1631 = vpack.c.b16 %v1463, %v1455
    %v1632 = vpack.c.b16 %v1464, %v1456
    %v1633 = vpack.c.b16 %v1465, %v1457
    %v1634 = vpack.c.b16 %v1466, %v1458
    %v1635 = vpack.c.b16 %v1467, %v1459
    %v1636 = vpack.c.b16 %v1468, %v1460
    %v1637 = vpack.c.b16 %v1469, %v1461
    %v1638 = vpack.c.b16 %v1470, %v1462
    %v1639 = vpack.c.b16 %v1479, %v1471
    %v1640 = vpack.c.b16 %v1480, %v1472
    %v1641 = vpack.c.b16 %v1481, %v1473
    %v1642 = vpack.c.b16 %v1482, %v1474
    %v1643 = vpack.c.b16 %v1483, %v1475
    %v1644 = vpack.c.b16 %v1484, %v1476
    %v1645 = vpack.c.b16 %v1485, %v1477
    %v1646 = vpack.c.b16 %v1486, %v1478
    %v1647 = vpack.c.b16 %v1495, %v1487
    %v1648 = vpack.c.b16 %v1496, %v1488
    %v1649 = vpack.c.b16 %v1497, %v1489
    %v1650 = vpack.c.b16 %v1498, %v1490
    %v1651 = vpack.c.b16 %v1499, %v1491
    %v1652 = vpack.c.b16 %v1500, %v1492
    %v1653 = vpack.c.b16 %v1501, %v1493
    %v1654 = vpack.c.b16 %v1502, %v1494
    %v1655 = vpack.c.b16 %v1511, %v1503
    %v1656 = vpack.c.b16 %v1512, %v1504
    %v1657 = vpack.c.b16 %v1513, %v1505
    %v1658 = vpack.c.b16 %v1514, %v1506
    %v1659 = vpack.c.b16 %v1515, %v1507
    %v1660 = vpack.c.b16 %v1516, %v1508
    %v1661 = vpack.c.b16 %v1517, %v1509
    %v1662 = vpack.c.b16 %v1518, %v1510
    %v1663 = vpack.c.b16 %v1527, %v1519
    %v1664 = vpack.c.b16 %v1528, %v1520
    %v1665 = vpack.c.b16 %v1529, %v1521
    %v1666 = vpack.c.b16 %v1530, %v1522
    %v1667 = vpack.c.b16 %v1531, %v1523
    %v1668 = vpack.c.b16 %v1532, %v1524
    %v1669 = vpack.c.b16 %v1533, %v1525
    %v1670 = vpack.c.b16 %v1534, %v1526
    %v1671 = vpack.c.b16 %v1543, %v1535
    %v1672 = vpack.c.b16 %v1544, %v1536
    %v1673 = vpack.c.b16 %v1545, %v1537
    %v1674 = vpack.c.b16 %v1546, %v1538
    %v1675 = vpack.c.b16 %v1547, %v1539
    %v1676 = vpack.c.b16 %v1548, %v1540
    %v1677 = vpack.c.b16 %v1549, %v1541
    %v1678 = vpack.c.b16 %v1550, %v1542
    %1807 = vmatprep.subr.bf16.mxu0 %v1552
    %1808 = vmatpush1.bf16.msra.mxu0 %v1551
    %1809 = vmatprep.subr.bf16.mxu0 %v1560
    %1810 = vmatpush1.bf16.msra.mxu0 %v1559
    %1811 = vmatprep.subr.bf16.mxu0 %v1568
    %1812 = vmatpush1.bf16.msra.mxu0 %v1567
    %1813 = vmatprep.subr.bf16.mxu0 %v1576
    %1814 = vmatpush1.bf16.msra.mxu0 %v1575
    %1815 = vmatprep.subr.bf16.mxu0 %v1584
    %1816 = vmatpush1.bf16.msra.mxu0 %v1583
    %1817 = vmatprep.subr.bf16.mxu0 %v1592
    %1818 = vmatpush1.bf16.msra.mxu0 %v1591
    %1819 = vmatprep.subr.bf16.mxu0 %v1600
    %1820 = vmatpush1.bf16.msra.mxu0 %v1599
    %1821 = vmatprep.subr.bf16.mxu0 %v1608
    %1822 = vmatpush1.bf16.msra.mxu0 %v1607
    %1823 = vmatprep.subr.bf16.mxu0 %v1616
    %1824 = vmatpush1.bf16.msra.mxu0 %v1615
    %1825 = vmatprep.subr.bf16.mxu0 %v1624
    %1826 = vmatpush1.bf16.msra.mxu0 %v1623
    %1827 = vmatprep.subr.bf16.mxu0 %v1632
    %1828 = vmatpush1.bf16.msra.mxu0 %v1631
    %1829 = vmatprep.subr.bf16.mxu0 %v1640
    %1830 = vmatpush1.bf16.msra.mxu0 %v1639
    %1831 = vmatprep.subr.bf16.mxu0 %v1648
    %1832 = vmatpush1.bf16.msra.mxu0 %v1647
    %1833 = vmatprep.subr.bf16.mxu0 %v1656
    %1834 = vmatpush1.bf16.msra.mxu0 %v1655
    %1835 = vmatprep.subr.bf16.mxu0 %v1664
    %1836 = vmatpush1.bf16.msra.mxu0 %v1663
    %1837 = vmatprep.subr.bf16.mxu0 %v1672
    %1838 = vmatpush1.bf16.msra.mxu0 %v1671
    %1839 = vmatprep.mubr.bf16.mxu0 %v1122
    %1840 = vmatmul.mubr.bf16.gmra.mrb[0].mxu0 %v1121
    %v1841 = vpop.f32.mrb[0].mxu0
    %v1842 = vadd.f32 %v1130, %v1841
    %v1843 = vpop.f32.mrb[0].mxu0
    %v1844 = vadd.f32 %v1134, %v1843
    %v1845 = vpop.f32.mrb[0].mxu0
    %v1846 = vpop.f32.mrb[0].mxu0
    %1847 = vdwg.mxu0
    %1848 = vmatprep.subr.bf16.mxu0 %v1554
    %1849 = vmatpush1.bf16.msra.mxu0 %v1553
    %1850 = vmatprep.subr.bf16.mxu0 %v1562
    %1851 = vmatpush1.bf16.msra.mxu0 %v1561
    %1852 = vmatprep.subr.bf16.mxu0 %v1570
    %1853 = vmatpush1.bf16.msra.mxu0 %v1569
    %1854 = vmatprep.subr.bf16.mxu0 %v1578
    %1855 = vmatpush1.bf16.msra.mxu0 %v1577
    %1856 = vmatprep.subr.bf16.mxu0 %v1586
    %1857 = vmatpush1.bf16.msra.mxu0 %v1585
    %1858 = vmatprep.subr.bf16.mxu0 %v1594
    %1859 = vmatpush1.bf16.msra.mxu0 %v1593
    %1860 = vmatprep.subr.bf16.mxu0 %v1602
    %1861 = vmatpush1.bf16.msra.mxu0 %v1601
    %1862 = vmatprep.subr.bf16.mxu0 %v1610
    %1863 = vmatpush1.bf16.msra.mxu0 %v1609
    %1864 = vmatprep.subr.bf16.mxu0 %v1618
    %1865 = vmatpush1.bf16.msra.mxu0 %v1617
    %1866 = vmatprep.subr.bf16.mxu0 %v1626
    %1867 = vmatpush1.bf16.msra.mxu0 %v1625
    %1868 = vmatprep.subr.bf16.mxu0 %v1634
    %1869 = vmatpush1.bf16.msra.mxu0 %v1633
    %1870 = vmatprep.subr.bf16.mxu0 %v1642
    %1871 = vmatpush1.bf16.msra.mxu0 %v1641
    %1872 = vmatprep.subr.bf16.mxu0 %v1650
    %1873 = vmatpush1.bf16.msra.mxu0 %v1649
    %1874 = vmatprep.subr.bf16.mxu0 %v1658
    %1875 = vmatpush1.bf16.msra.mxu0 %v1657
    %1876 = vmatprep.subr.bf16.mxu0 %v1666
    %1877 = vmatpush1.bf16.msra.mxu0 %v1665
    %1878 = vmatprep.subr.bf16.mxu0 %v1674
    %1879 = vmatpush1.bf16.msra.mxu0 %v1673
    %1880 = vmatprep.mubr.bf16.mxu0 %v1122
    %1881 = vmatmul.mubr.bf16.gmra.mrb[0].mxu0 %v1121
    %v1882 = vpop.f32.mrb[0].mxu0
    %v1883 = vadd.f32 %v1138, %v1882
    %v1884 = vpop.f32.mrb[0].mxu0
    %v1885 = vadd.f32 %v1142, %v1884
    %v1886 = vpop.f32.mrb[0].mxu0
    %v1887 = vpop.f32.mrb[0].mxu0
    %1888 = vdwg.mxu0
    %1889 = vmatprep.subr.bf16.mxu0 %v1556
    %1890 = vmatpush1.bf16.msra.mxu0 %v1555
    %1891 = vmatprep.subr.bf16.mxu0 %v1564
    %1892 = vmatpush1.bf16.msra.mxu0 %v1563
    %1893 = vmatprep.subr.bf16.mxu0 %v1572
    %1894 = vmatpush1.bf16.msra.mxu0 %v1571
    %1895 = vmatprep.subr.bf16.mxu0 %v1580
    %1896 = vmatpush1.bf16.msra.mxu0 %v1579
    %1897 = vmatprep.subr.bf16.mxu0 %v1588
    %1898 = vmatpush1.bf16.msra.mxu0 %v1587
    %1899 = vmatprep.subr.bf16.mxu0 %v1596
    %1900 = vmatpush1.bf16.msra.mxu0 %v1595
    %1901 = vmatprep.subr.bf16.mxu0 %v1604
    %1902 = vmatpush1.bf16.msra.mxu0 %v1603
    %1903 = vmatprep.subr.bf16.mxu0 %v1612
    %1904 = vmatpush1.bf16.msra.mxu0 %v1611
    %1905 = vmatprep.subr.bf16.mxu0 %v1620
    %1906 = vmatpush1.bf16.msra.mxu0 %v1619
    %1907 = vmatprep.subr.bf16.mxu0 %v1628
    %1908 = vmatpush1.bf16.msra.mxu0 %v1627
    %1909 = vmatprep.subr.bf16.mxu0 %v1636
    %1910 = vmatpush1.bf16.msra.mxu0 %v1635
    %1911 = vmatprep.subr.bf16.mxu0 %v1644
    %1912 = vmatpush1.bf16.msra.mxu0 %v1643
    %1913 = vmatprep.subr.bf16.mxu0 %v1652
    %1914 = vmatpush1.bf16.msra.mxu0 %v1651
    %1915 = vmatprep.subr.bf16.mxu0 %v1660
    %1916 = vmatpush1.bf16.msra.mxu0 %v1659
    %1917 = vmatprep.subr.bf16.mxu0 %v1668
    %1918 = vmatpush1.bf16.msra.mxu0 %v1667
    %1919 = vmatprep.subr.bf16.mxu0 %v1676
    %1920 = vmatpush1.bf16.msra.mxu0 %v1675
    %1921 = vmatprep.mubr.bf16.mxu0 %v1122
    %1922 = vmatmul.mubr.bf16.gmra.mrb[0].mxu0 %v1121
    %v1923 = vpop.f32.mrb[0].mxu0
    %v1924 = vadd.f32 %v1146, %v1923
    %v1925 = vpop.f32.mrb[0].mxu0
    %v1926 = vadd.f32 %v1150, %v1925
    %v1927 = vpop.f32.mrb[0].mxu0
    %v1928 = vpop.f32.mrb[0].mxu0
    %1929 = vdwg.mxu0
    %1930 = vmatprep.subr.bf16.mxu0 %v1558
    %1931 = vmatpush1.bf16.msra.mxu0 %v1557
    %1932 = vmatprep.subr.bf16.mxu0 %v1566
    %1933 = vmatpush1.bf16.msra.mxu0 %v1565
    %1934 = vmatprep.subr.bf16.mxu0 %v1574
    %1935 = vmatpush1.bf16.msra.mxu0 %v1573
    %1936 = vmatprep.subr.bf16.mxu0 %v1582
    %1937 = vmatpush1.bf16.msra.mxu0 %v1581
    %1938 = vmatprep.subr.bf16.mxu0 %v1590
    %1939 = vmatpush1.bf16.msra.mxu0 %v1589
    %1940 = vmatprep.subr.bf16.mxu0 %v1598
    %1941 = vmatpush1.bf16.msra.mxu0 %v1597
    %1942 = vmatprep.subr.bf16.mxu0 %v1606
    %1943 = vmatpush1.bf16.msra.mxu0 %v1605
    %1944 = vmatprep.subr.bf16.mxu0 %v1614
    %1945 = vmatpush1.bf16.msra.mxu0 %v1613
    %1946 = vmatprep.subr.bf16.mxu0 %v1622
    %1947 = vmatpush1.bf16.msra.mxu0 %v1621
    %1948 = vmatprep.subr.bf16.mxu0 %v1630
    %1949 = vmatpush1.bf16.msra.mxu0 %v1629
    %1950 = vmatprep.subr.bf16.mxu0 %v1638
    %1951 = vmatpush1.bf16.msra.mxu0 %v1637
    %1952 = vmatprep.subr.bf16.mxu0 %v1646
    %1953 = vmatpush1.bf16.msra.mxu0 %v1645
    %1954 = vmatprep.subr.bf16.mxu0 %v1654
    %1955 = vmatpush1.bf16.msra.mxu0 %v1653
    %1956 = vmatprep.subr.bf16.mxu0 %v1662
    %1957 = vmatpush1.bf16.msra.mxu0 %v1661
    %1958 = vmatprep.subr.bf16.mxu0 %v1670
    %1959 = vmatpush1.bf16.msra.mxu0 %v1669
    %1960 = vmatprep.subr.bf16.mxu0 %v1678
    %1961 = vmatpush1.bf16.msra.mxu0 %v1677
    %1962 = vmatprep.mubr.bf16.mxu0 %v1122
    %1963 = vmatmul.mubr.bf16.gmra.mrb[0].mxu0 %v1121
    %v1964 = vpop.f32.mrb[0].mxu0
    %v1965 = vadd.f32 %v1154, %v1964
    %v1966 = vpop.f32.mrb[0].mxu0
    %v1967 = vadd.f32 %v1158, %v1966
    %v1968 = vpop.f32.mrb[0].mxu0
    %v1969 = vpop.f32.mrb[0].mxu0
    %1970 = vdwg.mxu0
    %v1971 = vmax.f32 %v1842, 0.0
    %v1972 = vmax.f32 %v1844, 0.0
    %v1973 = vmax.f32 %v1883, 0.0
    %v1974 = vmax.f32 %v1885, 0.0
    %v1975 = vmax.f32 %v1924, 0.0
    %v1976 = vmax.f32 %v1926, 0.0
    %v1977 = vmax.f32 %v1965, 0.0
    %v1978 = vmax.f32 %v1967, 0.0
    %v1979 = vpack.c.bf16 %v1971, %v1971
    %v1980 = vpack.c.bf16 %v1972, %v1972
    %v1981 = vpack.c.bf16 %v1973, %v1973
    %v1982 = vpack.c.bf16 %v1974, %v1974
    %v1983 = vpack.c.bf16 %v1975, %v1975
    %v1984 = vpack.c.bf16 %v1976, %v1976
    %v1985 = vpack.c.bf16 %v1977, %v1977
    %v1986 = vpack.c.bf16 %v1978, %v1978
    %s1987 = scalar_lea.vmem %s6, 1
    %v1988 = vld [vmem:[%s1987] ss:$8 sm:$0xf]
    %v1990 = vlaneseq
    %v1991 = vshrl.u32 %v1990, 7
    %v1992 = vsub.s32 0, %v1991
    %v1993 = vrot.slane %v1988, %v1992
    %v1994 = vlaneseq
    %v1995 = vshrl.u32 %v1994, 7
    %v1996 = vsub.s32 1, %v1995
    %v1997 = vrot.slane %v1988, %v1996
    %v1998 = vlaneseq
    %v1999 = vshrl.u32 %v1998, 7
    %v2000 = vsub.s32 2, %v1999
    %v2001 = vrot.slane %v1988, %v2000
    %v2002 = vlaneseq
    %v2003 = vshrl.u32 %v2002, 7
    %v2004 = vsub.s32 3, %v2003
    %v2005 = vrot.slane %v1988, %v2004
    %v2266 = vunpack.c.l.b16 %v225
    %v2267 = vunpack.c.h.b16 %v225
    %v2268 = vunpack.c.l.b16 %v226
    %v2269 = vunpack.c.h.b16 %v226
    %v2270 = vunpack.c.l.b16 %v227
    %v2271 = vunpack.c.h.b16 %v227
    %v2272 = vunpack.c.l.b16 %v228
    %v2273 = vunpack.c.h.b16 %v228
    %v2274 = vunpack.c.l.b16 %v229
    %v2275 = vunpack.c.h.b16 %v229
    %v2276 = vunpack.c.l.b16 %v230
    %v2277 = vunpack.c.h.b16 %v230
    %v2278 = vunpack.c.l.b16 %v231
    %v2279 = vunpack.c.h.b16 %v231
    %v2280 = vunpack.c.l.b16 %v232
    %v2281 = vunpack.c.h.b16 %v232
    %v2282 = vunpack.c.l.b16 %v233
    %v2283 = vunpack.c.h.b16 %v233
    %v2284 = vunpack.c.l.b16 %v234
    %v2285 = vunpack.c.h.b16 %v234
    %v2286 = vunpack.c.l.b16 %v235
    %v2287 = vunpack.c.h.b16 %v235
    %v2288 = vunpack.c.l.b16 %v236
    %v2289 = vunpack.c.h.b16 %v236
    %v2290 = vunpack.c.l.b16 %v237
    %v2291 = vunpack.c.h.b16 %v237
    %v2292 = vunpack.c.l.b16 %v238
    %v2293 = vunpack.c.h.b16 %v238
    %v2294 = vunpack.c.l.b16 %v239
    %v2295 = vunpack.c.h.b16 %v239
    %v2296 = vunpack.c.l.b16 %v240
    %v2297 = vunpack.c.h.b16 %v240
    %v2298 = vunpack.c.l.b16 %v241
    %v2299 = vunpack.c.h.b16 %v241
    %v2300 = vunpack.c.l.b16 %v242
    %v2301 = vunpack.c.h.b16 %v242
    %v2302 = vunpack.c.l.b16 %v243
    %v2303 = vunpack.c.h.b16 %v243
    %v2304 = vunpack.c.l.b16 %v244
    %v2305 = vunpack.c.h.b16 %v244
    %v2306 = vunpack.c.l.b16 %v245
    %v2307 = vunpack.c.h.b16 %v245
    %v2308 = vunpack.c.l.b16 %v246
    %v2309 = vunpack.c.h.b16 %v246
    %v2310 = vunpack.c.l.b16 %v247
    %v2311 = vunpack.c.h.b16 %v247
    %v2312 = vunpack.c.l.b16 %v248
    %v2313 = vunpack.c.h.b16 %v248
    %v2314 = vunpack.c.l.b16 %v249
    %v2315 = vunpack.c.h.b16 %v249
    %v2316 = vunpack.c.l.b16 %v250
    %v2317 = vunpack.c.h.b16 %v250
    %v2318 = vunpack.c.l.b16 %v251
    %v2319 = vunpack.c.h.b16 %v251
    %v2320 = vunpack.c.l.b16 %v252
    %v2321 = vunpack.c.h.b16 %v252
    %v2322 = vunpack.c.l.b16 %v253
    %v2323 = vunpack.c.h.b16 %v253
    %v2324 = vunpack.c.l.b16 %v254
    %v2325 = vunpack.c.h.b16 %v254
    %v2326 = vunpack.c.l.b16 %v255
    %v2327 = vunpack.c.h.b16 %v255
    %v2328 = vunpack.c.l.b16 %v256
    %v2329 = vunpack.c.h.b16 %v256
    %v2330 = vunpack.c.l.b16 %v257
    %v2331 = vunpack.c.h.b16 %v257
    %v2332 = vunpack.c.l.b16 %v258
    %v2333 = vunpack.c.h.b16 %v258
    %v2334 = vunpack.c.l.b16 %v259
    %v2335 = vunpack.c.h.b16 %v259
    %v2336 = vunpack.c.l.b16 %v260
    %v2337 = vunpack.c.h.b16 %v260
    %v2338 = vunpack.c.l.b16 %v261
    %v2339 = vunpack.c.h.b16 %v261
    %v2340 = vunpack.c.l.b16 %v262
    %v2341 = vunpack.c.h.b16 %v262
    %v2342 = vunpack.c.l.b16 %v263
    %v2343 = vunpack.c.h.b16 %v263
    %v2344 = vunpack.c.l.b16 %v264
    %v2345 = vunpack.c.h.b16 %v264
    %v2346 = vunpack.c.l.b16 %v265
    %v2347 = vunpack.c.h.b16 %v265
    %v2348 = vunpack.c.l.b16 %v266
    %v2349 = vunpack.c.h.b16 %v266
    %v2350 = vunpack.c.l.b16 %v267
    %v2351 = vunpack.c.h.b16 %v267
    %v2352 = vunpack.c.l.b16 %v268
    %v2353 = vunpack.c.h.b16 %v268
    %v2354 = vunpack.c.l.b16 %v269
    %v2355 = vunpack.c.h.b16 %v269
    %v2356 = vunpack.c.l.b16 %v270
    %v2357 = vunpack.c.h.b16 %v270
    %v2358 = vunpack.c.l.b16 %v271
    %v2359 = vunpack.c.h.b16 %v271
    %v2360 = vunpack.c.l.b16 %v272
    %v2361 = vunpack.c.h.b16 %v272
    %v2362 = vunpack.c.l.b16 %v273
    %v2363 = vunpack.c.h.b16 %v273
    %v2364 = vunpack.c.l.b16 %v274
    %v2365 = vunpack.c.h.b16 %v274
    %v2366 = vunpack.c.l.b16 %v275
    %v2367 = vunpack.c.h.b16 %v275
    %v2368 = vunpack.c.l.b16 %v276
    %v2369 = vunpack.c.h.b16 %v276
    %v2370 = vunpack.c.l.b16 %v277
    %v2371 = vunpack.c.h.b16 %v277
    %v2372 = vunpack.c.l.b16 %v278
    %v2373 = vunpack.c.h.b16 %v278
    %v2374 = vunpack.c.l.b16 %v279
    %v2375 = vunpack.c.h.b16 %v279
    %v2376 = vunpack.c.l.b16 %v280
    %v2377 = vunpack.c.h.b16 %v280
    %v2378 = vunpack.c.l.b16 %v281
    %v2379 = vunpack.c.h.b16 %v281
    %v2380 = vunpack.c.l.b16 %v282
    %v2381 = vunpack.c.h.b16 %v282
    %v2382 = vunpack.c.l.b16 %v283
    %v2383 = vunpack.c.h.b16 %v283
    %v2384 = vunpack.c.l.b16 %v284
    %v2385 = vunpack.c.h.b16 %v284
    %v2386 = vunpack.c.l.b16 %v285
    %v2387 = vunpack.c.h.b16 %v285
    %v2388 = vunpack.c.l.b16 %v286
    %v2389 = vunpack.c.h.b16 %v286
    %v2390 = vunpack.c.l.b16 %v287
    %v2391 = vunpack.c.h.b16 %v287
    %v2392 = vunpack.c.l.b16 %v288
    %v2393 = vunpack.c.h.b16 %v288
    %v2394 = vunpack.c.l.b16 %v289
    %v2395 = vunpack.c.h.b16 %v289
    %v2396 = vunpack.c.l.b16 %v290
    %v2397 = vunpack.c.h.b16 %v290
    %v2398 = vunpack.c.l.b16 %v291
    %v2399 = vunpack.c.h.b16 %v291
    %v2400 = vunpack.c.l.b16 %v292
    %v2401 = vunpack.c.h.b16 %v292
    %v2402 = vunpack.c.l.b16 %v293
    %v2403 = vunpack.c.h.b16 %v293
    %v2404 = vunpack.c.l.b16 %v294
    %v2405 = vunpack.c.h.b16 %v294
    %v2406 = vunpack.c.l.b16 %v295
    %v2407 = vunpack.c.h.b16 %v295
    %v2408 = vunpack.c.l.b16 %v296
    %v2409 = vunpack.c.h.b16 %v296
    %v2410 = vunpack.c.l.b16 %v297
    %v2411 = vunpack.c.h.b16 %v297
    %v2412 = vunpack.c.l.b16 %v298
    %v2413 = vunpack.c.h.b16 %v298
    %v2414 = vunpack.c.l.b16 %v299
    %v2415 = vunpack.c.h.b16 %v299
    %v2416 = vunpack.c.l.b16 %v300
    %v2417 = vunpack.c.h.b16 %v300
    %v2418 = vunpack.c.l.b16 %v301
    %v2419 = vunpack.c.h.b16 %v301
    %v2420 = vunpack.c.l.b16 %v302
    %v2421 = vunpack.c.h.b16 %v302
    %v2422 = vunpack.c.l.b16 %v303
    %v2423 = vunpack.c.h.b16 %v303
    %v2424 = vunpack.c.l.b16 %v304
    %v2425 = vunpack.c.h.b16 %v304
    %v2426 = vunpack.c.l.b16 %v305
    %v2427 = vunpack.c.h.b16 %v305
    %v2428 = vunpack.c.l.b16 %v306
    %v2429 = vunpack.c.h.b16 %v306
    %v2430 = vunpack.c.l.b16 %v307
    %v2431 = vunpack.c.h.b16 %v307
    %v2432 = vunpack.c.l.b16 %v308
    %v2433 = vunpack.c.h.b16 %v308
    %v2434 = vunpack.c.l.b16 %v309
    %v2435 = vunpack.c.h.b16 %v309
    %v2436 = vunpack.c.l.b16 %v310
    %v2437 = vunpack.c.h.b16 %v310
    %v2438 = vunpack.c.l.b16 %v311
    %v2439 = vunpack.c.h.b16 %v311
    %v2440 = vunpack.c.l.b16 %v312
    %v2441 = vunpack.c.h.b16 %v312
    %v2442 = vunpack.c.l.b16 %v313
    %v2443 = vunpack.c.h.b16 %v313
    %v2444 = vunpack.c.l.b16 %v314
    %v2445 = vunpack.c.h.b16 %v314
    %v2446 = vunpack.c.l.b16 %v315
    %v2447 = vunpack.c.h.b16 %v315
    %v2448 = vunpack.c.l.b16 %v316
    %v2449 = vunpack.c.h.b16 %v316
    %v2450 = vunpack.c.l.b16 %v317
    %v2451 = vunpack.c.h.b16 %v317
    %v2452 = vunpack.c.l.b16 %v318
    %v2453 = vunpack.c.h.b16 %v318
    %v2454 = vunpack.c.l.b16 %v319
    %v2455 = vunpack.c.h.b16 %v319
    %v2456 = vunpack.c.l.b16 %v320
    %v2457 = vunpack.c.h.b16 %v320
    %v2458 = vunpack.c.l.b16 %v321
    %v2459 = vunpack.c.h.b16 %v321
    %v2460 = vunpack.c.l.b16 %v322
    %v2461 = vunpack.c.h.b16 %v322
    %v2462 = vunpack.c.l.b16 %v323
    %v2463 = vunpack.c.h.b16 %v323
    %v2464 = vunpack.c.l.b16 %v324
    %v2465 = vunpack.c.h.b16 %v324
    %v2466 = vunpack.c.l.b16 %v325
    %v2467 = vunpack.c.h.b16 %v325
    %v2468 = vunpack.c.l.b16 %v326
    %v2469 = vunpack.c.h.b16 %v326
    %v2470 = vunpack.c.l.b16 %v327
    %v2471 = vunpack.c.h.b16 %v327
    %v2472 = vunpack.c.l.b16 %v328
    %v2473 = vunpack.c.h.b16 %v328
    %v2474 = vunpack.c.l.b16 %v329
    %v2475 = vunpack.c.h.b16 %v329
    %v2476 = vunpack.c.l.b16 %v330
    %v2477 = vunpack.c.h.b16 %v330
    %v2478 = vunpack.c.l.b16 %v331
    %v2479 = vunpack.c.h.b16 %v331
    %v2480 = vunpack.c.l.b16 %v332
    %v2481 = vunpack.c.h.b16 %v332
    %v2482 = vunpack.c.l.b16 %v333
    %v2483 = vunpack.c.h.b16 %v333
    %v2484 = vunpack.c.l.b16 %v334
    %v2485 = vunpack.c.h.b16 %v334
    %v2486 = vunpack.c.l.b16 %v335
    %v2487 = vunpack.c.h.b16 %v335
    %v2488 = vunpack.c.l.b16 %v336
    %v2489 = vunpack.c.h.b16 %v336
    %v2490 = vunpack.c.l.b16 %v337
    %v2491 = vunpack.c.h.b16 %v337
    %v2492 = vunpack.c.l.b16 %v338
    %v2493 = vunpack.c.h.b16 %v338
    %v2494 = vunpack.c.l.b16 %v339
    %v2495 = vunpack.c.h.b16 %v339
    %v2496 = vunpack.c.l.b16 %v340
    %v2497 = vunpack.c.h.b16 %v340
    %v2498 = vunpack.c.l.b16 %v341
    %v2499 = vunpack.c.h.b16 %v341
    %v2500 = vunpack.c.l.b16 %v342
    %v2501 = vunpack.c.h.b16 %v342
    %v2502 = vunpack.c.l.b16 %v343
    %v2503 = vunpack.c.h.b16 %v343
    %v2504 = vunpack.c.l.b16 %v344
    %v2505 = vunpack.c.h.b16 %v344
    %v2506 = vunpack.c.l.b16 %v345
    %v2507 = vunpack.c.h.b16 %v345
    %v2508 = vunpack.c.l.b16 %v346
    %v2509 = vunpack.c.h.b16 %v346
    %v2510 = vunpack.c.l.b16 %v347
    %v2511 = vunpack.c.h.b16 %v347
    %v2512 = vunpack.c.l.b16 %v348
    %v2513 = vunpack.c.h.b16 %v348
    %v2514 = vunpack.c.l.b16 %v349
    %v2515 = vunpack.c.h.b16 %v349
    %v2516 = vunpack.c.l.b16 %v350
    %v2517 = vunpack.c.h.b16 %v350
    %v2518 = vunpack.c.l.b16 %v351
    %v2519 = vunpack.c.h.b16 %v351
    %v2520 = vunpack.c.l.b16 %v352
    %v2521 = vunpack.c.h.b16 %v352
    %v2522 = vunpack.c.l.b16 %v353
    %v2523 = vunpack.c.h.b16 %v353
    %v2524 = vunpack.c.l.b16 %v354
    %v2525 = vunpack.c.h.b16 %v354
    %v2526 = vunpack.c.l.b16 %v355
    %v2527 = vunpack.c.h.b16 %v355
    %v2528 = vunpack.c.l.b16 %v356
    %v2529 = vunpack.c.h.b16 %v356
    %v2530 = vunpack.c.l.b16 %v357
    %v2531 = vunpack.c.h.b16 %v357
    %v2532 = vunpack.c.l.b16 %v358
    %v2533 = vunpack.c.h.b16 %v358
    %v2534 = vunpack.c.l.b16 %v359
    %v2535 = vunpack.c.h.b16 %v359
    %v2536 = vunpack.c.l.b16 %v360
    %v2537 = vunpack.c.h.b16 %v360
    %v2538 = vunpack.c.l.b16 %v361
    %v2539 = vunpack.c.h.b16 %v361
    %v2540 = vunpack.c.l.b16 %v362
    %v2541 = vunpack.c.h.b16 %v362
    %v2542 = vunpack.c.l.b16 %v363
    %v2543 = vunpack.c.h.b16 %v363
    %v2544 = vunpack.c.l.b16 %v364
    %v2545 = vunpack.c.h.b16 %v364
    %v2546 = vunpack.c.l.b16 %v365
    %v2547 = vunpack.c.h.b16 %v365
    %v2548 = vunpack.c.l.b16 %v366
    %v2549 = vunpack.c.h.b16 %v366
    %v2550 = vunpack.c.l.b16 %v367
    %v2551 = vunpack.c.h.b16 %v367
    %v2552 = vunpack.c.l.b16 %v368
    %v2553 = vunpack.c.h.b16 %v368
    %v2554 = vunpack.c.l.b16 %v369
    %v2555 = vunpack.c.h.b16 %v369
    %v2556 = vunpack.c.l.b16 %v370
    %v2557 = vunpack.c.h.b16 %v370
    %v2558 = vunpack.c.l.b16 %v371
    %v2559 = vunpack.c.h.b16 %v371
    %v2560 = vunpack.c.l.b16 %v372
    %v2561 = vunpack.c.h.b16 %v372
    %v2562 = vunpack.c.l.b16 %v373
    %v2563 = vunpack.c.h.b16 %v373
    %v2564 = vunpack.c.l.b16 %v374
    %v2565 = vunpack.c.h.b16 %v374
    %v2566 = vunpack.c.l.b16 %v375
    %v2567 = vunpack.c.h.b16 %v375
    %v2568 = vunpack.c.l.b16 %v376
    %v2569 = vunpack.c.h.b16 %v376
    %v2570 = vunpack.c.l.b16 %v377
    %v2571 = vunpack.c.h.b16 %v377
    %v2572 = vunpack.c.l.b16 %v378
    %v2573 = vunpack.c.h.b16 %v378
    %v2574 = vunpack.c.l.b16 %v379
    %v2575 = vunpack.c.h.b16 %v379
    %v2576 = vunpack.c.l.b16 %v380
    %v2577 = vunpack.c.h.b16 %v380
    %v2578 = vunpack.c.l.b16 %v381
    %v2579 = vunpack.c.h.b16 %v381
    %v2580 = vunpack.c.l.b16 %v382
    %v2581 = vunpack.c.h.b16 %v382
    %v2582 = vunpack.c.l.b16 %v383
    %v2583 = vunpack.c.h.b16 %v383
    %v2584 = vunpack.c.l.b16 %v384
    %v2585 = vunpack.c.h.b16 %v384
    %v2586 = vunpack.c.l.b16 %v385
    %v2587 = vunpack.c.h.b16 %v385
    %v2588 = vunpack.c.l.b16 %v386
    %v2589 = vunpack.c.h.b16 %v386
    %v2590 = vunpack.c.l.b16 %v387
    %v2591 = vunpack.c.h.b16 %v387
    %v2592 = vunpack.c.l.b16 %v388
    %v2593 = vunpack.c.h.b16 %v388
    %v2594 = vunpack.c.l.b16 %v389
    %v2595 = vunpack.c.h.b16 %v389
    %v2596 = vunpack.c.l.b16 %v390
    %v2597 = vunpack.c.h.b16 %v390
    %v2598 = vunpack.c.l.b16 %v391
    %v2599 = vunpack.c.h.b16 %v391
    %v2600 = vunpack.c.l.b16 %v392
    %v2601 = vunpack.c.h.b16 %v392
    %v2602 = vunpack.c.l.b16 %v393
    %v2603 = vunpack.c.h.b16 %v393
    %v2604 = vunpack.c.l.b16 %v394
    %v2605 = vunpack.c.h.b16 %v394
    %v2606 = vunpack.c.l.b16 %v395
    %v2607 = vunpack.c.h.b16 %v395
    %v2608 = vunpack.c.l.b16 %v396
    %v2609 = vunpack.c.h.b16 %v396
    %v2610 = vunpack.c.l.b16 %v397
    %v2611 = vunpack.c.h.b16 %v397
    %v2612 = vunpack.c.l.b16 %v398
    %v2613 = vunpack.c.h.b16 %v398
    %v2614 = vunpack.c.l.b16 %v399
    %v2615 = vunpack.c.h.b16 %v399
    %v2616 = vunpack.c.l.b16 %v400
    %v2617 = vunpack.c.h.b16 %v400
    %v2618 = vunpack.c.l.b16 %v401
    %v2619 = vunpack.c.h.b16 %v401
    %v2620 = vunpack.c.l.b16 %v402
    %v2621 = vunpack.c.h.b16 %v402
    %v2622 = vunpack.c.l.b16 %v403
    %v2623 = vunpack.c.h.b16 %v403
    %v2624 = vunpack.c.l.b16 %v404
    %v2625 = vunpack.c.h.b16 %v404
    %v2626 = vunpack.c.l.b16 %v405
    %v2627 = vunpack.c.h.b16 %v405
    %v2628 = vunpack.c.l.b16 %v406
    %v2629 = vunpack.c.h.b16 %v406
    %v2630 = vunpack.c.l.b16 %v407
    %v2631 = vunpack.c.h.b16 %v407
    %v2632 = vunpack.c.l.b16 %v408
    %v2633 = vunpack.c.h.b16 %v408
    %v2634 = vunpack.c.l.b16 %v409
    %v2635 = vunpack.c.h.b16 %v409
    %v2636 = vunpack.c.l.b16 %v410
    %v2637 = vunpack.c.h.b16 %v410
    %v2638 = vunpack.c.l.b16 %v411
    %v2639 = vunpack.c.h.b16 %v411
    %v2640 = vunpack.c.l.b16 %v412
    %v2641 = vunpack.c.h.b16 %v412
    %v2642 = vunpack.c.l.b16 %v413
    %v2643 = vunpack.c.h.b16 %v413
    %v2644 = vunpack.c.l.b16 %v414
    %v2645 = vunpack.c.h.b16 %v414
    %v2646 = vunpack.c.l.b16 %v415
    %v2647 = vunpack.c.h.b16 %v415
    %v2648 = vunpack.c.l.b16 %v416
    %v2649 = vunpack.c.h.b16 %v416
    %v2650 = vunpack.c.l.b16 %v417
    %v2651 = vunpack.c.h.b16 %v417
    %v2652 = vunpack.c.l.b16 %v418
    %v2653 = vunpack.c.h.b16 %v418
    %v2654 = vunpack.c.l.b16 %v419
    %v2655 = vunpack.c.h.b16 %v419
    %v2656 = vunpack.c.l.b16 %v420
    %v2657 = vunpack.c.h.b16 %v420
    %v2658 = vunpack.c.l.b16 %v421
    %v2659 = vunpack.c.h.b16 %v421
    %v2660 = vunpack.c.l.b16 %v422
    %v2661 = vunpack.c.h.b16 %v422
    %v2662 = vunpack.c.l.b16 %v423
    %v2663 = vunpack.c.h.b16 %v423
    %v2664 = vunpack.c.l.b16 %v424
    %v2665 = vunpack.c.h.b16 %v424
    %v2666 = vunpack.c.l.b16 %v425
    %v2667 = vunpack.c.h.b16 %v425
    %v2668 = vunpack.c.l.b16 %v426
    %v2669 = vunpack.c.h.b16 %v426
    %v2670 = vunpack.c.l.b16 %v427
    %v2671 = vunpack.c.h.b16 %v427
    %v2672 = vunpack.c.l.b16 %v428
    %v2673 = vunpack.c.h.b16 %v428
    %v2674 = vunpack.c.l.b16 %v429
    %v2675 = vunpack.c.h.b16 %v429
    %v2676 = vunpack.c.l.b16 %v430
    %v2677 = vunpack.c.h.b16 %v430
    %v2678 = vunpack.c.l.b16 %v431
    %v2679 = vunpack.c.h.b16 %v431
    %v2680 = vunpack.c.l.b16 %v432
    %v2681 = vunpack.c.h.b16 %v432
    %v2682 = vunpack.c.l.b16 %v433
    %v2683 = vunpack.c.h.b16 %v433
    %v2684 = vunpack.c.l.b16 %v434
    %v2685 = vunpack.c.h.b16 %v434
    %v2686 = vunpack.c.l.b16 %v435
    %v2687 = vunpack.c.h.b16 %v435
    %v2688 = vunpack.c.l.b16 %v436
    %v2689 = vunpack.c.h.b16 %v436
    %v2690 = vunpack.c.l.b16 %v437
    %v2691 = vunpack.c.h.b16 %v437
    %v2692 = vunpack.c.l.b16 %v438
    %v2693 = vunpack.c.h.b16 %v438
    %v2694 = vunpack.c.l.b16 %v439
    %v2695 = vunpack.c.h.b16 %v439
    %v2696 = vunpack.c.l.b16 %v440
    %v2697 = vunpack.c.h.b16 %v440
    %v2698 = vunpack.c.l.b16 %v441
    %v2699 = vunpack.c.h.b16 %v441
    %v2700 = vunpack.c.l.b16 %v442
    %v2701 = vunpack.c.h.b16 %v442
    %v2702 = vunpack.c.l.b16 %v443
    %v2703 = vunpack.c.h.b16 %v443
    %v2704 = vunpack.c.l.b16 %v444
    %v2705 = vunpack.c.h.b16 %v444
    %v2706 = vunpack.c.l.b16 %v445
    %v2707 = vunpack.c.h.b16 %v445
    %v2708 = vunpack.c.l.b16 %v446
    %v2709 = vunpack.c.h.b16 %v446
    %v2710 = vunpack.c.l.b16 %v447
    %v2711 = vunpack.c.h.b16 %v447
    %v2712 = vunpack.c.l.b16 %v448
    %v2713 = vunpack.c.h.b16 %v448
    %v2714 = vunpack.c.l.b16 %v449
    %v2715 = vunpack.c.h.b16 %v449
    %v2716 = vunpack.c.l.b16 %v450
    %v2717 = vunpack.c.h.b16 %v450
    %v2718 = vunpack.c.l.b16 %v451
    %v2719 = vunpack.c.h.b16 %v451
    %v2720 = vunpack.c.l.b16 %v452
    %v2721 = vunpack.c.h.b16 %v452
    %v2722 = vunpack.c.l.b16 %v453
    %v2723 = vunpack.c.h.b16 %v453
    %v2724 = vunpack.c.l.b16 %v454
    %v2725 = vunpack.c.h.b16 %v454
    %v2726 = vunpack.c.l.b16 %v455
    %v2727 = vunpack.c.h.b16 %v455
    %v2728 = vunpack.c.l.b16 %v456
    %v2729 = vunpack.c.h.b16 %v456
    %v2730 = vunpack.c.l.b16 %v457
    %v2731 = vunpack.c.h.b16 %v457
    %v2732 = vunpack.c.l.b16 %v458
    %v2733 = vunpack.c.h.b16 %v458
    %v2734 = vunpack.c.l.b16 %v459
    %v2735 = vunpack.c.h.b16 %v459
    %v2736 = vunpack.c.l.b16 %v460
    %v2737 = vunpack.c.h.b16 %v460
    %v2738 = vunpack.c.l.b16 %v461
    %v2739 = vunpack.c.h.b16 %v461
    %v2740 = vunpack.c.l.b16 %v462
    %v2741 = vunpack.c.h.b16 %v462
    %v2742 = vunpack.c.l.b16 %v463
    %v2743 = vunpack.c.h.b16 %v463
    %v2744 = vunpack.c.l.b16 %v464
    %v2745 = vunpack.c.h.b16 %v464
    %v2746 = vunpack.c.l.b16 %v465
    %v2747 = vunpack.c.h.b16 %v465
    %v2748 = vunpack.c.l.b16 %v466
    %v2749 = vunpack.c.h.b16 %v466
    %v2750 = vunpack.c.l.b16 %v467
    %v2751 = vunpack.c.h.b16 %v467
    %v2752 = vunpack.c.l.b16 %v468
    %v2753 = vunpack.c.h.b16 %v468
    %v2754 = vunpack.c.l.b16 %v469
    %v2755 = vunpack.c.h.b16 %v469
    %v2756 = vunpack.c.l.b16 %v470
    %v2757 = vunpack.c.h.b16 %v470
    %v2758 = vunpack.c.l.b16 %v471
    %v2759 = vunpack.c.h.b16 %v471
    %v2760 = vunpack.c.l.b16 %v472
    %v2761 = vunpack.c.h.b16 %v472
    %v2762 = vunpack.c.l.b16 %v473
    %v2763 = vunpack.c.h.b16 %v473
    %v2764 = vunpack.c.l.b16 %v474
    %v2765 = vunpack.c.h.b16 %v474
    %v2766 = vunpack.c.l.b16 %v475
    %v2767 = vunpack.c.h.b16 %v475
    %v2768 = vunpack.c.l.b16 %v476
    %v2769 = vunpack.c.h.b16 %v476
    %v2770 = vunpack.c.l.b16 %v477
    %v2771 = vunpack.c.h.b16 %v477
    %v2772 = vunpack.c.l.b16 %v478
    %v2773 = vunpack.c.h.b16 %v478
    %v2774 = vunpack.c.l.b16 %v479
    %v2775 = vunpack.c.h.b16 %v479
    %v2776 = vunpack.c.l.b16 %v480
    %v2777 = vunpack.c.h.b16 %v480
    %v2778 = vpack.c.b16 %v2270, %v2266
    %v2779 = vpack.c.b16 %v2271, %v2267
    %v2780 = vpack.c.b16 %v2272, %v2268
    %v2781 = vpack.c.b16 %v2273, %v2269
    %v2782 = vpack.c.b16 %v2278, %v2274
    %v2783 = vpack.c.b16 %v2279, %v2275
    %v2784 = vpack.c.b16 %v2280, %v2276
    %v2785 = vpack.c.b16 %v2281, %v2277
    %v2786 = vpack.c.b16 %v2286, %v2282
    %v2787 = vpack.c.b16 %v2287, %v2283
    %v2788 = vpack.c.b16 %v2288, %v2284
    %v2789 = vpack.c.b16 %v2289, %v2285
    %v2790 = vpack.c.b16 %v2294, %v2290
    %v2791 = vpack.c.b16 %v2295, %v2291
    %v2792 = vpack.c.b16 %v2296, %v2292
    %v2793 = vpack.c.b16 %v2297, %v2293
    %v2794 = vpack.c.b16 %v2302, %v2298
    %v2795 = vpack.c.b16 %v2303, %v2299
    %v2796 = vpack.c.b16 %v2304, %v2300
    %v2797 = vpack.c.b16 %v2305, %v2301
    %v2798 = vpack.c.b16 %v2310, %v2306
    %v2799 = vpack.c.b16 %v2311, %v2307
    %v2800 = vpack.c.b16 %v2312, %v2308
    %v2801 = vpack.c.b16 %v2313, %v2309
    %v2802 = vpack.c.b16 %v2318, %v2314
    %v2803 = vpack.c.b16 %v2319, %v2315
    %v2804 = vpack.c.b16 %v2320, %v2316
    %v2805 = vpack.c.b16 %v2321, %v2317
    %v2806 = vpack.c.b16 %v2326, %v2322
    %v2807 = vpack.c.b16 %v2327, %v2323
    %v2808 = vpack.c.b16 %v2328, %v2324
    %v2809 = vpack.c.b16 %v2329, %v2325
    %v2810 = vpack.c.b16 %v2334, %v2330
    %v2811 = vpack.c.b16 %v2335, %v2331
    %v2812 = vpack.c.b16 %v2336, %v2332
    %v2813 = vpack.c.b16 %v2337, %v2333
    %v2814 = vpack.c.b16 %v2342, %v2338
    %v2815 = vpack.c.b16 %v2343, %v2339
    %v2816 = vpack.c.b16 %v2344, %v2340
    %v2817 = vpack.c.b16 %v2345, %v2341
    %v2818 = vpack.c.b16 %v2350, %v2346
    %v2819 = vpack.c.b16 %v2351, %v2347
    %v2820 = vpack.c.b16 %v2352, %v2348
    %v2821 = vpack.c.b16 %v2353, %v2349
    %v2822 = vpack.c.b16 %v2358, %v2354
    %v2823 = vpack.c.b16 %v2359, %v2355
    %v2824 = vpack.c.b16 %v2360, %v2356
    %v2825 = vpack.c.b16 %v2361, %v2357
    %v2826 = vpack.c.b16 %v2366, %v2362
    %v2827 = vpack.c.b16 %v2367, %v2363
    %v2828 = vpack.c.b16 %v2368, %v2364
    %v2829 = vpack.c.b16 %v2369, %v2365
    %v2830 = vpack.c.b16 %v2374, %v2370
    %v2831 = vpack.c.b16 %v2375, %v2371
    %v2832 = vpack.c.b16 %v2376, %v2372
    %v2833 = vpack.c.b16 %v2377, %v2373
    %v2834 = vpack.c.b16 %v2382, %v2378
    %v2835 = vpack.c.b16 %v2383, %v2379
    %v2836 = vpack.c.b16 %v2384, %v2380
    %v2837 = vpack.c.b16 %v2385, %v2381
    %v2838 = vpack.c.b16 %v2390, %v2386
    %v2839 = vpack.c.b16 %v2391, %v2387
    %v2840 = vpack.c.b16 %v2392, %v2388
    %v2841 = vpack.c.b16 %v2393, %v2389
    %v2842 = vpack.c.b16 %v2398, %v2394
    %v2843 = vpack.c.b16 %v2399, %v2395
    %v2844 = vpack.c.b16 %v2400, %v2396
    %v2845 = vpack.c.b16 %v2401, %v2397
    %v2846 = vpack.c.b16 %v2406, %v2402
    %v2847 = vpack.c.b16 %v2407, %v2403
    %v2848 = vpack.c.b16 %v2408, %v2404
    %v2849 = vpack.c.b16 %v2409, %v2405
    %v2850 = vpack.c.b16 %v2414, %v2410
    %v2851 = vpack.c.b16 %v2415, %v2411
    %v2852 = vpack.c.b16 %v2416, %v2412
    %v2853 = vpack.c.b16 %v2417, %v2413
    %v2854 = vpack.c.b16 %v2422, %v2418
    %v2855 = vpack.c.b16 %v2423, %v2419
    %v2856 = vpack.c.b16 %v2424, %v2420
    %v2857 = vpack.c.b16 %v2425, %v2421
    %v2858 = vpack.c.b16 %v2430, %v2426
    %v2859 = vpack.c.b16 %v2431, %v2427
    %v2860 = vpack.c.b16 %v2432, %v2428
    %v2861 = vpack.c.b16 %v2433, %v2429
    %v2862 = vpack.c.b16 %v2438, %v2434
    %v2863 = vpack.c.b16 %v2439, %v2435
    %v2864 = vpack.c.b16 %v2440, %v2436
    %v2865 = vpack.c.b16 %v2441, %v2437
    %v2866 = vpack.c.b16 %v2446, %v2442
    %v2867 = vpack.c.b16 %v2447, %v2443
    %v2868 = vpack.c.b16 %v2448, %v2444
    %v2869 = vpack.c.b16 %v2449, %v2445
    %v2870 = vpack.c.b16 %v2454, %v2450
    %v2871 = vpack.c.b16 %v2455, %v2451
    %v2872 = vpack.c.b16 %v2456, %v2452
    %v2873 = vpack.c.b16 %v2457, %v2453
    %v2874 = vpack.c.b16 %v2462, %v2458
    %v2875 = vpack.c.b16 %v2463, %v2459
    %v2876 = vpack.c.b16 %v2464, %v2460
    %v2877 = vpack.c.b16 %v2465, %v2461
    %v2878 = vpack.c.b16 %v2470, %v2466
    %v2879 = vpack.c.b16 %v2471, %v2467
    %v2880 = vpack.c.b16 %v2472, %v2468
    %v2881 = vpack.c.b16 %v2473, %v2469
    %v2882 = vpack.c.b16 %v2478, %v2474
    %v2883 = vpack.c.b16 %v2479, %v2475
    %v2884 = vpack.c.b16 %v2480, %v2476
    %v2885 = vpack.c.b16 %v2481, %v2477
    %v2886 = vpack.c.b16 %v2486, %v2482
    %v2887 = vpack.c.b16 %v2487, %v2483
    %v2888 = vpack.c.b16 %v2488, %v2484
    %v2889 = vpack.c.b16 %v2489, %v2485
    %v2890 = vpack.c.b16 %v2494, %v2490
    %v2891 = vpack.c.b16 %v2495, %v2491
    %v2892 = vpack.c.b16 %v2496, %v2492
    %v2893 = vpack.c.b16 %v2497, %v2493
    %v2894 = vpack.c.b16 %v2502, %v2498
    %v2895 = vpack.c.b16 %v2503, %v2499
    %v2896 = vpack.c.b16 %v2504, %v2500
    %v2897 = vpack.c.b16 %v2505, %v2501
    %v2898 = vpack.c.b16 %v2510, %v2506
    %v2899 = vpack.c.b16 %v2511, %v2507
    %v2900 = vpack.c.b16 %v2512, %v2508
    %v2901 = vpack.c.b16 %v2513, %v2509
    %v2902 = vpack.c.b16 %v2518, %v2514
    %v2903 = vpack.c.b16 %v2519, %v2515
    %v2904 = vpack.c.b16 %v2520, %v2516
    %v2905 = vpack.c.b16 %v2521, %v2517
    %v2906 = vpack.c.b16 %v2526, %v2522
    %v2907 = vpack.c.b16 %v2527, %v2523
    %v2908 = vpack.c.b16 %v2528, %v2524
    %v2909 = vpack.c.b16 %v2529, %v2525
    %v2910 = vpack.c.b16 %v2534, %v2530
    %v2911 = vpack.c.b16 %v2535, %v2531
    %v2912 = vpack.c.b16 %v2536, %v2532
    %v2913 = vpack.c.b16 %v2537, %v2533
    %v2914 = vpack.c.b16 %v2542, %v2538
    %v2915 = vpack.c.b16 %v2543, %v2539
    %v2916 = vpack.c.b16 %v2544, %v2540
    %v2917 = vpack.c.b16 %v2545, %v2541
    %v2918 = vpack.c.b16 %v2550, %v2546
    %v2919 = vpack.c.b16 %v2551, %v2547
    %v2920 = vpack.c.b16 %v2552, %v2548
    %v2921 = vpack.c.b16 %v2553, %v2549
    %v2922 = vpack.c.b16 %v2558, %v2554
    %v2923 = vpack.c.b16 %v2559, %v2555
    %v2924 = vpack.c.b16 %v2560, %v2556
    %v2925 = vpack.c.b16 %v2561, %v2557
    %v2926 = vpack.c.b16 %v2566, %v2562
    %v2927 = vpack.c.b16 %v2567, %v2563
    %v2928 = vpack.c.b16 %v2568, %v2564
    %v2929 = vpack.c.b16 %v2569, %v2565
    %v2930 = vpack.c.b16 %v2574, %v2570
    %v2931 = vpack.c.b16 %v2575, %v2571
    %v2932 = vpack.c.b16 %v2576, %v2572
    %v2933 = vpack.c.b16 %v2577, %v2573
    %v2934 = vpack.c.b16 %v2582, %v2578
    %v2935 = vpack.c.b16 %v2583, %v2579
    %v2936 = vpack.c.b16 %v2584, %v2580
    %v2937 = vpack.c.b16 %v2585, %v2581
    %v2938 = vpack.c.b16 %v2590, %v2586
    %v2939 = vpack.c.b16 %v2591, %v2587
    %v2940 = vpack.c.b16 %v2592, %v2588
    %v2941 = vpack.c.b16 %v2593, %v2589
    %v2942 = vpack.c.b16 %v2598, %v2594
    %v2943 = vpack.c.b16 %v2599, %v2595
    %v2944 = vpack.c.b16 %v2600, %v2596
    %v2945 = vpack.c.b16 %v2601, %v2597
    %v2946 = vpack.c.b16 %v2606, %v2602
    %v2947 = vpack.c.b16 %v2607, %v2603
    %v2948 = vpack.c.b16 %v2608, %v2604
    %v2949 = vpack.c.b16 %v2609, %v2605
    %v2950 = vpack.c.b16 %v2614, %v2610
    %v2951 = vpack.c.b16 %v2615, %v2611
    %v2952 = vpack.c.b16 %v2616, %v2612
    %v2953 = vpack.c.b16 %v2617, %v2613
    %v2954 = vpack.c.b16 %v2622, %v2618
    %v2955 = vpack.c.b16 %v2623, %v2619
    %v2956 = vpack.c.b16 %v2624, %v2620
    %v2957 = vpack.c.b16 %v2625, %v2621
    %v2958 = vpack.c.b16 %v2630, %v2626
    %v2959 = vpack.c.b16 %v2631, %v2627
    %v2960 = vpack.c.b16 %v2632, %v2628
    %v2961 = vpack.c.b16 %v2633, %v2629
    %v2962 = vpack.c.b16 %v2638, %v2634
    %v2963 = vpack.c.b16 %v2639, %v2635
    %v2964 = vpack.c.b16 %v2640, %v2636
    %v2965 = vpack.c.b16 %v2641, %v2637
    %v2966 = vpack.c.b16 %v2646, %v2642
    %v2967 = vpack.c.b16 %v2647, %v2643
    %v2968 = vpack.c.b16 %v2648, %v2644
    %v2969 = vpack.c.b16 %v2649, %v2645
    %v2970 = vpack.c.b16 %v2654, %v2650
    %v2971 = vpack.c.b16 %v2655, %v2651
    %v2972 = vpack.c.b16 %v2656, %v2652
    %v2973 = vpack.c.b16 %v2657, %v2653
    %v2974 = vpack.c.b16 %v2662, %v2658
    %v2975 = vpack.c.b16 %v2663, %v2659
    %v2976 = vpack.c.b16 %v2664, %v2660
    %v2977 = vpack.c.b16 %v2665, %v2661
    %v2978 = vpack.c.b16 %v2670, %v2666
    %v2979 = vpack.c.b16 %v2671, %v2667
    %v2980 = vpack.c.b16 %v2672, %v2668
    %v2981 = vpack.c.b16 %v2673, %v2669
    %v2982 = vpack.c.b16 %v2678, %v2674
    %v2983 = vpack.c.b16 %v2679, %v2675
    %v2984 = vpack.c.b16 %v2680, %v2676
    %v2985 = vpack.c.b16 %v2681, %v2677
    %v2986 = vpack.c.b16 %v2686, %v2682
    %v2987 = vpack.c.b16 %v2687, %v2683
    %v2988 = vpack.c.b16 %v2688, %v2684
    %v2989 = vpack.c.b16 %v2689, %v2685
    %v2990 = vpack.c.b16 %v2694, %v2690
    %v2991 = vpack.c.b16 %v2695, %v2691
    %v2992 = vpack.c.b16 %v2696, %v2692
    %v2993 = vpack.c.b16 %v2697, %v2693
    %v2994 = vpack.c.b16 %v2702, %v2698
    %v2995 = vpack.c.b16 %v2703, %v2699
    %v2996 = vpack.c.b16 %v2704, %v2700
    %v2997 = vpack.c.b16 %v2705, %v2701
    %v2998 = vpack.c.b16 %v2710, %v2706
    %v2999 = vpack.c.b16 %v2711, %v2707
    %v3000 = vpack.c.b16 %v2712, %v2708
    %v3001 = vpack.c.b16 %v2713, %v2709
    %v3002 = vpack.c.b16 %v2718, %v2714
    %v3003 = vpack.c.b16 %v2719, %v2715
    %v3004 = vpack.c.b16 %v2720, %v2716
    %v3005 = vpack.c.b16 %v2721, %v2717
    %v3006 = vpack.c.b16 %v2726, %v2722
    %v3007 = vpack.c.b16 %v2727, %v2723
    %v3008 = vpack.c.b16 %v2728, %v2724
    %v3009 = vpack.c.b16 %v2729, %v2725
    %v3010 = vpack.c.b16 %v2734, %v2730
    %v3011 = vpack.c.b16 %v2735, %v2731
    %v3012 = vpack.c.b16 %v2736, %v2732
    %v3013 = vpack.c.b16 %v2737, %v2733
    %v3014 = vpack.c.b16 %v2742, %v2738
    %v3015 = vpack.c.b16 %v2743, %v2739
    %v3016 = vpack.c.b16 %v2744, %v2740
    %v3017 = vpack.c.b16 %v2745, %v2741
    %v3018 = vpack.c.b16 %v2750, %v2746
    %v3019 = vpack.c.b16 %v2751, %v2747
    %v3020 = vpack.c.b16 %v2752, %v2748
    %v3021 = vpack.c.b16 %v2753, %v2749
    %v3022 = vpack.c.b16 %v2758, %v2754
    %v3023 = vpack.c.b16 %v2759, %v2755
    %v3024 = vpack.c.b16 %v2760, %v2756
    %v3025 = vpack.c.b16 %v2761, %v2757
    %v3026 = vpack.c.b16 %v2766, %v2762
    %v3027 = vpack.c.b16 %v2767, %v2763
    %v3028 = vpack.c.b16 %v2768, %v2764
    %v3029 = vpack.c.b16 %v2769, %v2765
    %v3030 = vpack.c.b16 %v2774, %v2770
    %v3031 = vpack.c.b16 %v2775, %v2771
    %v3032 = vpack.c.b16 %v2776, %v2772
    %v3033 = vpack.c.b16 %v2777, %v2773
    %3290 = vmatprep.subr.bf16.mxu0 %v2779
    %3291 = vmatpush1.bf16.msra.mxu0 %v2778
    %3292 = vmatprep.subr.bf16.mxu0 %v2783
    %3293 = vmatpush1.bf16.msra.mxu0 %v2782
    %3294 = vmatprep.subr.bf16.mxu0 %v2787
    %3295 = vmatpush1.bf16.msra.mxu0 %v2786
    %3296 = vmatprep.subr.bf16.mxu0 %v2791
    %3297 = vmatpush1.bf16.msra.mxu0 %v2790
    %3298 = vmatprep.subr.bf16.mxu0 %v2795
    %3299 = vmatpush1.bf16.msra.mxu0 %v2794
    %3300 = vmatprep.subr.bf16.mxu0 %v2799
    %3301 = vmatpush1.bf16.msra.mxu0 %v2798
    %3302 = vmatprep.subr.bf16.mxu0 %v2803
    %3303 = vmatpush1.bf16.msra.mxu0 %v2802
    %3304 = vmatprep.subr.bf16.mxu0 %v2807
    %3305 = vmatpush1.bf16.msra.mxu0 %v2806
    %3306 = vmatprep.subr.bf16.mxu0 %v2811
    %3307 = vmatpush1.bf16.msra.mxu0 %v2810
    %3308 = vmatprep.subr.bf16.mxu0 %v2815
    %3309 = vmatpush1.bf16.msra.mxu0 %v2814
    %3310 = vmatprep.subr.bf16.mxu0 %v2819
    %3311 = vmatpush1.bf16.msra.mxu0 %v2818
    %3312 = vmatprep.subr.bf16.mxu0 %v2823
    %3313 = vmatpush1.bf16.msra.mxu0 %v2822
    %3314 = vmatprep.subr.bf16.mxu0 %v2827
    %3315 = vmatpush1.bf16.msra.mxu0 %v2826
    %3316 = vmatprep.subr.bf16.mxu0 %v2831
    %3317 = vmatpush1.bf16.msra.mxu0 %v2830
    %3318 = vmatprep.subr.bf16.mxu0 %v2835
    %3319 = vmatpush1.bf16.msra.mxu0 %v2834
    %3320 = vmatprep.subr.bf16.mxu0 %v2839
    %3321 = vmatpush1.bf16.msra.mxu0 %v2838
    %3322 = vmatprep.mubr.bf16.mxu0 %v1980
    %3323 = vmatmul.mubr.bf16.gmra.mrb[0].mxu0 %v1979
    %v3324 = vpop.f32.mrb[0].mxu0
    %v3325 = vadd.f32 %v1993, %v3324
    %v3326 = vpop.f32.mrb[0].mxu0
    %v3327 = vadd.f32 %v1997, %v3326
    %v3328 = vpop.f32.mrb[0].mxu0
    %v3329 = vpop.f32.mrb[0].mxu0
    %3330 = vdwg.mxu0
    %3331 = vmatprep.subr.bf16.mxu0 %v2843
    %3332 = vmatpush1.bf16.msra.mxu0 %v2842
    %3333 = vmatprep.subr.bf16.mxu0 %v2847
    %3334 = vmatpush1.bf16.msra.mxu0 %v2846
    %3335 = vmatprep.subr.bf16.mxu0 %v2851
    %3336 = vmatpush1.bf16.msra.mxu0 %v2850
    %3337 = vmatprep.subr.bf16.mxu0 %v2855
    %3338 = vmatpush1.bf16.msra.mxu0 %v2854
    %3339 = vmatprep.subr.bf16.mxu0 %v2859
    %3340 = vmatpush1.bf16.msra.mxu0 %v2858
    %3341 = vmatprep.subr.bf16.mxu0 %v2863
    %3342 = vmatpush1.bf16.msra.mxu0 %v2862
    %3343 = vmatprep.subr.bf16.mxu0 %v2867
    %3344 = vmatpush1.bf16.msra.mxu0 %v2866
    %3345 = vmatprep.subr.bf16.mxu0 %v2871
    %3346 = vmatpush1.bf16.msra.mxu0 %v2870
    %3347 = vmatprep.subr.bf16.mxu0 %v2875
    %3348 = vmatpush1.bf16.msra.mxu0 %v2874
    %3349 = vmatprep.subr.bf16.mxu0 %v2879
    %3350 = vmatpush1.bf16.msra.mxu0 %v2878
    %3351 = vmatprep.subr.bf16.mxu0 %v2883
    %3352 = vmatpush1.bf16.msra.mxu0 %v2882
    %3353 = vmatprep.subr.bf16.mxu0 %v2887
    %3354 = vmatpush1.bf16.msra.mxu0 %v2886
    %3355 = vmatprep.subr.bf16.mxu0 %v2891
    %3356 = vmatpush1.bf16.msra.mxu0 %v2890
    %3357 = vmatprep.subr.bf16.mxu0 %v2895
    %3358 = vmatpush1.bf16.msra.mxu0 %v2894
    %3359 = vmatprep.subr.bf16.mxu0 %v2899
    %3360 = vmatpush1.bf16.msra.mxu0 %v2898
    %3361 = vmatprep.subr.bf16.mxu0 %v2903
    %3362 = vmatpush1.bf16.msra.mxu0 %v2902
    %3363 = vmatprep.mubr.bf16.mxu0 %v1982
    %3364 = vmatmul.mubr.bf16.gmra.mrb[0].mxu0 %v1981
    %v3365 = vpop.f32.mrb[0].mxu0
    %v3366 = vadd.f32 %v3325, %v3365
    %v3367 = vpop.f32.mrb[0].mxu0
    %v3368 = vadd.f32 %v3327, %v3367
    %v3369 = vpop.f32.mrb[0].mxu0
    %v3370 = vpop.f32.mrb[0].mxu0
    %3371 = vdwg.mxu0
    %3372 = vmatprep.subr.bf16.mxu0 %v2907
    %3373 = vmatpush1.bf16.msra.mxu0 %v2906
    %3374 = vmatprep.subr.bf16.mxu0 %v2911
    %3375 = vmatpush1.bf16.msra.mxu0 %v2910
    %3376 = vmatprep.subr.bf16.mxu0 %v2915
    %3377 = vmatpush1.bf16.msra.mxu0 %v2914
    %3378 = vmatprep.subr.bf16.mxu0 %v2919
    %3379 = vmatpush1.bf16.msra.mxu0 %v2918
    %3380 = vmatprep.subr.bf16.mxu0 %v2923
    %3381 = vmatpush1.bf16.msra.mxu0 %v2922
    %3382 = vmatprep.subr.bf16.mxu0 %v2927
    %3383 = vmatpush1.bf16.msra.mxu0 %v2926
    %3384 = vmatprep.subr.bf16.mxu0 %v2931
    %3385 = vmatpush1.bf16.msra.mxu0 %v2930
    %3386 = vmatprep.subr.bf16.mxu0 %v2935
    %3387 = vmatpush1.bf16.msra.mxu0 %v2934
    %3388 = vmatprep.subr.bf16.mxu0 %v2939
    %3389 = vmatpush1.bf16.msra.mxu0 %v2938
    %3390 = vmatprep.subr.bf16.mxu0 %v2943
    %3391 = vmatpush1.bf16.msra.mxu0 %v2942
    %3392 = vmatprep.subr.bf16.mxu0 %v2947
    %3393 = vmatpush1.bf16.msra.mxu0 %v2946
    %3394 = vmatprep.subr.bf16.mxu0 %v2951
    %3395 = vmatpush1.bf16.msra.mxu0 %v2950
    %3396 = vmatprep.subr.bf16.mxu0 %v2955
    %3397 = vmatpush1.bf16.msra.mxu0 %v2954
    %3398 = vmatprep.subr.bf16.mxu0 %v2959
    %3399 = vmatpush1.bf16.msra.mxu0 %v2958
    %3400 = vmatprep.subr.bf16.mxu0 %v2963
    %3401 = vmatpush1.bf16.msra.mxu0 %v2962
    %3402 = vmatprep.subr.bf16.mxu0 %v2967
    %3403 = vmatpush1.bf16.msra.mxu0 %v2966
    %3404 = vmatprep.mubr.bf16.mxu0 %v1984
    %3405 = vmatmul.mubr.bf16.gmra.mrb[0].mxu0 %v1983
    %v3406 = vpop.f32.mrb[0].mxu0
    %v3407 = vadd.f32 %v3366, %v3406
    %v3408 = vpop.f32.mrb[0].mxu0
    %v3409 = vadd.f32 %v3368, %v3408
    %v3410 = vpop.f32.mrb[0].mxu0
    %v3411 = vpop.f32.mrb[0].mxu0
    %3412 = vdwg.mxu0
    %3413 = vmatprep.subr.bf16.mxu0 %v2971
    %3414 = vmatpush1.bf16.msra.mxu0 %v2970
    %3415 = vmatprep.subr.bf16.mxu0 %v2975
    %3416 = vmatpush1.bf16.msra.mxu0 %v2974
    %3417 = vmatprep.subr.bf16.mxu0 %v2979
    %3418 = vmatpush1.bf16.msra.mxu0 %v2978
    %3419 = vmatprep.subr.bf16.mxu0 %v2983
    %3420 = vmatpush1.bf16.msra.mxu0 %v2982
    %3421 = vmatprep.subr.bf16.mxu0 %v2987
    %3422 = vmatpush1.bf16.msra.mxu0 %v2986
    %3423 = vmatprep.subr.bf16.mxu0 %v2991
    %3424 = vmatpush1.bf16.msra.mxu0 %v2990
    %3425 = vmatprep.subr.bf16.mxu0 %v2995
    %3426 = vmatpush1.bf16.msra.mxu0 %v2994
    %3427 = vmatprep.subr.bf16.mxu0 %v2999
    %3428 = vmatpush1.bf16.msra.mxu0 %v2998
    %3429 = vmatprep.subr.bf16.mxu0 %v3003
    %3430 = vmatpush1.bf16.msra.mxu0 %v3002
    %3431 = vmatprep.subr.bf16.mxu0 %v3007
    %3432 = vmatpush1.bf16.msra.mxu0 %v3006
    %3433 = vmatprep.subr.bf16.mxu0 %v3011
    %3434 = vmatpush1.bf16.msra.mxu0 %v3010
    %3435 = vmatprep.subr.bf16.mxu0 %v3015
    %3436 = vmatpush1.bf16.msra.mxu0 %v3014
    %3437 = vmatprep.subr.bf16.mxu0 %v3019
    %3438 = vmatpush1.bf16.msra.mxu0 %v3018
    %3439 = vmatprep.subr.bf16.mxu0 %v3023
    %3440 = vmatpush1.bf16.msra.mxu0 %v3022
    %3441 = vmatprep.subr.bf16.mxu0 %v3027
    %3442 = vmatpush1.bf16.msra.mxu0 %v3026
    %3443 = vmatprep.subr.bf16.mxu0 %v3031
    %3444 = vmatpush1.bf16.msra.mxu0 %v3030
    %3445 = vmatprep.mubr.bf16.mxu0 %v1986
    %3446 = vmatmul.mubr.bf16.gmra.mrb[0].mxu0 %v1985
    %v3447 = vpop.f32.mrb[0].mxu0
    %v3448 = vadd.f32 %v3407, %v3447
    %v3449 = vpop.f32.mrb[0].mxu0
    %v3450 = vadd.f32 %v3409, %v3449
    %v3451 = vpop.f32.mrb[0].mxu0
    %v3452 = vpop.f32.mrb[0].mxu0
    %3453 = vdwg.mxu0
    %3454 = vmatprep.subr.bf16.mxu0 %v2781
    %3455 = vmatpush1.bf16.msra.mxu0 %v2780
    %3456 = vmatprep.subr.bf16.mxu0 %v2785
    %3457 = vmatpush1.bf16.msra.mxu0 %v2784
    %3458 = vmatprep.subr.bf16.mxu0 %v2789
    %3459 = vmatpush1.bf16.msra.mxu0 %v2788
    %3460 = vmatprep.subr.bf16.mxu0 %v2793
    %3461 = vmatpush1.bf16.msra.mxu0 %v2792
    %3462 = vmatprep.subr.bf16.mxu0 %v2797
    %3463 = vmatpush1.bf16.msra.mxu0 %v2796
    %3464 = vmatprep.subr.bf16.mxu0 %v2801
    %3465 = vmatpush1.bf16.msra.mxu0 %v2800
    %3466 = vmatprep.subr.bf16.mxu0 %v2805
    %3467 = vmatpush1.bf16.msra.mxu0 %v2804
    %3468 = vmatprep.subr.bf16.mxu0 %v2809
    %3469 = vmatpush1.bf16.msra.mxu0 %v2808
    %3470 = vmatprep.subr.bf16.mxu0 %v2813
    %3471 = vmatpush1.bf16.msra.mxu0 %v2812
    %3472 = vmatprep.subr.bf16.mxu0 %v2817
    %3473 = vmatpush1.bf16.msra.mxu0 %v2816
    %3474 = vmatprep.subr.bf16.mxu0 %v2821
    %3475 = vmatpush1.bf16.msra.mxu0 %v2820
    %3476 = vmatprep.subr.bf16.mxu0 %v2825
    %3477 = vmatpush1.bf16.msra.mxu0 %v2824
    %3478 = vmatprep.subr.bf16.mxu0 %v2829
    %3479 = vmatpush1.bf16.msra.mxu0 %v2828
    %3480 = vmatprep.subr.bf16.mxu0 %v2833
    %3481 = vmatpush1.bf16.msra.mxu0 %v2832
    %3482 = vmatprep.subr.bf16.mxu0 %v2837
    %3483 = vmatpush1.bf16.msra.mxu0 %v2836
    %3484 = vmatprep.subr.bf16.mxu0 %v2841
    %3485 = vmatpush1.bf16.msra.mxu0 %v2840
    %3486 = vmatprep.mubr.bf16.mxu0 %v1980
    %3487 = vmatmul.mubr.bf16.gmra.mrb[0].mxu0 %v1979
    %v3488 = vpop.f32.mrb[0].mxu0
    %v3489 = vadd.f32 %v2001, %v3488
    %v3490 = vpop.f32.mrb[0].mxu0
    %v3491 = vadd.f32 %v2005, %v3490
    %v3492 = vpop.f32.mrb[0].mxu0
    %v3493 = vpop.f32.mrb[0].mxu0
    %3494 = vdwg.mxu0
    %3495 = vmatprep.subr.bf16.mxu0 %v2845
    %3496 = vmatpush1.bf16.msra.mxu0 %v2844
    %3497 = vmatprep.subr.bf16.mxu0 %v2849
    %3498 = vmatpush1.bf16.msra.mxu0 %v2848
    %3499 = vmatprep.subr.bf16.mxu0 %v2853
    %3500 = vmatpush1.bf16.msra.mxu0 %v2852
    %3501 = vmatprep.subr.bf16.mxu0 %v2857
    %3502 = vmatpush1.bf16.msra.mxu0 %v2856
    %3503 = vmatprep.subr.bf16.mxu0 %v2861
    %3504 = vmatpush1.bf16.msra.mxu0 %v2860
    %3505 = vmatprep.subr.bf16.mxu0 %v2865
    %3506 = vmatpush1.bf16.msra.mxu0 %v2864
    %3507 = vmatprep.subr.bf16.mxu0 %v2869
    %3508 = vmatpush1.bf16.msra.mxu0 %v2868
    %3509 = vmatprep.subr.bf16.mxu0 %v2873
    %3510 = vmatpush1.bf16.msra.mxu0 %v2872
    %3511 = vmatprep.subr.bf16.mxu0 %v2877
    %3512 = vmatpush1.bf16.msra.mxu0 %v2876
    %3513 = vmatprep.subr.bf16.mxu0 %v2881
    %3514 = vmatpush1.bf16.msra.mxu0 %v2880
    %3515 = vmatprep.subr.bf16.mxu0 %v2885
    %3516 = vmatpush1.bf16.msra.mxu0 %v2884
    %3517 = vmatprep.subr.bf16.mxu0 %v2889
    %3518 = vmatpush1.bf16.msra.mxu0 %v2888
    %3519 = vmatprep.subr.bf16.mxu0 %v2893
    %3520 = vmatpush1.bf16.msra.mxu0 %v2892
    %3521 = vmatprep.subr.bf16.mxu0 %v2897
    %3522 = vmatpush1.bf16.msra.mxu0 %v2896
    %3523 = vmatprep.subr.bf16.mxu0 %v2901
    %3524 = vmatpush1.bf16.msra.mxu0 %v2900
    %3525 = vmatprep.subr.bf16.mxu0 %v2905
    %3526 = vmatpush1.bf16.msra.mxu0 %v2904
    %3527 = vmatprep.mubr.bf16.mxu0 %v1982
    %3528 = vmatmul.mubr.bf16.gmra.mrb[0].mxu0 %v1981
    %v3529 = vpop.f32.mrb[0].mxu0
    %v3530 = vadd.f32 %v3489, %v3529
    %v3531 = vpop.f32.mrb[0].mxu0
    %v3532 = vadd.f32 %v3491, %v3531
    %v3533 = vpop.f32.mrb[0].mxu0
    %v3534 = vpop.f32.mrb[0].mxu0
    %3535 = vdwg.mxu0
    %3536 = vmatprep.subr.bf16.mxu0 %v2909
    %3537 = vmatpush1.bf16.msra.mxu0 %v2908
    %3538 = vmatprep.subr.bf16.mxu0 %v2913
    %3539 = vmatpush1.bf16.msra.mxu0 %v2912
    %3540 = vmatprep.subr.bf16.mxu0 %v2917
    %3541 = vmatpush1.bf16.msra.mxu0 %v2916
    %3542 = vmatprep.subr.bf16.mxu0 %v2921
    %3543 = vmatpush1.bf16.msra.mxu0 %v2920
    %3544 = vmatprep.subr.bf16.mxu0 %v2925
    %3545 = vmatpush1.bf16.msra.mxu0 %v2924
    %3546 = vmatprep.subr.bf16.mxu0 %v2929
    %3547 = vmatpush1.bf16.msra.mxu0 %v2928
    %3548 = vmatprep.subr.bf16.mxu0 %v2933
    %3549 = vmatpush1.bf16.msra.mxu0 %v2932
    %3550 = vmatprep.subr.bf16.mxu0 %v2937
    %3551 = vmatpush1.bf16.msra.mxu0 %v2936
    %3552 = vmatprep.subr.bf16.mxu0 %v2941
    %3553 = vmatpush1.bf16.msra.mxu0 %v2940
    %3554 = vmatprep.subr.bf16.mxu0 %v2945
    %3555 = vmatpush1.bf16.msra.mxu0 %v2944
    %3556 = vmatprep.subr.bf16.mxu0 %v2949
    %3557 = vmatpush1.bf16.msra.mxu0 %v2948
    %3558 = vmatprep.subr.bf16.mxu0 %v2953
    %3559 = vmatpush1.bf16.msra.mxu0 %v2952
    %3560 = vmatprep.subr.bf16.mxu0 %v2957
    %3561 = vmatpush1.bf16.msra.mxu0 %v2956
    %3562 = vmatprep.subr.bf16.mxu0 %v2961
    %3563 = vmatpush1.bf16.msra.mxu0 %v2960
    %3564 = vmatprep.subr.bf16.mxu0 %v2965
    %3565 = vmatpush1.bf16.msra.mxu0 %v2964
    %3566 = vmatprep.subr.bf16.mxu0 %v2969
    %3567 = vmatpush1.bf16.msra.mxu0 %v2968
    %3568 = vmatprep.mubr.bf16.mxu0 %v1984
    %3569 = vmatmul.mubr.bf16.gmra.mrb[0].mxu0 %v1983
    %v3570 = vpop.f32.mrb[0].mxu0
    %v3571 = vadd.f32 %v3530, %v3570
    %v3572 = vpop.f32.mrb[0].mxu0
    %v3573 = vadd.f32 %v3532, %v3572
    %v3574 = vpop.f32.mrb[0].mxu0
    %v3575 = vpop.f32.mrb[0].mxu0
    %3576 = vdwg.mxu0
    %3577 = vmatprep.subr.bf16.mxu0 %v2973
    %3578 = vmatpush1.bf16.msra.mxu0 %v2972
    %3579 = vmatprep.subr.bf16.mxu0 %v2977
    %3580 = vmatpush1.bf16.msra.mxu0 %v2976
    %3581 = vmatprep.subr.bf16.mxu0 %v2981
    %3582 = vmatpush1.bf16.msra.mxu0 %v2980
    %3583 = vmatprep.subr.bf16.mxu0 %v2985
    %3584 = vmatpush1.bf16.msra.mxu0 %v2984
    %3585 = vmatprep.subr.bf16.mxu0 %v2989
    %3586 = vmatpush1.bf16.msra.mxu0 %v2988
    %3587 = vmatprep.subr.bf16.mxu0 %v2993
    %3588 = vmatpush1.bf16.msra.mxu0 %v2992
    %3589 = vmatprep.subr.bf16.mxu0 %v2997
    %3590 = vmatpush1.bf16.msra.mxu0 %v2996
    %3591 = vmatprep.subr.bf16.mxu0 %v3001
    %3592 = vmatpush1.bf16.msra.mxu0 %v3000
    %3593 = vmatprep.subr.bf16.mxu0 %v3005
    %3594 = vmatpush1.bf16.msra.mxu0 %v3004
    %3595 = vmatprep.subr.bf16.mxu0 %v3009
    %3596 = vmatpush1.bf16.msra.mxu0 %v3008
    %3597 = vmatprep.subr.bf16.mxu0 %v3013
    %3598 = vmatpush1.bf16.msra.mxu0 %v3012
    %3599 = vmatprep.subr.bf16.mxu0 %v3017
    %3600 = vmatpush1.bf16.msra.mxu0 %v3016
    %3601 = vmatprep.subr.bf16.mxu0 %v3021
    %3602 = vmatpush1.bf16.msra.mxu0 %v3020
    %3603 = vmatprep.subr.bf16.mxu0 %v3025
    %3604 = vmatpush1.bf16.msra.mxu0 %v3024
    %3605 = vmatprep.subr.bf16.mxu0 %v3029
    %3606 = vmatpush1.bf16.msra.mxu0 %v3028
    %3607 = vmatprep.subr.bf16.mxu0 %v3033
    %3608 = vmatpush1.bf16.msra.mxu0 %v3032
    %3609 = vmatprep.mubr.bf16.mxu0 %v1986
    %3610 = vmatmul.mubr.bf16.gmra.mrb[0].mxu0 %v1985
    %v3611 = vpop.f32.mrb[0].mxu0
    %v3612 = vadd.f32 %v3571, %v3611
    %v3613 = vpop.f32.mrb[0].mxu0
    %v3614 = vadd.f32 %v3573, %v3613
    %v3615 = vpop.f32.mrb[0].mxu0
    %v3616 = vpop.f32.mrb[0].mxu0
    %3617 = vdwg.mxu0
    %v3618 = vmax.f32 %v3448, 0.0
    %v3619 = vmax.f32 %v3450, 0.0
    %v3620 = vmax.f32 %v3612, 0.0
    %v3621 = vmax.f32 %v3614, 0.0
    %v3622 = vpack.c.bf16 %v3618, %v3618
    %v3623 = vpack.c.bf16 %v3619, %v3619
    %v3624 = vpack.c.bf16 %v3620, %v3620
    %v3625 = vpack.c.bf16 %v3621, %v3621
    %s3626 = scalar_lea.vmem %s6, 2
    %v3627 = vld [vmem:[%s3626] ss:$8 sm:$0xf]
    %v3629 = vlaneseq
    %v3630 = vshrl.u32 %v3629, 7
    %v3631 = vsub.s32 0, %v3630
    %v3632 = vrot.slane %v3627, %v3631
    %v3633 = vlaneseq
    %v3634 = vshrl.u32 %v3633, 7
    %v3635 = vsub.s32 1, %v3634
    %v3636 = vrot.slane %v3627, %v3635
    %v3637 = vlaneseq
    %v3638 = vshrl.u32 %v3637, 7
    %v3639 = vsub.s32 2, %v3638
    %v3640 = vrot.slane %v3627, %v3639
    %v3641 = vlaneseq
    %v3642 = vshrl.u32 %v3641, 7
    %v3643 = vsub.s32 3, %v3642
    %v3644 = vrot.slane %v3627, %v3643
    %v3777 = vunpack.c.l.b16 %v481
    %v3778 = vunpack.c.h.b16 %v481
    %v3779 = vunpack.c.l.b16 %v482
    %v3780 = vunpack.c.h.b16 %v482
    %v3781 = vunpack.c.l.b16 %v483
    %v3782 = vunpack.c.h.b16 %v483
    %v3783 = vunpack.c.l.b16 %v484
    %v3784 = vunpack.c.h.b16 %v484
    %v3785 = vunpack.c.l.b16 %v485
    %v3786 = vunpack.c.h.b16 %v485
    %v3787 = vunpack.c.l.b16 %v486
    %v3788 = vunpack.c.h.b16 %v486
    %v3789 = vunpack.c.l.b16 %v487
    %v3790 = vunpack.c.h.b16 %v487
    %v3791 = vunpack.c.l.b16 %v488
    %v3792 = vunpack.c.h.b16 %v488
    %v3793 = vunpack.c.l.b16 %v489
    %v3794 = vunpack.c.h.b16 %v489
    %v3795 = vunpack.c.l.b16 %v490
    %v3796 = vunpack.c.h.b16 %v490
    %v3797 = vunpack.c.l.b16 %v491
    %v3798 = vunpack.c.h.b16 %v491
    %v3799 = vunpack.c.l.b16 %v492
    %v3800 = vunpack.c.h.b16 %v492
    %v3801 = vunpack.c.l.b16 %v493
    %v3802 = vunpack.c.h.b16 %v493
    %v3803 = vunpack.c.l.b16 %v494
    %v3804 = vunpack.c.h.b16 %v494
    %v3805 = vunpack.c.l.b16 %v495
    %v3806 = vunpack.c.h.b16 %v495
    %v3807 = vunpack.c.l.b16 %v496
    %v3808 = vunpack.c.h.b16 %v496
    %v3809 = vunpack.c.l.b16 %v497
    %v3810 = vunpack.c.h.b16 %v497
    %v3811 = vunpack.c.l.b16 %v498
    %v3812 = vunpack.c.h.b16 %v498
    %v3813 = vunpack.c.l.b16 %v499
    %v3814 = vunpack.c.h.b16 %v499
    %v3815 = vunpack.c.l.b16 %v500
    %v3816 = vunpack.c.h.b16 %v500
    %v3817 = vunpack.c.l.b16 %v501
    %v3818 = vunpack.c.h.b16 %v501
    %v3819 = vunpack.c.l.b16 %v502
    %v3820 = vunpack.c.h.b16 %v502
    %v3821 = vunpack.c.l.b16 %v503
    %v3822 = vunpack.c.h.b16 %v503
    %v3823 = vunpack.c.l.b16 %v504
    %v3824 = vunpack.c.h.b16 %v504
    %v3825 = vunpack.c.l.b16 %v505
    %v3826 = vunpack.c.h.b16 %v505
    %v3827 = vunpack.c.l.b16 %v506
    %v3828 = vunpack.c.h.b16 %v506
    %v3829 = vunpack.c.l.b16 %v507
    %v3830 = vunpack.c.h.b16 %v507
    %v3831 = vunpack.c.l.b16 %v508
    %v3832 = vunpack.c.h.b16 %v508
    %v3833 = vunpack.c.l.b16 %v509
    %v3834 = vunpack.c.h.b16 %v509
    %v3835 = vunpack.c.l.b16 %v510
    %v3836 = vunpack.c.h.b16 %v510
    %v3837 = vunpack.c.l.b16 %v511
    %v3838 = vunpack.c.h.b16 %v511
    %v3839 = vunpack.c.l.b16 %v512
    %v3840 = vunpack.c.h.b16 %v512
    %v3841 = vunpack.c.l.b16 %v513
    %v3842 = vunpack.c.h.b16 %v513
    %v3843 = vunpack.c.l.b16 %v514
    %v3844 = vunpack.c.h.b16 %v514
    %v3845 = vunpack.c.l.b16 %v515
    %v3846 = vunpack.c.h.b16 %v515
    %v3847 = vunpack.c.l.b16 %v516
    %v3848 = vunpack.c.h.b16 %v516
    %v3849 = vunpack.c.l.b16 %v517
    %v3850 = vunpack.c.h.b16 %v517
    %v3851 = vunpack.c.l.b16 %v518
    %v3852 = vunpack.c.h.b16 %v518
    %v3853 = vunpack.c.l.b16 %v519
    %v3854 = vunpack.c.h.b16 %v519
    %v3855 = vunpack.c.l.b16 %v520
    %v3856 = vunpack.c.h.b16 %v520
    %v3857 = vunpack.c.l.b16 %v521
    %v3858 = vunpack.c.h.b16 %v521
    %v3859 = vunpack.c.l.b16 %v522
    %v3860 = vunpack.c.h.b16 %v522
    %v3861 = vunpack.c.l.b16 %v523
    %v3862 = vunpack.c.h.b16 %v523
    %v3863 = vunpack.c.l.b16 %v524
    %v3864 = vunpack.c.h.b16 %v524
    %v3865 = vunpack.c.l.b16 %v525
    %v3866 = vunpack.c.h.b16 %v525
    %v3867 = vunpack.c.l.b16 %v526
    %v3868 = vunpack.c.h.b16 %v526
    %v3869 = vunpack.c.l.b16 %v527
    %v3870 = vunpack.c.h.b16 %v527
    %v3871 = vunpack.c.l.b16 %v528
    %v3872 = vunpack.c.h.b16 %v528
    %v3873 = vunpack.c.l.b16 %v529
    %v3874 = vunpack.c.h.b16 %v529
    %v3875 = vunpack.c.l.b16 %v530
    %v3876 = vunpack.c.h.b16 %v530
    %v3877 = vunpack.c.l.b16 %v531
    %v3878 = vunpack.c.h.b16 %v531
    %v3879 = vunpack.c.l.b16 %v532
    %v3880 = vunpack.c.h.b16 %v532
    %v3881 = vunpack.c.l.b16 %v533
    %v3882 = vunpack.c.h.b16 %v533
    %v3883 = vunpack.c.l.b16 %v534
    %v3884 = vunpack.c.h.b16 %v534
    %v3885 = vunpack.c.l.b16 %v535
    %v3886 = vunpack.c.h.b16 %v535
    %v3887 = vunpack.c.l.b16 %v536
    %v3888 = vunpack.c.h.b16 %v536
    %v3889 = vunpack.c.l.b16 %v537
    %v3890 = vunpack.c.h.b16 %v537
    %v3891 = vunpack.c.l.b16 %v538
    %v3892 = vunpack.c.h.b16 %v538
    %v3893 = vunpack.c.l.b16 %v539
    %v3894 = vunpack.c.h.b16 %v539
    %v3895 = vunpack.c.l.b16 %v540
    %v3896 = vunpack.c.h.b16 %v540
    %v3897 = vunpack.c.l.b16 %v541
    %v3898 = vunpack.c.h.b16 %v541
    %v3899 = vunpack.c.l.b16 %v542
    %v3900 = vunpack.c.h.b16 %v542
    %v3901 = vunpack.c.l.b16 %v543
    %v3902 = vunpack.c.h.b16 %v543
    %v3903 = vunpack.c.l.b16 %v544
    %v3904 = vunpack.c.h.b16 %v544
    %v3905 = vunpack.c.l.b16 %v545
    %v3906 = vunpack.c.h.b16 %v545
    %v3907 = vunpack.c.l.b16 %v546
    %v3908 = vunpack.c.h.b16 %v546
    %v3909 = vunpack.c.l.b16 %v547
    %v3910 = vunpack.c.h.b16 %v547
    %v3911 = vunpack.c.l.b16 %v548
    %v3912 = vunpack.c.h.b16 %v548
    %v3913 = vunpack.c.l.b16 %v549
    %v3914 = vunpack.c.h.b16 %v549
    %v3915 = vunpack.c.l.b16 %v550
    %v3916 = vunpack.c.h.b16 %v550
    %v3917 = vunpack.c.l.b16 %v551
    %v3918 = vunpack.c.h.b16 %v551
    %v3919 = vunpack.c.l.b16 %v552
    %v3920 = vunpack.c.h.b16 %v552
    %v3921 = vunpack.c.l.b16 %v553
    %v3922 = vunpack.c.h.b16 %v553
    %v3923 = vunpack.c.l.b16 %v554
    %v3924 = vunpack.c.h.b16 %v554
    %v3925 = vunpack.c.l.b16 %v555
    %v3926 = vunpack.c.h.b16 %v555
    %v3927 = vunpack.c.l.b16 %v556
    %v3928 = vunpack.c.h.b16 %v556
    %v3929 = vunpack.c.l.b16 %v557
    %v3930 = vunpack.c.h.b16 %v557
    %v3931 = vunpack.c.l.b16 %v558
    %v3932 = vunpack.c.h.b16 %v558
    %v3933 = vunpack.c.l.b16 %v559
    %v3934 = vunpack.c.h.b16 %v559
    %v3935 = vunpack.c.l.b16 %v560
    %v3936 = vunpack.c.h.b16 %v560
    %v3937 = vunpack.c.l.b16 %v561
    %v3938 = vunpack.c.h.b16 %v561
    %v3939 = vunpack.c.l.b16 %v562
    %v3940 = vunpack.c.h.b16 %v562
    %v3941 = vunpack.c.l.b16 %v563
    %v3942 = vunpack.c.h.b16 %v563
    %v3943 = vunpack.c.l.b16 %v564
    %v3944 = vunpack.c.h.b16 %v564
    %v3945 = vunpack.c.l.b16 %v565
    %v3946 = vunpack.c.h.b16 %v565
    %v3947 = vunpack.c.l.b16 %v566
    %v3948 = vunpack.c.h.b16 %v566
    %v3949 = vunpack.c.l.b16 %v567
    %v3950 = vunpack.c.h.b16 %v567
    %v3951 = vunpack.c.l.b16 %v568
    %v3952 = vunpack.c.h.b16 %v568
    %v3953 = vunpack.c.l.b16 %v569
    %v3954 = vunpack.c.h.b16 %v569
    %v3955 = vunpack.c.l.b16 %v570
    %v3956 = vunpack.c.h.b16 %v570
    %v3957 = vunpack.c.l.b16 %v571
    %v3958 = vunpack.c.h.b16 %v571
    %v3959 = vunpack.c.l.b16 %v572
    %v3960 = vunpack.c.h.b16 %v572
    %v3961 = vunpack.c.l.b16 %v573
    %v3962 = vunpack.c.h.b16 %v573
    %v3963 = vunpack.c.l.b16 %v574
    %v3964 = vunpack.c.h.b16 %v574
    %v3965 = vunpack.c.l.b16 %v575
    %v3966 = vunpack.c.h.b16 %v575
    %v3967 = vunpack.c.l.b16 %v576
    %v3968 = vunpack.c.h.b16 %v576
    %v3969 = vunpack.c.l.b16 %v577
    %v3970 = vunpack.c.h.b16 %v577
    %v3971 = vunpack.c.l.b16 %v578
    %v3972 = vunpack.c.h.b16 %v578
    %v3973 = vunpack.c.l.b16 %v579
    %v3974 = vunpack.c.h.b16 %v579
    %v3975 = vunpack.c.l.b16 %v580
    %v3976 = vunpack.c.h.b16 %v580
    %v3977 = vunpack.c.l.b16 %v581
    %v3978 = vunpack.c.h.b16 %v581
    %v3979 = vunpack.c.l.b16 %v582
    %v3980 = vunpack.c.h.b16 %v582
    %v3981 = vunpack.c.l.b16 %v583
    %v3982 = vunpack.c.h.b16 %v583
    %v3983 = vunpack.c.l.b16 %v584
    %v3984 = vunpack.c.h.b16 %v584
    %v3985 = vunpack.c.l.b16 %v585
    %v3986 = vunpack.c.h.b16 %v585
    %v3987 = vunpack.c.l.b16 %v586
    %v3988 = vunpack.c.h.b16 %v586
    %v3989 = vunpack.c.l.b16 %v587
    %v3990 = vunpack.c.h.b16 %v587
    %v3991 = vunpack.c.l.b16 %v588
    %v3992 = vunpack.c.h.b16 %v588
    %v3993 = vunpack.c.l.b16 %v589
    %v3994 = vunpack.c.h.b16 %v589
    %v3995 = vunpack.c.l.b16 %v590
    %v3996 = vunpack.c.h.b16 %v590
    %v3997 = vunpack.c.l.b16 %v591
    %v3998 = vunpack.c.h.b16 %v591
    %v3999 = vunpack.c.l.b16 %v592
    %v4000 = vunpack.c.h.b16 %v592
    %v4001 = vunpack.c.l.b16 %v593
    %v4002 = vunpack.c.h.b16 %v593
    %v4003 = vunpack.c.l.b16 %v594
    %v4004 = vunpack.c.h.b16 %v594
    %v4005 = vunpack.c.l.b16 %v595
    %v4006 = vunpack.c.h.b16 %v595
    %v4007 = vunpack.c.l.b16 %v596
    %v4008 = vunpack.c.h.b16 %v596
    %v4009 = vunpack.c.l.b16 %v597
    %v4010 = vunpack.c.h.b16 %v597
    %v4011 = vunpack.c.l.b16 %v598
    %v4012 = vunpack.c.h.b16 %v598
    %v4013 = vunpack.c.l.b16 %v599
    %v4014 = vunpack.c.h.b16 %v599
    %v4015 = vunpack.c.l.b16 %v600
    %v4016 = vunpack.c.h.b16 %v600
    %v4017 = vunpack.c.l.b16 %v601
    %v4018 = vunpack.c.h.b16 %v601
    %v4019 = vunpack.c.l.b16 %v602
    %v4020 = vunpack.c.h.b16 %v602
    %v4021 = vunpack.c.l.b16 %v603
    %v4022 = vunpack.c.h.b16 %v603
    %v4023 = vunpack.c.l.b16 %v604
    %v4024 = vunpack.c.h.b16 %v604
    %v4025 = vunpack.c.l.b16 %v605
    %v4026 = vunpack.c.h.b16 %v605
    %v4027 = vunpack.c.l.b16 %v606
    %v4028 = vunpack.c.h.b16 %v606
    %v4029 = vunpack.c.l.b16 %v607
    %v4030 = vunpack.c.h.b16 %v607
    %v4031 = vunpack.c.l.b16 %v608
    %v4032 = vunpack.c.h.b16 %v608
    %v4033 = vpack.c.b16 %v3781, %v3777
    %v4034 = vpack.c.b16 %v3782, %v3778
    %v4035 = vpack.c.b16 %v3783, %v3779
    %v4036 = vpack.c.b16 %v3784, %v3780
    %v4037 = vpack.c.b16 %v3789, %v3785
    %v4038 = vpack.c.b16 %v3790, %v3786
    %v4039 = vpack.c.b16 %v3791, %v3787
    %v4040 = vpack.c.b16 %v3792, %v3788
    %v4041 = vpack.c.b16 %v3797, %v3793
    %v4042 = vpack.c.b16 %v3798, %v3794
    %v4043 = vpack.c.b16 %v3799, %v3795
    %v4044 = vpack.c.b16 %v3800, %v3796
    %v4045 = vpack.c.b16 %v3805, %v3801
    %v4046 = vpack.c.b16 %v3806, %v3802
    %v4047 = vpack.c.b16 %v3807, %v3803
    %v4048 = vpack.c.b16 %v3808, %v3804
    %v4049 = vpack.c.b16 %v3813, %v3809
    %v4050 = vpack.c.b16 %v3814, %v3810
    %v4051 = vpack.c.b16 %v3815, %v3811
    %v4052 = vpack.c.b16 %v3816, %v3812
    %v4053 = vpack.c.b16 %v3821, %v3817
    %v4054 = vpack.c.b16 %v3822, %v3818
    %v4055 = vpack.c.b16 %v3823, %v3819
    %v4056 = vpack.c.b16 %v3824, %v3820
    %v4057 = vpack.c.b16 %v3829, %v3825
    %v4058 = vpack.c.b16 %v3830, %v3826
    %v4059 = vpack.c.b16 %v3831, %v3827
    %v4060 = vpack.c.b16 %v3832, %v3828
    %v4061 = vpack.c.b16 %v3837, %v3833
    %v4062 = vpack.c.b16 %v3838, %v3834
    %v4063 = vpack.c.b16 %v3839, %v3835
    %v4064 = vpack.c.b16 %v3840, %v3836
    %v4065 = vpack.c.b16 %v3845, %v3841
    %v4066 = vpack.c.b16 %v3846, %v3842
    %v4067 = vpack.c.b16 %v3847, %v3843
    %v4068 = vpack.c.b16 %v3848, %v3844
    %v4069 = vpack.c.b16 %v3853, %v3849
    %v4070 = vpack.c.b16 %v3854, %v3850
    %v4071 = vpack.c.b16 %v3855, %v3851
    %v4072 = vpack.c.b16 %v3856, %v3852
    %v4073 = vpack.c.b16 %v3861, %v3857
    %v4074 = vpack.c.b16 %v3862, %v3858
    %v4075 = vpack.c.b16 %v3863, %v3859
    %v4076 = vpack.c.b16 %v3864, %v3860
    %v4077 = vpack.c.b16 %v3869, %v3865
    %v4078 = vpack.c.b16 %v3870, %v3866
    %v4079 = vpack.c.b16 %v3871, %v3867
    %v4080 = vpack.c.b16 %v3872, %v3868
    %v4081 = vpack.c.b16 %v3877, %v3873
    %v4082 = vpack.c.b16 %v3878, %v3874
    %v4083 = vpack.c.b16 %v3879, %v3875
    %v4084 = vpack.c.b16 %v3880, %v3876
    %v4085 = vpack.c.b16 %v3885, %v3881
    %v4086 = vpack.c.b16 %v3886, %v3882
    %v4087 = vpack.c.b16 %v3887, %v3883
    %v4088 = vpack.c.b16 %v3888, %v3884
    %v4089 = vpack.c.b16 %v3893, %v3889
    %v4090 = vpack.c.b16 %v3894, %v3890
    %v4091 = vpack.c.b16 %v3895, %v3891
    %v4092 = vpack.c.b16 %v3896, %v3892
    %v4093 = vpack.c.b16 %v3901, %v3897
    %v4094 = vpack.c.b16 %v3902, %v3898
    %v4095 = vpack.c.b16 %v3903, %v3899
    %v4096 = vpack.c.b16 %v3904, %v3900
    %v4097 = vpack.c.b16 %v3909, %v3905
    %v4098 = vpack.c.b16 %v3910, %v3906
    %v4099 = vpack.c.b16 %v3911, %v3907
    %v4100 = vpack.c.b16 %v3912, %v3908
    %v4101 = vpack.c.b16 %v3917, %v3913
    %v4102 = vpack.c.b16 %v3918, %v3914
    %v4103 = vpack.c.b16 %v3919, %v3915
    %v4104 = vpack.c.b16 %v3920, %v3916
    %v4105 = vpack.c.b16 %v3925, %v3921
    %v4106 = vpack.c.b16 %v3926, %v3922
    %v4107 = vpack.c.b16 %v3927, %v3923
    %v4108 = vpack.c.b16 %v3928, %v3924
    %v4109 = vpack.c.b16 %v3933, %v3929
    %v4110 = vpack.c.b16 %v3934, %v3930
    %v4111 = vpack.c.b16 %v3935, %v3931
    %v4112 = vpack.c.b16 %v3936, %v3932
    %v4113 = vpack.c.b16 %v3941, %v3937
    %v4114 = vpack.c.b16 %v3942, %v3938
    %v4115 = vpack.c.b16 %v3943, %v3939
    %v4116 = vpack.c.b16 %v3944, %v3940
    %v4117 = vpack.c.b16 %v3949, %v3945
    %v4118 = vpack.c.b16 %v3950, %v3946
    %v4119 = vpack.c.b16 %v3951, %v3947
    %v4120 = vpack.c.b16 %v3952, %v3948
    %v4121 = vpack.c.b16 %v3957, %v3953
    %v4122 = vpack.c.b16 %v3958, %v3954
    %v4123 = vpack.c.b16 %v3959, %v3955
    %v4124 = vpack.c.b16 %v3960, %v3956
    %v4125 = vpack.c.b16 %v3965, %v3961
    %v4126 = vpack.c.b16 %v3966, %v3962
    %v4127 = vpack.c.b16 %v3967, %v3963
    %v4128 = vpack.c.b16 %v3968, %v3964
    %v4129 = vpack.c.b16 %v3973, %v3969
    %v4130 = vpack.c.b16 %v3974, %v3970
    %v4131 = vpack.c.b16 %v3975, %v3971
    %v4132 = vpack.c.b16 %v3976, %v3972
    %v4133 = vpack.c.b16 %v3981, %v3977
    %v4134 = vpack.c.b16 %v3982, %v3978
    %v4135 = vpack.c.b16 %v3983, %v3979
    %v4136 = vpack.c.b16 %v3984, %v3980
    %v4137 = vpack.c.b16 %v3989, %v3985
    %v4138 = vpack.c.b16 %v3990, %v3986
    %v4139 = vpack.c.b16 %v3991, %v3987
    %v4140 = vpack.c.b16 %v3992, %v3988
    %v4141 = vpack.c.b16 %v3997, %v3993
    %v4142 = vpack.c.b16 %v3998, %v3994
    %v4143 = vpack.c.b16 %v3999, %v3995
    %v4144 = vpack.c.b16 %v4000, %v3996
    %v4145 = vpack.c.b16 %v4005, %v4001
    %v4146 = vpack.c.b16 %v4006, %v4002
    %v4147 = vpack.c.b16 %v4007, %v4003
    %v4148 = vpack.c.b16 %v4008, %v4004
    %v4149 = vpack.c.b16 %v4013, %v4009
    %v4150 = vpack.c.b16 %v4014, %v4010
    %v4151 = vpack.c.b16 %v4015, %v4011
    %v4152 = vpack.c.b16 %v4016, %v4012
    %v4153 = vpack.c.b16 %v4021, %v4017
    %v4154 = vpack.c.b16 %v4022, %v4018
    %v4155 = vpack.c.b16 %v4023, %v4019
    %v4156 = vpack.c.b16 %v4024, %v4020
    %v4157 = vpack.c.b16 %v4029, %v4025
    %v4158 = vpack.c.b16 %v4030, %v4026
    %v4159 = vpack.c.b16 %v4031, %v4027
    %v4160 = vpack.c.b16 %v4032, %v4028
    %4289 = vmatprep.subr.bf16.mxu0 %v4034
    %4290 = vmatpush1.bf16.msra.mxu0 %v4033
    %4291 = vmatprep.subr.bf16.mxu0 %v4038
    %4292 = vmatpush1.bf16.msra.mxu0 %v4037
    %4293 = vmatprep.subr.bf16.mxu0 %v4042
    %4294 = vmatpush1.bf16.msra.mxu0 %v4041
    %4295 = vmatprep.subr.bf16.mxu0 %v4046
    %4296 = vmatpush1.bf16.msra.mxu0 %v4045
    %4297 = vmatprep.subr.bf16.mxu0 %v4050
    %4298 = vmatpush1.bf16.msra.mxu0 %v4049
    %4299 = vmatprep.subr.bf16.mxu0 %v4054
    %4300 = vmatpush1.bf16.msra.mxu0 %v4053
    %4301 = vmatprep.subr.bf16.mxu0 %v4058
    %4302 = vmatpush1.bf16.msra.mxu0 %v4057
    %4303 = vmatprep.subr.bf16.mxu0 %v4062
    %4304 = vmatpush1.bf16.msra.mxu0 %v4061
    %4305 = vmatprep.subr.bf16.mxu0 %v4066
    %4306 = vmatpush1.bf16.msra.mxu0 %v4065
    %4307 = vmatprep.subr.bf16.mxu0 %v4070
    %4308 = vmatpush1.bf16.msra.mxu0 %v4069
    %4309 = vmatprep.subr.bf16.mxu0 %v4074
    %4310 = vmatpush1.bf16.msra.mxu0 %v4073
    %4311 = vmatprep.subr.bf16.mxu0 %v4078
    %4312 = vmatpush1.bf16.msra.mxu0 %v4077
    %4313 = vmatprep.subr.bf16.mxu0 %v4082
    %4314 = vmatpush1.bf16.msra.mxu0 %v4081
    %4315 = vmatprep.subr.bf16.mxu0 %v4086
    %4316 = vmatpush1.bf16.msra.mxu0 %v4085
    %4317 = vmatprep.subr.bf16.mxu0 %v4090
    %4318 = vmatpush1.bf16.msra.mxu0 %v4089
    %4319 = vmatprep.subr.bf16.mxu0 %v4094
    %4320 = vmatpush1.bf16.msra.mxu0 %v4093
    %4321 = vmatprep.mubr.bf16.mxu0 %v3623
    %4322 = vmatmul.mubr.bf16.gmra.mrb[0].mxu0 %v3622
    %v4323 = vpop.f32.mrb[0].mxu0
    %v4324 = vadd.f32 %v3632, %v4323
    %v4325 = vpop.f32.mrb[0].mxu0
    %v4326 = vadd.f32 %v3636, %v4325
    %v4327 = vpop.f32.mrb[0].mxu0
    %v4328 = vpop.f32.mrb[0].mxu0
    %4329 = vdwg.mxu0
    %4330 = vmatprep.subr.bf16.mxu0 %v4098
    %4331 = vmatpush1.bf16.msra.mxu0 %v4097
    %4332 = vmatprep.subr.bf16.mxu0 %v4102
    %4333 = vmatpush1.bf16.msra.mxu0 %v4101
    %4334 = vmatprep.subr.bf16.mxu0 %v4106
    %4335 = vmatpush1.bf16.msra.mxu0 %v4105
    %4336 = vmatprep.subr.bf16.mxu0 %v4110
    %4337 = vmatpush1.bf16.msra.mxu0 %v4109
    %4338 = vmatprep.subr.bf16.mxu0 %v4114
    %4339 = vmatpush1.bf16.msra.mxu0 %v4113
    %4340 = vmatprep.subr.bf16.mxu0 %v4118
    %4341 = vmatpush1.bf16.msra.mxu0 %v4117
    %4342 = vmatprep.subr.bf16.mxu0 %v4122
    %4343 = vmatpush1.bf16.msra.mxu0 %v4121
    %4344 = vmatprep.subr.bf16.mxu0 %v4126
    %4345 = vmatpush1.bf16.msra.mxu0 %v4125
    %4346 = vmatprep.subr.bf16.mxu0 %v4130
    %4347 = vmatpush1.bf16.msra.mxu0 %v4129
    %4348 = vmatprep.subr.bf16.mxu0 %v4134
    %4349 = vmatpush1.bf16.msra.mxu0 %v4133
    %4350 = vmatprep.subr.bf16.mxu0 %v4138
    %4351 = vmatpush1.bf16.msra.mxu0 %v4137
    %4352 = vmatprep.subr.bf16.mxu0 %v4142
    %4353 = vmatpush1.bf16.msra.mxu0 %v4141
    %4354 = vmatprep.subr.bf16.mxu0 %v4146
    %4355 = vmatpush1.bf16.msra.mxu0 %v4145
    %4356 = vmatprep.subr.bf16.mxu0 %v4150
    %4357 = vmatpush1.bf16.msra.mxu0 %v4149
    %4358 = vmatprep.subr.bf16.mxu0 %v4154
    %4359 = vmatpush1.bf16.msra.mxu0 %v4153
    %4360 = vmatprep.subr.bf16.mxu0 %v4158
    %4361 = vmatpush1.bf16.msra.mxu0 %v4157
    %4362 = vmatprep.mubr.bf16.mxu0 %v3625
    %4363 = vmatmul.mubr.bf16.gmra.mrb[0].mxu0 %v3624
    %v4364 = vpop.f32.mrb[0].mxu0
    %v4365 = vadd.f32 %v4324, %v4364
    %v4366 = vpop.f32.mrb[0].mxu0
    %v4367 = vadd.f32 %v4326, %v4366
    %v4368 = vpop.f32.mrb[0].mxu0
    %v4369 = vpop.f32.mrb[0].mxu0
    %4370 = vdwg.mxu0
    %4371 = vmatprep.subr.bf16.mxu0 %v4036
    %4372 = vmatpush1.bf16.msra.mxu0 %v4035
    %4373 = vmatprep.subr.bf16.mxu0 %v4040
    %4374 = vmatpush1.bf16.msra.mxu0 %v4039
    %4375 = vmatprep.subr.bf16.mxu0 %v4044
    %4376 = vmatpush1.bf16.msra.mxu0 %v4043
    %4377 = vmatprep.subr.bf16.mxu0 %v4048
    %4378 = vmatpush1.bf16.msra.mxu0 %v4047
    %4379 = vmatprep.subr.bf16.mxu0 %v4052
    %4380 = vmatpush1.bf16.msra.mxu0 %v4051
    %4381 = vmatprep.subr.bf16.mxu0 %v4056
    %4382 = vmatpush1.bf16.msra.mxu0 %v4055
    %4383 = vmatprep.subr.bf16.mxu0 %v4060
    %4384 = vmatpush1.bf16.msra.mxu0 %v4059
    %4385 = vmatprep.subr.bf16.mxu0 %v4064
    %4386 = vmatpush1.bf16.msra.mxu0 %v4063
    %4387 = vmatprep.subr.bf16.mxu0 %v4068
    %4388 = vmatpush1.bf16.msra.mxu0 %v4067
    %4389 = vmatprep.subr.bf16.mxu0 %v4072
    %4390 = vmatpush1.bf16.msra.mxu0 %v4071
    %4391 = vmatprep.subr.bf16.mxu0 %v4076
    %4392 = vmatpush1.bf16.msra.mxu0 %v4075
    %4393 = vmatprep.subr.bf16.mxu0 %v4080
    %4394 = vmatpush1.bf16.msra.mxu0 %v4079
    %4395 = vmatprep.subr.bf16.mxu0 %v4084
    %4396 = vmatpush1.bf16.msra.mxu0 %v4083
    %4397 = vmatprep.subr.bf16.mxu0 %v4088
    %4398 = vmatpush1.bf16.msra.mxu0 %v4087
    %4399 = vmatprep.subr.bf16.mxu0 %v4092
    %4400 = vmatpush1.bf16.msra.mxu0 %v4091
    %4401 = vmatprep.subr.bf16.mxu0 %v4096
    %4402 = vmatpush1.bf16.msra.mxu0 %v4095
    %4403 = vmatprep.mubr.bf16.mxu0 %v3623
    %4404 = vmatmul.mubr.bf16.gmra.mrb[0].mxu0 %v3622
    %v4405 = vpop.f32.mrb[0].mxu0
    %v4406 = vadd.f32 %v3640, %v4405
    %v4407 = vpop.f32.mrb[0].mxu0
    %v4408 = vadd.f32 %v3644, %v4407
    %v4409 = vpop.f32.mrb[0].mxu0
    %v4410 = vpop.f32.mrb[0].mxu0
    %4411 = vdwg.mxu0
    %4412 = vmatprep.subr.bf16.mxu0 %v4100
    %4413 = vmatpush1.bf16.msra.mxu0 %v4099
    %4414 = vmatprep.subr.bf16.mxu0 %v4104
    %4415 = vmatpush1.bf16.msra.mxu0 %v4103
    %4416 = vmatprep.subr.bf16.mxu0 %v4108
    %4417 = vmatpush1.bf16.msra.mxu0 %v4107
    %4418 = vmatprep.subr.bf16.mxu0 %v4112
    %4419 = vmatpush1.bf16.msra.mxu0 %v4111
    %4420 = vmatprep.subr.bf16.mxu0 %v4116
    %4421 = vmatpush1.bf16.msra.mxu0 %v4115
    %4422 = vmatprep.subr.bf16.mxu0 %v4120
    %4423 = vmatpush1.bf16.msra.mxu0 %v4119
    %4424 = vmatprep.subr.bf16.mxu0 %v4124
    %4425 = vmatpush1.bf16.msra.mxu0 %v4123
    %4426 = vmatprep.subr.bf16.mxu0 %v4128
    %4427 = vmatpush1.bf16.msra.mxu0 %v4127
    %4428 = vmatprep.subr.bf16.mxu0 %v4132
    %4429 = vmatpush1.bf16.msra.mxu0 %v4131
    %4430 = vmatprep.subr.bf16.mxu0 %v4136
    %4431 = vmatpush1.bf16.msra.mxu0 %v4135
    %4432 = vmatprep.subr.bf16.mxu0 %v4140
    %4433 = vmatpush1.bf16.msra.mxu0 %v4139
    %4434 = vmatprep.subr.bf16.mxu0 %v4144
    %4435 = vmatpush1.bf16.msra.mxu0 %v4143
    %4436 = vmatprep.subr.bf16.mxu0 %v4148
    %4437 = vmatpush1.bf16.msra.mxu0 %v4147
    %4438 = vmatprep.subr.bf16.mxu0 %v4152
    %4439 = vmatpush1.bf16.msra.mxu0 %v4151
    %4440 = vmatprep.subr.bf16.mxu0 %v4156
    %4441 = vmatpush1.bf16.msra.mxu0 %v4155
    %4442 = vmatprep.subr.bf16.mxu0 %v4160
    %4443 = vmatpush1.bf16.msra.mxu0 %v4159
    %4444 = vmatprep.mubr.bf16.mxu0 %v3625
    %4445 = vmatmul.mubr.bf16.gmra.mrb[0].mxu0 %v3624
    %v4446 = vpop.f32.mrb[0].mxu0
    %v4447 = vadd.f32 %v4406, %v4446
    %v4448 = vpop.f32.mrb[0].mxu0
    %v4449 = vadd.f32 %v4408, %v4448
    %v4450 = vpop.f32.mrb[0].mxu0
    %v4451 = vpop.f32.mrb[0].mxu0
    %4452 = vdwg.mxu0
    %v4453 = vmax.f32 %v4365, 0.0
    %v4454 = vmax.f32 %v4367, 0.0
    %v4455 = vmax.f32 %v4447, 0.0
    %v4456 = vmax.f32 %v4449, 0.0
    %v4457 = vpack.c.bf16 %v4453, %v4453
    %v4458 = vpack.c.bf16 %v4454, %v4454
    %v4459 = vpack.c.bf16 %v4455, %v4455
    %v4460 = vpack.c.bf16 %v4456, %v4456
    %s4461 = scalar_lea.vmem %s6, 3
    %v4462 = vld [vmem:[%s4461] ss:$8 sm:$0xf]
    %v4464 = vlaneseq
    %v4465 = vshrl.u32 %v4464, 7
    %v4466 = vsub.s32 0, %v4465
    %v4467 = vrot.slane %v4462, %v4466
    %v4468 = vlaneseq
    %v4469 = vshrl.u32 %v4468, 7
    %v4470 = vsub.s32 1, %v4469
    %v4471 = vrot.slane %v4462, %v4470
    %v4472 = vlaneseq
    %v4473 = vshrl.u32 %v4472, 7
    %v4474 = vsub.s32 2, %v4473
    %v4475 = vrot.slane %v4462, %v4474
    %v4476 = vlaneseq
    %v4477 = vshrl.u32 %v4476, 7
    %v4478 = vsub.s32 3, %v4477
    %v4479 = vrot.slane %v4462, %v4478
    %v4612 = vunpack.c.l.b16 %v609
    %v4613 = vunpack.c.h.b16 %v609
    %v4614 = vunpack.c.l.b16 %v610
    %v4615 = vunpack.c.h.b16 %v610
    %v4616 = vunpack.c.l.b16 %v611
    %v4617 = vunpack.c.h.b16 %v611
    %v4618 = vunpack.c.l.b16 %v612
    %v4619 = vunpack.c.h.b16 %v612
    %v4620 = vunpack.c.l.b16 %v613
    %v4621 = vunpack.c.h.b16 %v613
    %v4622 = vunpack.c.l.b16 %v614
    %v4623 = vunpack.c.h.b16 %v614
    %v4624 = vunpack.c.l.b16 %v615
    %v4625 = vunpack.c.h.b16 %v615
    %v4626 = vunpack.c.l.b16 %v616
    %v4627 = vunpack.c.h.b16 %v616
    %v4628 = vunpack.c.l.b16 %v617
    %v4629 = vunpack.c.h.b16 %v617
    %v4630 = vunpack.c.l.b16 %v618
    %v4631 = vunpack.c.h.b16 %v618
    %v4632 = vunpack.c.l.b16 %v619
    %v4633 = vunpack.c.h.b16 %v619
    %v4634 = vunpack.c.l.b16 %v620
    %v4635 = vunpack.c.h.b16 %v620
    %v4636 = vunpack.c.l.b16 %v621
    %v4637 = vunpack.c.h.b16 %v621
    %v4638 = vunpack.c.l.b16 %v622
    %v4639 = vunpack.c.h.b16 %v622
    %v4640 = vunpack.c.l.b16 %v623
    %v4641 = vunpack.c.h.b16 %v623
    %v4642 = vunpack.c.l.b16 %v624
    %v4643 = vunpack.c.h.b16 %v624
    %v4644 = vunpack.c.l.b16 %v625
    %v4645 = vunpack.c.h.b16 %v625
    %v4646 = vunpack.c.l.b16 %v626
    %v4647 = vunpack.c.h.b16 %v626
    %v4648 = vunpack.c.l.b16 %v627
    %v4649 = vunpack.c.h.b16 %v627
    %v4650 = vunpack.c.l.b16 %v628
    %v4651 = vunpack.c.h.b16 %v628
    %v4652 = vunpack.c.l.b16 %v629
    %v4653 = vunpack.c.h.b16 %v629
    %v4654 = vunpack.c.l.b16 %v630
    %v4655 = vunpack.c.h.b16 %v630
    %v4656 = vunpack.c.l.b16 %v631
    %v4657 = vunpack.c.h.b16 %v631
    %v4658 = vunpack.c.l.b16 %v632
    %v4659 = vunpack.c.h.b16 %v632
    %v4660 = vunpack.c.l.b16 %v633
    %v4661 = vunpack.c.h.b16 %v633
    %v4662 = vunpack.c.l.b16 %v634
    %v4663 = vunpack.c.h.b16 %v634
    %v4664 = vunpack.c.l.b16 %v635
    %v4665 = vunpack.c.h.b16 %v635
    %v4666 = vunpack.c.l.b16 %v636
    %v4667 = vunpack.c.h.b16 %v636
    %v4668 = vunpack.c.l.b16 %v637
    %v4669 = vunpack.c.h.b16 %v637
    %v4670 = vunpack.c.l.b16 %v638
    %v4671 = vunpack.c.h.b16 %v638
    %v4672 = vunpack.c.l.b16 %v639
    %v4673 = vunpack.c.h.b16 %v639
    %v4674 = vunpack.c.l.b16 %v640
    %v4675 = vunpack.c.h.b16 %v640
    %v4676 = vunpack.c.l.b16 %v641
    %v4677 = vunpack.c.h.b16 %v641
    %v4678 = vunpack.c.l.b16 %v642
    %v4679 = vunpack.c.h.b16 %v642
    %v4680 = vunpack.c.l.b16 %v643
    %v4681 = vunpack.c.h.b16 %v643
    %v4682 = vunpack.c.l.b16 %v644
    %v4683 = vunpack.c.h.b16 %v644
    %v4684 = vunpack.c.l.b16 %v645
    %v4685 = vunpack.c.h.b16 %v645
    %v4686 = vunpack.c.l.b16 %v646
    %v4687 = vunpack.c.h.b16 %v646
    %v4688 = vunpack.c.l.b16 %v647
    %v4689 = vunpack.c.h.b16 %v647
    %v4690 = vunpack.c.l.b16 %v648
    %v4691 = vunpack.c.h.b16 %v648
    %v4692 = vunpack.c.l.b16 %v649
    %v4693 = vunpack.c.h.b16 %v649
    %v4694 = vunpack.c.l.b16 %v650
    %v4695 = vunpack.c.h.b16 %v650
    %v4696 = vunpack.c.l.b16 %v651
    %v4697 = vunpack.c.h.b16 %v651
    %v4698 = vunpack.c.l.b16 %v652
    %v4699 = vunpack.c.h.b16 %v652
    %v4700 = vunpack.c.l.b16 %v653
    %v4701 = vunpack.c.h.b16 %v653
    %v4702 = vunpack.c.l.b16 %v654
    %v4703 = vunpack.c.h.b16 %v654
    %v4704 = vunpack.c.l.b16 %v655
    %v4705 = vunpack.c.h.b16 %v655
    %v4706 = vunpack.c.l.b16 %v656
    %v4707 = vunpack.c.h.b16 %v656
    %v4708 = vunpack.c.l.b16 %v657
    %v4709 = vunpack.c.h.b16 %v657
    %v4710 = vunpack.c.l.b16 %v658
    %v4711 = vunpack.c.h.b16 %v658
    %v4712 = vunpack.c.l.b16 %v659
    %v4713 = vunpack.c.h.b16 %v659
    %v4714 = vunpack.c.l.b16 %v660
    %v4715 = vunpack.c.h.b16 %v660
    %v4716 = vunpack.c.l.b16 %v661
    %v4717 = vunpack.c.h.b16 %v661
    %v4718 = vunpack.c.l.b16 %v662
    %v4719 = vunpack.c.h.b16 %v662
    %v4720 = vunpack.c.l.b16 %v663
    %v4721 = vunpack.c.h.b16 %v663
    %v4722 = vunpack.c.l.b16 %v664
    %v4723 = vunpack.c.h.b16 %v664
    %v4724 = vunpack.c.l.b16 %v665
    %v4725 = vunpack.c.h.b16 %v665
    %v4726 = vunpack.c.l.b16 %v666
    %v4727 = vunpack.c.h.b16 %v666
    %v4728 = vunpack.c.l.b16 %v667
    %v4729 = vunpack.c.h.b16 %v667
    %v4730 = vunpack.c.l.b16 %v668
    %v4731 = vunpack.c.h.b16 %v668
    %v4732 = vunpack.c.l.b16 %v669
    %v4733 = vunpack.c.h.b16 %v669
    %v4734 = vunpack.c.l.b16 %v670
    %v4735 = vunpack.c.h.b16 %v670
    %v4736 = vunpack.c.l.b16 %v671
    %v4737 = vunpack.c.h.b16 %v671
    %v4738 = vunpack.c.l.b16 %v672
    %v4739 = vunpack.c.h.b16 %v672
    %v4740 = vunpack.c.l.b16 %v673
    %v4741 = vunpack.c.h.b16 %v673
    %v4742 = vunpack.c.l.b16 %v674
    %v4743 = vunpack.c.h.b16 %v674
    %v4744 = vunpack.c.l.b16 %v675
    %v4745 = vunpack.c.h.b16 %v675
    %v4746 = vunpack.c.l.b16 %v676
    %v4747 = vunpack.c.h.b16 %v676
    %v4748 = vunpack.c.l.b16 %v677
    %v4749 = vunpack.c.h.b16 %v677
    %v4750 = vunpack.c.l.b16 %v678
    %v4751 = vunpack.c.h.b16 %v678
    %v4752 = vunpack.c.l.b16 %v679
    %v4753 = vunpack.c.h.b16 %v679
    %v4754 = vunpack.c.l.b16 %v680
    %v4755 = vunpack.c.h.b16 %v680
    %v4756 = vunpack.c.l.b16 %v681
    %v4757 = vunpack.c.h.b16 %v681
    %v4758 = vunpack.c.l.b16 %v682
    %v4759 = vunpack.c.h.b16 %v682
    %v4760 = vunpack.c.l.b16 %v683
    %v4761 = vunpack.c.h.b16 %v683
    %v4762 = vunpack.c.l.b16 %v684
    %v4763 = vunpack.c.h.b16 %v684
    %v4764 = vunpack.c.l.b16 %v685
    %v4765 = vunpack.c.h.b16 %v685
    %v4766 = vunpack.c.l.b16 %v686
    %v4767 = vunpack.c.h.b16 %v686
    %v4768 = vunpack.c.l.b16 %v687
    %v4769 = vunpack.c.h.b16 %v687
    %v4770 = vunpack.c.l.b16 %v688
    %v4771 = vunpack.c.h.b16 %v688
    %v4772 = vunpack.c.l.b16 %v689
    %v4773 = vunpack.c.h.b16 %v689
    %v4774 = vunpack.c.l.b16 %v690
    %v4775 = vunpack.c.h.b16 %v690
    %v4776 = vunpack.c.l.b16 %v691
    %v4777 = vunpack.c.h.b16 %v691
    %v4778 = vunpack.c.l.b16 %v692
    %v4779 = vunpack.c.h.b16 %v692
    %v4780 = vunpack.c.l.b16 %v693
    %v4781 = vunpack.c.h.b16 %v693
    %v4782 = vunpack.c.l.b16 %v694
    %v4783 = vunpack.c.h.b16 %v694
    %v4784 = vunpack.c.l.b16 %v695
    %v4785 = vunpack.c.h.b16 %v695
    %v4786 = vunpack.c.l.b16 %v696
    %v4787 = vunpack.c.h.b16 %v696
    %v4788 = vunpack.c.l.b16 %v697
    %v4789 = vunpack.c.h.b16 %v697
    %v4790 = vunpack.c.l.b16 %v698
    %v4791 = vunpack.c.h.b16 %v698
    %v4792 = vunpack.c.l.b16 %v699
    %v4793 = vunpack.c.h.b16 %v699
    %v4794 = vunpack.c.l.b16 %v700
    %v4795 = vunpack.c.h.b16 %v700
    %v4796 = vunpack.c.l.b16 %v701
    %v4797 = vunpack.c.h.b16 %v701
    %v4798 = vunpack.c.l.b16 %v702
    %v4799 = vunpack.c.h.b16 %v702
    %v4800 = vunpack.c.l.b16 %v703
    %v4801 = vunpack.c.h.b16 %v703
    %v4802 = vunpack.c.l.b16 %v704
    %v4803 = vunpack.c.h.b16 %v704
    %v4804 = vunpack.c.l.b16 %v705
    %v4805 = vunpack.c.h.b16 %v705
    %v4806 = vunpack.c.l.b16 %v706
    %v4807 = vunpack.c.h.b16 %v706
    %v4808 = vunpack.c.l.b16 %v707
    %v4809 = vunpack.c.h.b16 %v707
    %v4810 = vunpack.c.l.b16 %v708
    %v4811 = vunpack.c.h.b16 %v708
    %v4812 = vunpack.c.l.b16 %v709
    %v4813 = vunpack.c.h.b16 %v709
    %v4814 = vunpack.c.l.b16 %v710
    %v4815 = vunpack.c.h.b16 %v710
    %v4816 = vunpack.c.l.b16 %v711
    %v4817 = vunpack.c.h.b16 %v711
    %v4818 = vunpack.c.l.b16 %v712
    %v4819 = vunpack.c.h.b16 %v712
    %v4820 = vunpack.c.l.b16 %v713
    %v4821 = vunpack.c.h.b16 %v713
    %v4822 = vunpack.c.l.b16 %v714
    %v4823 = vunpack.c.h.b16 %v714
    %v4824 = vunpack.c.l.b16 %v715
    %v4825 = vunpack.c.h.b16 %v715
    %v4826 = vunpack.c.l.b16 %v716
    %v4827 = vunpack.c.h.b16 %v716
    %v4828 = vunpack.c.l.b16 %v717
    %v4829 = vunpack.c.h.b16 %v717
    %v4830 = vunpack.c.l.b16 %v718
    %v4831 = vunpack.c.h.b16 %v718
    %v4832 = vunpack.c.l.b16 %v719
    %v4833 = vunpack.c.h.b16 %v719
    %v4834 = vunpack.c.l.b16 %v720
    %v4835 = vunpack.c.h.b16 %v720
    %v4836 = vunpack.c.l.b16 %v721
    %v4837 = vunpack.c.h.b16 %v721
    %v4838 = vunpack.c.l.b16 %v722
    %v4839 = vunpack.c.h.b16 %v722
    %v4840 = vunpack.c.l.b16 %v723
    %v4841 = vunpack.c.h.b16 %v723
    %v4842 = vunpack.c.l.b16 %v724
    %v4843 = vunpack.c.h.b16 %v724
    %v4844 = vunpack.c.l.b16 %v725
    %v4845 = vunpack.c.h.b16 %v725
    %v4846 = vunpack.c.l.b16 %v726
    %v4847 = vunpack.c.h.b16 %v726
    %v4848 = vunpack.c.l.b16 %v727
    %v4849 = vunpack.c.h.b16 %v727
    %v4850 = vunpack.c.l.b16 %v728
    %v4851 = vunpack.c.h.b16 %v728
    %v4852 = vunpack.c.l.b16 %v729
    %v4853 = vunpack.c.h.b16 %v729
    %v4854 = vunpack.c.l.b16 %v730
    %v4855 = vunpack.c.h.b16 %v730
    %v4856 = vunpack.c.l.b16 %v731
    %v4857 = vunpack.c.h.b16 %v731
    %v4858 = vunpack.c.l.b16 %v732
    %v4859 = vunpack.c.h.b16 %v732
    %v4860 = vunpack.c.l.b16 %v733
    %v4861 = vunpack.c.h.b16 %v733
    %v4862 = vunpack.c.l.b16 %v734
    %v4863 = vunpack.c.h.b16 %v734
    %v4864 = vunpack.c.l.b16 %v735
    %v4865 = vunpack.c.h.b16 %v735
    %v4866 = vunpack.c.l.b16 %v736
    %v4867 = vunpack.c.h.b16 %v736
    %v4868 = vpack.c.b16 %v4616, %v4612
    %v4869 = vpack.c.b16 %v4617, %v4613
    %v4870 = vpack.c.b16 %v4618, %v4614
    %v4871 = vpack.c.b16 %v4619, %v4615
    %v4872 = vpack.c.b16 %v4624, %v4620
    %v4873 = vpack.c.b16 %v4625, %v4621
    %v4874 = vpack.c.b16 %v4626, %v4622
    %v4875 = vpack.c.b16 %v4627, %v4623
    %v4876 = vpack.c.b16 %v4632, %v4628
    %v4877 = vpack.c.b16 %v4633, %v4629
    %v4878 = vpack.c.b16 %v4634, %v4630
    %v4879 = vpack.c.b16 %v4635, %v4631
    %v4880 = vpack.c.b16 %v4640, %v4636
    %v4881 = vpack.c.b16 %v4641, %v4637
    %v4882 = vpack.c.b16 %v4642, %v4638
    %v4883 = vpack.c.b16 %v4643, %v4639
    %v4884 = vpack.c.b16 %v4648, %v4644
    %v4885 = vpack.c.b16 %v4649, %v4645
    %v4886 = vpack.c.b16 %v4650, %v4646
    %v4887 = vpack.c.b16 %v4651, %v4647
    %v4888 = vpack.c.b16 %v4656, %v4652
    %v4889 = vpack.c.b16 %v4657, %v4653
    %v4890 = vpack.c.b16 %v4658, %v4654
    %v4891 = vpack.c.b16 %v4659, %v4655
    %v4892 = vpack.c.b16 %v4664, %v4660
    %v4893 = vpack.c.b16 %v4665, %v4661
    %v4894 = vpack.c.b16 %v4666, %v4662
    %v4895 = vpack.c.b16 %v4667, %v4663
    %v4896 = vpack.c.b16 %v4672, %v4668
    %v4897 = vpack.c.b16 %v4673, %v4669
    %v4898 = vpack.c.b16 %v4674, %v4670
    %v4899 = vpack.c.b16 %v4675, %v4671
    %v4900 = vpack.c.b16 %v4680, %v4676
    %v4901 = vpack.c.b16 %v4681, %v4677
    %v4902 = vpack.c.b16 %v4682, %v4678
    %v4903 = vpack.c.b16 %v4683, %v4679
    %v4904 = vpack.c.b16 %v4688, %v4684
    %v4905 = vpack.c.b16 %v4689, %v4685
    %v4906 = vpack.c.b16 %v4690, %v4686
    %v4907 = vpack.c.b16 %v4691, %v4687
    %v4908 = vpack.c.b16 %v4696, %v4692
    %v4909 = vpack.c.b16 %v4697, %v4693
    %v4910 = vpack.c.b16 %v4698, %v4694
    %v4911 = vpack.c.b16 %v4699, %v4695
    %v4912 = vpack.c.b16 %v4704, %v4700
    %v4913 = vpack.c.b16 %v4705, %v4701
    %v4914 = vpack.c.b16 %v4706, %v4702
    %v4915 = vpack.c.b16 %v4707, %v4703
    %v4916 = vpack.c.b16 %v4712, %v4708
    %v4917 = vpack.c.b16 %v4713, %v4709
    %v4918 = vpack.c.b16 %v4714, %v4710
    %v4919 = vpack.c.b16 %v4715, %v4711
    %v4920 = vpack.c.b16 %v4720, %v4716
    %v4921 = vpack.c.b16 %v4721, %v4717
    %v4922 = vpack.c.b16 %v4722, %v4718
    %v4923 = vpack.c.b16 %v4723, %v4719
    %v4924 = vpack.c.b16 %v4728, %v4724
    %v4925 = vpack.c.b16 %v4729, %v4725
    %v4926 = vpack.c.b16 %v4730, %v4726
    %v4927 = vpack.c.b16 %v4731, %v4727
    %v4928 = vpack.c.b16 %v4736, %v4732
    %v4929 = vpack.c.b16 %v4737, %v4733
    %v4930 = vpack.c.b16 %v4738, %v4734
    %v4931 = vpack.c.b16 %v4739, %v4735
    %v4932 = vpack.c.b16 %v4744, %v4740
    %v4933 = vpack.c.b16 %v4745, %v4741
    %v4934 = vpack.c.b16 %v4746, %v4742
    %v4935 = vpack.c.b16 %v4747, %v4743
    %v4936 = vpack.c.b16 %v4752, %v4748
    %v4937 = vpack.c.b16 %v4753, %v4749
    %v4938 = vpack.c.b16 %v4754, %v4750
    %v4939 = vpack.c.b16 %v4755, %v4751
    %v4940 = vpack.c.b16 %v4760, %v4756
    %v4941 = vpack.c.b16 %v4761, %v4757
    %v4942 = vpack.c.b16 %v4762, %v4758
    %v4943 = vpack.c.b16 %v4763, %v4759
    %v4944 = vpack.c.b16 %v4768, %v4764
    %v4945 = vpack.c.b16 %v4769, %v4765
    %v4946 = vpack.c.b16 %v4770, %v4766
    %v4947 = vpack.c.b16 %v4771, %v4767
    %v4948 = vpack.c.b16 %v4776, %v4772
    %v4949 = vpack.c.b16 %v4777, %v4773
    %v4950 = vpack.c.b16 %v4778, %v4774
    %v4951 = vpack.c.b16 %v4779, %v4775
    %v4952 = vpack.c.b16 %v4784, %v4780
    %v4953 = vpack.c.b16 %v4785, %v4781
    %v4954 = vpack.c.b16 %v4786, %v4782
    %v4955 = vpack.c.b16 %v4787, %v4783
    %v4956 = vpack.c.b16 %v4792, %v4788
    %v4957 = vpack.c.b16 %v4793, %v4789
    %v4958 = vpack.c.b16 %v4794, %v4790
    %v4959 = vpack.c.b16 %v4795, %v4791
    %v4960 = vpack.c.b16 %v4800, %v4796
    %v4961 = vpack.c.b16 %v4801, %v4797
    %v4962 = vpack.c.b16 %v4802, %v4798
    %v4963 = vpack.c.b16 %v4803, %v4799
    %v4964 = vpack.c.b16 %v4808, %v4804
    %v4965 = vpack.c.b16 %v4809, %v4805
    %v4966 = vpack.c.b16 %v4810, %v4806
    %v4967 = vpack.c.b16 %v4811, %v4807
    %v4968 = vpack.c.b16 %v4816, %v4812
    %v4969 = vpack.c.b16 %v4817, %v4813
    %v4970 = vpack.c.b16 %v4818, %v4814
    %v4971 = vpack.c.b16 %v4819, %v4815
    %v4972 = vpack.c.b16 %v4824, %v4820
    %v4973 = vpack.c.b16 %v4825, %v4821
    %v4974 = vpack.c.b16 %v4826, %v4822
    %v4975 = vpack.c.b16 %v4827, %v4823
    %v4976 = vpack.c.b16 %v4832, %v4828
    %v4977 = vpack.c.b16 %v4833, %v4829
    %v4978 = vpack.c.b16 %v4834, %v4830
    %v4979 = vpack.c.b16 %v4835, %v4831
    %v4980 = vpack.c.b16 %v4840, %v4836
    %v4981 = vpack.c.b16 %v4841, %v4837
    %v4982 = vpack.c.b16 %v4842, %v4838
    %v4983 = vpack.c.b16 %v4843, %v4839
    %v4984 = vpack.c.b16 %v4848, %v4844
    %v4985 = vpack.c.b16 %v4849, %v4845
    %v4986 = vpack.c.b16 %v4850, %v4846
    %v4987 = vpack.c.b16 %v4851, %v4847
    %v4988 = vpack.c.b16 %v4856, %v4852
    %v4989 = vpack.c.b16 %v4857, %v4853
    %v4990 = vpack.c.b16 %v4858, %v4854
    %v4991 = vpack.c.b16 %v4859, %v4855
    %v4992 = vpack.c.b16 %v4864, %v4860
    %v4993 = vpack.c.b16 %v4865, %v4861
    %v4994 = vpack.c.b16 %v4866, %v4862
    %v4995 = vpack.c.b16 %v4867, %v4863
    %5124 = vmatprep.subr.bf16.mxu0 %v4869
    %5125 = vmatpush1.bf16.msra.mxu0 %v4868
    %5126 = vmatprep.subr.bf16.mxu0 %v4873
    %5127 = vmatpush1.bf16.msra.mxu0 %v4872
    %5128 = vmatprep.subr.bf16.mxu0 %v4877
    %5129 = vmatpush1.bf16.msra.mxu0 %v4876
    %5130 = vmatprep.subr.bf16.mxu0 %v4881
    %5131 = vmatpush1.bf16.msra.mxu0 %v4880
    %5132 = vmatprep.subr.bf16.mxu0 %v4885
    %5133 = vmatpush1.bf16.msra.mxu0 %v4884
    %5134 = vmatprep.subr.bf16.mxu0 %v4889
    %5135 = vmatpush1.bf16.msra.mxu0 %v4888
    %5136 = vmatprep.subr.bf16.mxu0 %v4893
    %5137 = vmatpush1.bf16.msra.mxu0 %v4892
    %5138 = vmatprep.subr.bf16.mxu0 %v4897
    %5139 = vmatpush1.bf16.msra.mxu0 %v4896
    %5140 = vmatprep.subr.bf16.mxu0 %v4901
    %5141 = vmatpush1.bf16.msra.mxu0 %v4900
    %5142 = vmatprep.subr.bf16.mxu0 %v4905
    %5143 = vmatpush1.bf16.msra.mxu0 %v4904
    %5144 = vmatprep.subr.bf16.mxu0 %v4909
    %5145 = vmatpush1.bf16.msra.mxu0 %v4908
    %5146 = vmatprep.subr.bf16.mxu0 %v4913
    %5147 = vmatpush1.bf16.msra.mxu0 %v4912
    %5148 = vmatprep.subr.bf16.mxu0 %v4917
    %5149 = vmatpush1.bf16.msra.mxu0 %v4916
    %5150 = vmatprep.subr.bf16.mxu0 %v4921
    %5151 = vmatpush1.bf16.msra.mxu0 %v4920
    %5152 = vmatprep.subr.bf16.mxu0 %v4925
    %5153 = vmatpush1.bf16.msra.mxu0 %v4924
    %5154 = vmatprep.subr.bf16.mxu0 %v4929
    %5155 = vmatpush1.bf16.msra.mxu0 %v4928
    %5156 = vmatprep.mubr.bf16.mxu0 %v4458
    %5157 = vmatmul.mubr.bf16.gmra.mrb[0].mxu0 %v4457
    %v5158 = vpop.f32.mrb[0].mxu0
    %v5159 = vadd.f32 %v4467, %v5158
    %v5160 = vpop.f32.mrb[0].mxu0
    %v5161 = vadd.f32 %v4471, %v5160
    %v5162 = vpop.f32.mrb[0].mxu0
    %v5163 = vpop.f32.mrb[0].mxu0
    %5164 = vdwg.mxu0
    %5165 = vmatprep.subr.bf16.mxu0 %v4933
    %5166 = vmatpush1.bf16.msra.mxu0 %v4932
    %5167 = vmatprep.subr.bf16.mxu0 %v4937
    %5168 = vmatpush1.bf16.msra.mxu0 %v4936
    %5169 = vmatprep.subr.bf16.mxu0 %v4941
    %5170 = vmatpush1.bf16.msra.mxu0 %v4940
    %5171 = vmatprep.subr.bf16.mxu0 %v4945
    %5172 = vmatpush1.bf16.msra.mxu0 %v4944
    %5173 = vmatprep.subr.bf16.mxu0 %v4949
    %5174 = vmatpush1.bf16.msra.mxu0 %v4948
    %5175 = vmatprep.subr.bf16.mxu0 %v4953
    %5176 = vmatpush1.bf16.msra.mxu0 %v4952
    %5177 = vmatprep.subr.bf16.mxu0 %v4957
    %5178 = vmatpush1.bf16.msra.mxu0 %v4956
    %5179 = vmatprep.subr.bf16.mxu0 %v4961
    %5180 = vmatpush1.bf16.msra.mxu0 %v4960
    %5181 = vmatprep.subr.bf16.mxu0 %v4965
    %5182 = vmatpush1.bf16.msra.mxu0 %v4964
    %5183 = vmatprep.subr.bf16.mxu0 %v4969
    %5184 = vmatpush1.bf16.msra.mxu0 %v4968
    %5185 = vmatprep.subr.bf16.mxu0 %v4973
    %5186 = vmatpush1.bf16.msra.mxu0 %v4972
    %5187 = vmatprep.subr.bf16.mxu0 %v4977
    %5188 = vmatpush1.bf16.msra.mxu0 %v4976
    %5189 = vmatprep.subr.bf16.mxu0 %v4981
    %5190 = vmatpush1.bf16.msra.mxu0 %v4980
    %5191 = vmatprep.subr.bf16.mxu0 %v4985
    %5192 = vmatpush1.bf16.msra.mxu0 %v4984
    %5193 = vmatprep.subr.bf16.mxu0 %v4989
    %5194 = vmatpush1.bf16.msra.mxu0 %v4988
    %5195 = vmatprep.subr.bf16.mxu0 %v4993
    %5196 = vmatpush1.bf16.msra.mxu0 %v4992
    %5197 = vmatprep.mubr.bf16.mxu0 %v4460
    %5198 = vmatmul.mubr.bf16.gmra.mrb[0].mxu0 %v4459
    %v5199 = vpop.f32.mrb[0].mxu0
    %v5200 = vadd.f32 %v5159, %v5199
    %v5201 = vpop.f32.mrb[0].mxu0
    %v5202 = vadd.f32 %v5161, %v5201
    %v5203 = vpop.f32.mrb[0].mxu0
    %v5204 = vpop.f32.mrb[0].mxu0
    %5205 = vdwg.mxu0
    %5206 = vmatprep.subr.bf16.mxu0 %v4871
    %5207 = vmatpush1.bf16.msra.mxu0 %v4870
    %5208 = vmatprep.subr.bf16.mxu0 %v4875
    %5209 = vmatpush1.bf16.msra.mxu0 %v4874
    %5210 = vmatprep.subr.bf16.mxu0 %v4879
    %5211 = vmatpush1.bf16.msra.mxu0 %v4878
    %5212 = vmatprep.subr.bf16.mxu0 %v4883
    %5213 = vmatpush1.bf16.msra.mxu0 %v4882
    %5214 = vmatprep.subr.bf16.mxu0 %v4887
    %5215 = vmatpush1.bf16.msra.mxu0 %v4886
    %5216 = vmatprep.subr.bf16.mxu0 %v4891
    %5217 = vmatpush1.bf16.msra.mxu0 %v4890
    %5218 = vmatprep.subr.bf16.mxu0 %v4895
    %5219 = vmatpush1.bf16.msra.mxu0 %v4894
    %5220 = vmatprep.subr.bf16.mxu0 %v4899
    %5221 = vmatpush1.bf16.msra.mxu0 %v4898
    %5222 = vmatprep.subr.bf16.mxu0 %v4903
    %5223 = vmatpush1.bf16.msra.mxu0 %v4902
    %5224 = vmatprep.subr.bf16.mxu0 %v4907
    %5225 = vmatpush1.bf16.msra.mxu0 %v4906
    %5226 = vmatprep.subr.bf16.mxu0 %v4911
    %5227 = vmatpush1.bf16.msra.mxu0 %v4910
    %5228 = vmatprep.subr.bf16.mxu0 %v4915
    %5229 = vmatpush1.bf16.msra.mxu0 %v4914
    %5230 = vmatprep.subr.bf16.mxu0 %v4919
    %5231 = vmatpush1.bf16.msra.mxu0 %v4918
    %5232 = vmatprep.subr.bf16.mxu0 %v4923
    %5233 = vmatpush1.bf16.msra.mxu0 %v4922
    %5234 = vmatprep.subr.bf16.mxu0 %v4927
    %5235 = vmatpush1.bf16.msra.mxu0 %v4926
    %5236 = vmatprep.subr.bf16.mxu0 %v4931
    %5237 = vmatpush1.bf16.msra.mxu0 %v4930
    %5238 = vmatprep.mubr.bf16.mxu0 %v4458
    %5239 = vmatmul.mubr.bf16.gmra.mrb[0].mxu0 %v4457
    %v5240 = vpop.f32.mrb[0].mxu0
    %v5241 = vadd.f32 %v4475, %v5240
    %v5242 = vpop.f32.mrb[0].mxu0
    %v5243 = vadd.f32 %v4479, %v5242
    %v5244 = vpop.f32.mrb[0].mxu0
    %v5245 = vpop.f32.mrb[0].mxu0
    %5246 = vdwg.mxu0
    %5247 = vmatprep.subr.bf16.mxu0 %v4935
    %5248 = vmatpush1.bf16.msra.mxu0 %v4934
    %5249 = vmatprep.subr.bf16.mxu0 %v4939
    %5250 = vmatpush1.bf16.msra.mxu0 %v4938
    %5251 = vmatprep.subr.bf16.mxu0 %v4943
    %5252 = vmatpush1.bf16.msra.mxu0 %v4942
    %5253 = vmatprep.subr.bf16.mxu0 %v4947
    %5254 = vmatpush1.bf16.msra.mxu0 %v4946
    %5255 = vmatprep.subr.bf16.mxu0 %v4951
    %5256 = vmatpush1.bf16.msra.mxu0 %v4950
    %5257 = vmatprep.subr.bf16.mxu0 %v4955
    %5258 = vmatpush1.bf16.msra.mxu0 %v4954
    %5259 = vmatprep.subr.bf16.mxu0 %v4959
    %5260 = vmatpush1.bf16.msra.mxu0 %v4958
    %5261 = vmatprep.subr.bf16.mxu0 %v4963
    %5262 = vmatpush1.bf16.msra.mxu0 %v4962
    %5263 = vmatprep.subr.bf16.mxu0 %v4967
    %5264 = vmatpush1.bf16.msra.mxu0 %v4966
    %5265 = vmatprep.subr.bf16.mxu0 %v4971
    %5266 = vmatpush1.bf16.msra.mxu0 %v4970
    %5267 = vmatprep.subr.bf16.mxu0 %v4975
    %5268 = vmatpush1.bf16.msra.mxu0 %v4974
    %5269 = vmatprep.subr.bf16.mxu0 %v4979
    %5270 = vmatpush1.bf16.msra.mxu0 %v4978
    %5271 = vmatprep.subr.bf16.mxu0 %v4983
    %5272 = vmatpush1.bf16.msra.mxu0 %v4982
    %5273 = vmatprep.subr.bf16.mxu0 %v4987
    %5274 = vmatpush1.bf16.msra.mxu0 %v4986
    %5275 = vmatprep.subr.bf16.mxu0 %v4991
    %5276 = vmatpush1.bf16.msra.mxu0 %v4990
    %5277 = vmatprep.subr.bf16.mxu0 %v4995
    %5278 = vmatpush1.bf16.msra.mxu0 %v4994
    %5279 = vmatprep.mubr.bf16.mxu0 %v4460
    %5280 = vmatmul.mubr.bf16.gmra.mrb[0].mxu0 %v4459
    %v5281 = vpop.f32.mrb[0].mxu0
    %v5282 = vadd.f32 %v5241, %v5281
    %v5283 = vpop.f32.mrb[0].mxu0
    %v5284 = vadd.f32 %v5243, %v5283
    %v5285 = vpop.f32.mrb[0].mxu0
    %v5286 = vpop.f32.mrb[0].mxu0
    %5287 = vdwg.mxu0
    %v5288 = vmax.f32 %v5200, 0.0
    %v5289 = vmax.f32 %v5202, 0.0
    %v5290 = vmax.f32 %v5282, 0.0
    %v5291 = vmax.f32 %v5284, 0.0
    %v5292 = vpack.c.bf16 %v5288, %v5288
    %v5293 = vpack.c.bf16 %v5289, %v5289
    %v5294 = vpack.c.bf16 %v5290, %v5290
    %v5295 = vpack.c.bf16 %v5291, %v5291
    %s5296 = scalar_lea.vmem %s6, 4
    %v5297 = vld [vmem:[%s5296] ss:$8 sm:$0xf]
    %v5298 = vld [vmem:[%s5296] ss:$8 sm:$0xf0]
    %v5299 = vor.u32 %v5297, %v5298
    %v5301 = vlaneseq
    %v5302 = vshrl.u32 %v5301, 7
    %v5303 = vsub.s32 0, %v5302
    %v5304 = vrot.slane %v5299, %v5303
    %v5305 = vlaneseq
    %v5306 = vshrl.u32 %v5305, 7
    %v5307 = vsub.s32 1, %v5306
    %v5308 = vrot.slane %v5299, %v5307
    %v5309 = vlaneseq
    %v5310 = vshrl.u32 %v5309, 7
    %v5311 = vsub.s32 2, %v5310
    %v5312 = vrot.slane %v5299, %v5311
    %v5313 = vlaneseq
    %v5314 = vshrl.u32 %v5313, 7
    %v5315 = vsub.s32 3, %v5314
    %v5316 = vrot.slane %v5299, %v5315
    %v5317 = vlaneseq
    %v5318 = vshrl.u32 %v5317, 7
    %v5319 = vsub.s32 4, %v5318
    %v5320 = vrot.slane %v5299, %v5319
    %v5321 = vlaneseq
    %v5322 = vshrl.u32 %v5321, 7
    %v5323 = vsub.s32 5, %v5322
    %v5324 = vrot.slane %v5299, %v5323
    %v5325 = vlaneseq
    %v5326 = vshrl.u32 %v5325, 7
    %v5327 = vsub.s32 6, %v5326
    %v5328 = vrot.slane %v5299, %v5327
    %v5329 = vlaneseq
    %v5330 = vshrl.u32 %v5329, 7
    %v5331 = vsub.s32 7, %v5330
    %v5332 = vrot.slane %v5299, %v5331
    %v5597 = vunpack.c.l.b16 %v737
    %v5598 = vunpack.c.h.b16 %v737
    %v5599 = vunpack.c.l.b16 %v738
    %v5600 = vunpack.c.h.b16 %v738
    %v5601 = vunpack.c.l.b16 %v739
    %v5602 = vunpack.c.h.b16 %v739
    %v5603 = vunpack.c.l.b16 %v740
    %v5604 = vunpack.c.h.b16 %v740
    %v5605 = vunpack.c.l.b16 %v741
    %v5606 = vunpack.c.h.b16 %v741
    %v5607 = vunpack.c.l.b16 %v742
    %v5608 = vunpack.c.h.b16 %v742
    %v5609 = vunpack.c.l.b16 %v743
    %v5610 = vunpack.c.h.b16 %v743
    %v5611 = vunpack.c.l.b16 %v744
    %v5612 = vunpack.c.h.b16 %v744
    %v5613 = vunpack.c.l.b16 %v745
    %v5614 = vunpack.c.h.b16 %v745
    %v5615 = vunpack.c.l.b16 %v746
    %v5616 = vunpack.c.h.b16 %v746
    %v5617 = vunpack.c.l.b16 %v747
    %v5618 = vunpack.c.h.b16 %v747
    %v5619 = vunpack.c.l.b16 %v748
    %v5620 = vunpack.c.h.b16 %v748
    %v5621 = vunpack.c.l.b16 %v749
    %v5622 = vunpack.c.h.b16 %v749
    %v5623 = vunpack.c.l.b16 %v750
    %v5624 = vunpack.c.h.b16 %v750
    %v5625 = vunpack.c.l.b16 %v751
    %v5626 = vunpack.c.h.b16 %v751
    %v5627 = vunpack.c.l.b16 %v752
    %v5628 = vunpack.c.h.b16 %v752
    %v5629 = vunpack.c.l.b16 %v753
    %v5630 = vunpack.c.h.b16 %v753
    %v5631 = vunpack.c.l.b16 %v754
    %v5632 = vunpack.c.h.b16 %v754
    %v5633 = vunpack.c.l.b16 %v755
    %v5634 = vunpack.c.h.b16 %v755
    %v5635 = vunpack.c.l.b16 %v756
    %v5636 = vunpack.c.h.b16 %v756
    %v5637 = vunpack.c.l.b16 %v757
    %v5638 = vunpack.c.h.b16 %v757
    %v5639 = vunpack.c.l.b16 %v758
    %v5640 = vunpack.c.h.b16 %v758
    %v5641 = vunpack.c.l.b16 %v759
    %v5642 = vunpack.c.h.b16 %v759
    %v5643 = vunpack.c.l.b16 %v760
    %v5644 = vunpack.c.h.b16 %v760
    %v5645 = vunpack.c.l.b16 %v761
    %v5646 = vunpack.c.h.b16 %v761
    %v5647 = vunpack.c.l.b16 %v762
    %v5648 = vunpack.c.h.b16 %v762
    %v5649 = vunpack.c.l.b16 %v763
    %v5650 = vunpack.c.h.b16 %v763
    %v5651 = vunpack.c.l.b16 %v764
    %v5652 = vunpack.c.h.b16 %v764
    %v5653 = vunpack.c.l.b16 %v765
    %v5654 = vunpack.c.h.b16 %v765
    %v5655 = vunpack.c.l.b16 %v766
    %v5656 = vunpack.c.h.b16 %v766
    %v5657 = vunpack.c.l.b16 %v767
    %v5658 = vunpack.c.h.b16 %v767
    %v5659 = vunpack.c.l.b16 %v768
    %v5660 = vunpack.c.h.b16 %v768
    %v5661 = vunpack.c.l.b16 %v769
    %v5662 = vunpack.c.h.b16 %v769
    %v5663 = vunpack.c.l.b16 %v770
    %v5664 = vunpack.c.h.b16 %v770
    %v5665 = vunpack.c.l.b16 %v771
    %v5666 = vunpack.c.h.b16 %v771
    %v5667 = vunpack.c.l.b16 %v772
    %v5668 = vunpack.c.h.b16 %v772
    %v5669 = vunpack.c.l.b16 %v773
    %v5670 = vunpack.c.h.b16 %v773
    %v5671 = vunpack.c.l.b16 %v774
    %v5672 = vunpack.c.h.b16 %v774
    %v5673 = vunpack.c.l.b16 %v775
    %v5674 = vunpack.c.h.b16 %v775
    %v5675 = vunpack.c.l.b16 %v776
    %v5676 = vunpack.c.h.b16 %v776
    %v5677 = vunpack.c.l.b16 %v777
    %v5678 = vunpack.c.h.b16 %v777
    %v5679 = vunpack.c.l.b16 %v778
    %v5680 = vunpack.c.h.b16 %v778
    %v5681 = vunpack.c.l.b16 %v779
    %v5682 = vunpack.c.h.b16 %v779
    %v5683 = vunpack.c.l.b16 %v780
    %v5684 = vunpack.c.h.b16 %v780
    %v5685 = vunpack.c.l.b16 %v781
    %v5686 = vunpack.c.h.b16 %v781
    %v5687 = vunpack.c.l.b16 %v782
    %v5688 = vunpack.c.h.b16 %v782
    %v5689 = vunpack.c.l.b16 %v783
    %v5690 = vunpack.c.h.b16 %v783
    %v5691 = vunpack.c.l.b16 %v784
    %v5692 = vunpack.c.h.b16 %v784
    %v5693 = vunpack.c.l.b16 %v785
    %v5694 = vunpack.c.h.b16 %v785
    %v5695 = vunpack.c.l.b16 %v786
    %v5696 = vunpack.c.h.b16 %v786
    %v5697 = vunpack.c.l.b16 %v787
    %v5698 = vunpack.c.h.b16 %v787
    %v5699 = vunpack.c.l.b16 %v788
    %v5700 = vunpack.c.h.b16 %v788
    %v5701 = vunpack.c.l.b16 %v789
    %v5702 = vunpack.c.h.b16 %v789
    %v5703 = vunpack.c.l.b16 %v790
    %v5704 = vunpack.c.h.b16 %v790
    %v5705 = vunpack.c.l.b16 %v791
    %v5706 = vunpack.c.h.b16 %v791
    %v5707 = vunpack.c.l.b16 %v792
    %v5708 = vunpack.c.h.b16 %v792
    %v5709 = vunpack.c.l.b16 %v793
    %v5710 = vunpack.c.h.b16 %v793
    %v5711 = vunpack.c.l.b16 %v794
    %v5712 = vunpack.c.h.b16 %v794
    %v5713 = vunpack.c.l.b16 %v795
    %v5714 = vunpack.c.h.b16 %v795
    %v5715 = vunpack.c.l.b16 %v796
    %v5716 = vunpack.c.h.b16 %v796
    %v5717 = vunpack.c.l.b16 %v797
    %v5718 = vunpack.c.h.b16 %v797
    %v5719 = vunpack.c.l.b16 %v798
    %v5720 = vunpack.c.h.b16 %v798
    %v5721 = vunpack.c.l.b16 %v799
    %v5722 = vunpack.c.h.b16 %v799
    %v5723 = vunpack.c.l.b16 %v800
    %v5724 = vunpack.c.h.b16 %v800
    %v5725 = vunpack.c.l.b16 %v801
    %v5726 = vunpack.c.h.b16 %v801
    %v5727 = vunpack.c.l.b16 %v802
    %v5728 = vunpack.c.h.b16 %v802
    %v5729 = vunpack.c.l.b16 %v803
    %v5730 = vunpack.c.h.b16 %v803
    %v5731 = vunpack.c.l.b16 %v804
    %v5732 = vunpack.c.h.b16 %v804
    %v5733 = vunpack.c.l.b16 %v805
    %v5734 = vunpack.c.h.b16 %v805
    %v5735 = vunpack.c.l.b16 %v806
    %v5736 = vunpack.c.h.b16 %v806
    %v5737 = vunpack.c.l.b16 %v807
    %v5738 = vunpack.c.h.b16 %v807
    %v5739 = vunpack.c.l.b16 %v808
    %v5740 = vunpack.c.h.b16 %v808
    %v5741 = vunpack.c.l.b16 %v809
    %v5742 = vunpack.c.h.b16 %v809
    %v5743 = vunpack.c.l.b16 %v810
    %v5744 = vunpack.c.h.b16 %v810
    %v5745 = vunpack.c.l.b16 %v811
    %v5746 = vunpack.c.h.b16 %v811
    %v5747 = vunpack.c.l.b16 %v812
    %v5748 = vunpack.c.h.b16 %v812
    %v5749 = vunpack.c.l.b16 %v813
    %v5750 = vunpack.c.h.b16 %v813
    %v5751 = vunpack.c.l.b16 %v814
    %v5752 = vunpack.c.h.b16 %v814
    %v5753 = vunpack.c.l.b16 %v815
    %v5754 = vunpack.c.h.b16 %v815
    %v5755 = vunpack.c.l.b16 %v816
    %v5756 = vunpack.c.h.b16 %v816
    %v5757 = vunpack.c.l.b16 %v817
    %v5758 = vunpack.c.h.b16 %v817
    %v5759 = vunpack.c.l.b16 %v818
    %v5760 = vunpack.c.h.b16 %v818
    %v5761 = vunpack.c.l.b16 %v819
    %v5762 = vunpack.c.h.b16 %v819
    %v5763 = vunpack.c.l.b16 %v820
    %v5764 = vunpack.c.h.b16 %v820
    %v5765 = vunpack.c.l.b16 %v821
    %v5766 = vunpack.c.h.b16 %v821
    %v5767 = vunpack.c.l.b16 %v822
    %v5768 = vunpack.c.h.b16 %v822
    %v5769 = vunpack.c.l.b16 %v823
    %v5770 = vunpack.c.h.b16 %v823
    %v5771 = vunpack.c.l.b16 %v824
    %v5772 = vunpack.c.h.b16 %v824
    %v5773 = vunpack.c.l.b16 %v825
    %v5774 = vunpack.c.h.b16 %v825
    %v5775 = vunpack.c.l.b16 %v826
    %v5776 = vunpack.c.h.b16 %v826
    %v5777 = vunpack.c.l.b16 %v827
    %v5778 = vunpack.c.h.b16 %v827
    %v5779 = vunpack.c.l.b16 %v828
    %v5780 = vunpack.c.h.b16 %v828
    %v5781 = vunpack.c.l.b16 %v829
    %v5782 = vunpack.c.h.b16 %v829
    %v5783 = vunpack.c.l.b16 %v830
    %v5784 = vunpack.c.h.b16 %v830
    %v5785 = vunpack.c.l.b16 %v831
    %v5786 = vunpack.c.h.b16 %v831
    %v5787 = vunpack.c.l.b16 %v832
    %v5788 = vunpack.c.h.b16 %v832
    %v5789 = vunpack.c.l.b16 %v833
    %v5790 = vunpack.c.h.b16 %v833
    %v5791 = vunpack.c.l.b16 %v834
    %v5792 = vunpack.c.h.b16 %v834
    %v5793 = vunpack.c.l.b16 %v835
    %v5794 = vunpack.c.h.b16 %v835
    %v5795 = vunpack.c.l.b16 %v836
    %v5796 = vunpack.c.h.b16 %v836
    %v5797 = vunpack.c.l.b16 %v837
    %v5798 = vunpack.c.h.b16 %v837
    %v5799 = vunpack.c.l.b16 %v838
    %v5800 = vunpack.c.h.b16 %v838
    %v5801 = vunpack.c.l.b16 %v839
    %v5802 = vunpack.c.h.b16 %v839
    %v5803 = vunpack.c.l.b16 %v840
    %v5804 = vunpack.c.h.b16 %v840
    %v5805 = vunpack.c.l.b16 %v841
    %v5806 = vunpack.c.h.b16 %v841
    %v5807 = vunpack.c.l.b16 %v842
    %v5808 = vunpack.c.h.b16 %v842
    %v5809 = vunpack.c.l.b16 %v843
    %v5810 = vunpack.c.h.b16 %v843
    %v5811 = vunpack.c.l.b16 %v844
    %v5812 = vunpack.c.h.b16 %v844
    %v5813 = vunpack.c.l.b16 %v845
    %v5814 = vunpack.c.h.b16 %v845
    %v5815 = vunpack.c.l.b16 %v846
    %v5816 = vunpack.c.h.b16 %v846
    %v5817 = vunpack.c.l.b16 %v847
    %v5818 = vunpack.c.h.b16 %v847
    %v5819 = vunpack.c.l.b16 %v848
    %v5820 = vunpack.c.h.b16 %v848
    %v5821 = vunpack.c.l.b16 %v849
    %v5822 = vunpack.c.h.b16 %v849
    %v5823 = vunpack.c.l.b16 %v850
    %v5824 = vunpack.c.h.b16 %v850
    %v5825 = vunpack.c.l.b16 %v851
    %v5826 = vunpack.c.h.b16 %v851
    %v5827 = vunpack.c.l.b16 %v852
    %v5828 = vunpack.c.h.b16 %v852
    %v5829 = vunpack.c.l.b16 %v853
    %v5830 = vunpack.c.h.b16 %v853
    %v5831 = vunpack.c.l.b16 %v854
    %v5832 = vunpack.c.h.b16 %v854
    %v5833 = vunpack.c.l.b16 %v855
    %v5834 = vunpack.c.h.b16 %v855
    %v5835 = vunpack.c.l.b16 %v856
    %v5836 = vunpack.c.h.b16 %v856
    %v5837 = vunpack.c.l.b16 %v857
    %v5838 = vunpack.c.h.b16 %v857
    %v5839 = vunpack.c.l.b16 %v858
    %v5840 = vunpack.c.h.b16 %v858
    %v5841 = vunpack.c.l.b16 %v859
    %v5842 = vunpack.c.h.b16 %v859
    %v5843 = vunpack.c.l.b16 %v860
    %v5844 = vunpack.c.h.b16 %v860
    %v5845 = vunpack.c.l.b16 %v861
    %v5846 = vunpack.c.h.b16 %v861
    %v5847 = vunpack.c.l.b16 %v862
    %v5848 = vunpack.c.h.b16 %v862
    %v5849 = vunpack.c.l.b16 %v863
    %v5850 = vunpack.c.h.b16 %v863
    %v5851 = vunpack.c.l.b16 %v864
    %v5852 = vunpack.c.h.b16 %v864
    %v5853 = vunpack.c.l.b16 %v865
    %v5854 = vunpack.c.h.b16 %v865
    %v5855 = vunpack.c.l.b16 %v866
    %v5856 = vunpack.c.h.b16 %v866
    %v5857 = vunpack.c.l.b16 %v867
    %v5858 = vunpack.c.h.b16 %v867
    %v5859 = vunpack.c.l.b16 %v868
    %v5860 = vunpack.c.h.b16 %v868
    %v5861 = vunpack.c.l.b16 %v869
    %v5862 = vunpack.c.h.b16 %v869
    %v5863 = vunpack.c.l.b16 %v870
    %v5864 = vunpack.c.h.b16 %v870
    %v5865 = vunpack.c.l.b16 %v871
    %v5866 = vunpack.c.h.b16 %v871
    %v5867 = vunpack.c.l.b16 %v872
    %v5868 = vunpack.c.h.b16 %v872
    %v5869 = vunpack.c.l.b16 %v873
    %v5870 = vunpack.c.h.b16 %v873
    %v5871 = vunpack.c.l.b16 %v874
    %v5872 = vunpack.c.h.b16 %v874
    %v5873 = vunpack.c.l.b16 %v875
    %v5874 = vunpack.c.h.b16 %v875
    %v5875 = vunpack.c.l.b16 %v876
    %v5876 = vunpack.c.h.b16 %v876
    %v5877 = vunpack.c.l.b16 %v877
    %v5878 = vunpack.c.h.b16 %v877
    %v5879 = vunpack.c.l.b16 %v878
    %v5880 = vunpack.c.h.b16 %v878
    %v5881 = vunpack.c.l.b16 %v879
    %v5882 = vunpack.c.h.b16 %v879
    %v5883 = vunpack.c.l.b16 %v880
    %v5884 = vunpack.c.h.b16 %v880
    %v5885 = vunpack.c.l.b16 %v881
    %v5886 = vunpack.c.h.b16 %v881
    %v5887 = vunpack.c.l.b16 %v882
    %v5888 = vunpack.c.h.b16 %v882
    %v5889 = vunpack.c.l.b16 %v883
    %v5890 = vunpack.c.h.b16 %v883
    %v5891 = vunpack.c.l.b16 %v884
    %v5892 = vunpack.c.h.b16 %v884
    %v5893 = vunpack.c.l.b16 %v885
    %v5894 = vunpack.c.h.b16 %v885
    %v5895 = vunpack.c.l.b16 %v886
    %v5896 = vunpack.c.h.b16 %v886
    %v5897 = vunpack.c.l.b16 %v887
    %v5898 = vunpack.c.h.b16 %v887
    %v5899 = vunpack.c.l.b16 %v888
    %v5900 = vunpack.c.h.b16 %v888
    %v5901 = vunpack.c.l.b16 %v889
    %v5902 = vunpack.c.h.b16 %v889
    %v5903 = vunpack.c.l.b16 %v890
    %v5904 = vunpack.c.h.b16 %v890
    %v5905 = vunpack.c.l.b16 %v891
    %v5906 = vunpack.c.h.b16 %v891
    %v5907 = vunpack.c.l.b16 %v892
    %v5908 = vunpack.c.h.b16 %v892
    %v5909 = vunpack.c.l.b16 %v893
    %v5910 = vunpack.c.h.b16 %v893
    %v5911 = vunpack.c.l.b16 %v894
    %v5912 = vunpack.c.h.b16 %v894
    %v5913 = vunpack.c.l.b16 %v895
    %v5914 = vunpack.c.h.b16 %v895
    %v5915 = vunpack.c.l.b16 %v896
    %v5916 = vunpack.c.h.b16 %v896
    %v5917 = vunpack.c.l.b16 %v897
    %v5918 = vunpack.c.h.b16 %v897
    %v5919 = vunpack.c.l.b16 %v898
    %v5920 = vunpack.c.h.b16 %v898
    %v5921 = vunpack.c.l.b16 %v899
    %v5922 = vunpack.c.h.b16 %v899
    %v5923 = vunpack.c.l.b16 %v900
    %v5924 = vunpack.c.h.b16 %v900
    %v5925 = vunpack.c.l.b16 %v901
    %v5926 = vunpack.c.h.b16 %v901
    %v5927 = vunpack.c.l.b16 %v902
    %v5928 = vunpack.c.h.b16 %v902
    %v5929 = vunpack.c.l.b16 %v903
    %v5930 = vunpack.c.h.b16 %v903
    %v5931 = vunpack.c.l.b16 %v904
    %v5932 = vunpack.c.h.b16 %v904
    %v5933 = vunpack.c.l.b16 %v905
    %v5934 = vunpack.c.h.b16 %v905
    %v5935 = vunpack.c.l.b16 %v906
    %v5936 = vunpack.c.h.b16 %v906
    %v5937 = vunpack.c.l.b16 %v907
    %v5938 = vunpack.c.h.b16 %v907
    %v5939 = vunpack.c.l.b16 %v908
    %v5940 = vunpack.c.h.b16 %v908
    %v5941 = vunpack.c.l.b16 %v909
    %v5942 = vunpack.c.h.b16 %v909
    %v5943 = vunpack.c.l.b16 %v910
    %v5944 = vunpack.c.h.b16 %v910
    %v5945 = vunpack.c.l.b16 %v911
    %v5946 = vunpack.c.h.b16 %v911
    %v5947 = vunpack.c.l.b16 %v912
    %v5948 = vunpack.c.h.b16 %v912
    %v5949 = vunpack.c.l.b16 %v913
    %v5950 = vunpack.c.h.b16 %v913
    %v5951 = vunpack.c.l.b16 %v914
    %v5952 = vunpack.c.h.b16 %v914
    %v5953 = vunpack.c.l.b16 %v915
    %v5954 = vunpack.c.h.b16 %v915
    %v5955 = vunpack.c.l.b16 %v916
    %v5956 = vunpack.c.h.b16 %v916
    %v5957 = vunpack.c.l.b16 %v917
    %v5958 = vunpack.c.h.b16 %v917
    %v5959 = vunpack.c.l.b16 %v918
    %v5960 = vunpack.c.h.b16 %v918
    %v5961 = vunpack.c.l.b16 %v919
    %v5962 = vunpack.c.h.b16 %v919
    %v5963 = vunpack.c.l.b16 %v920
    %v5964 = vunpack.c.h.b16 %v920
    %v5965 = vunpack.c.l.b16 %v921
    %v5966 = vunpack.c.h.b16 %v921
    %v5967 = vunpack.c.l.b16 %v922
    %v5968 = vunpack.c.h.b16 %v922
    %v5969 = vunpack.c.l.b16 %v923
    %v5970 = vunpack.c.h.b16 %v923
    %v5971 = vunpack.c.l.b16 %v924
    %v5972 = vunpack.c.h.b16 %v924
    %v5973 = vunpack.c.l.b16 %v925
    %v5974 = vunpack.c.h.b16 %v925
    %v5975 = vunpack.c.l.b16 %v926
    %v5976 = vunpack.c.h.b16 %v926
    %v5977 = vunpack.c.l.b16 %v927
    %v5978 = vunpack.c.h.b16 %v927
    %v5979 = vunpack.c.l.b16 %v928
    %v5980 = vunpack.c.h.b16 %v928
    %v5981 = vunpack.c.l.b16 %v929
    %v5982 = vunpack.c.h.b16 %v929
    %v5983 = vunpack.c.l.b16 %v930
    %v5984 = vunpack.c.h.b16 %v930
    %v5985 = vunpack.c.l.b16 %v931
    %v5986 = vunpack.c.h.b16 %v931
    %v5987 = vunpack.c.l.b16 %v932
    %v5988 = vunpack.c.h.b16 %v932
    %v5989 = vunpack.c.l.b16 %v933
    %v5990 = vunpack.c.h.b16 %v933
    %v5991 = vunpack.c.l.b16 %v934
    %v5992 = vunpack.c.h.b16 %v934
    %v5993 = vunpack.c.l.b16 %v935
    %v5994 = vunpack.c.h.b16 %v935
    %v5995 = vunpack.c.l.b16 %v936
    %v5996 = vunpack.c.h.b16 %v936
    %v5997 = vunpack.c.l.b16 %v937
    %v5998 = vunpack.c.h.b16 %v937
    %v5999 = vunpack.c.l.b16 %v938
    %v6000 = vunpack.c.h.b16 %v938
    %v6001 = vunpack.c.l.b16 %v939
    %v6002 = vunpack.c.h.b16 %v939
    %v6003 = vunpack.c.l.b16 %v940
    %v6004 = vunpack.c.h.b16 %v940
    %v6005 = vunpack.c.l.b16 %v941
    %v6006 = vunpack.c.h.b16 %v941
    %v6007 = vunpack.c.l.b16 %v942
    %v6008 = vunpack.c.h.b16 %v942
    %v6009 = vunpack.c.l.b16 %v943
    %v6010 = vunpack.c.h.b16 %v943
    %v6011 = vunpack.c.l.b16 %v944
    %v6012 = vunpack.c.h.b16 %v944
    %v6013 = vunpack.c.l.b16 %v945
    %v6014 = vunpack.c.h.b16 %v945
    %v6015 = vunpack.c.l.b16 %v946
    %v6016 = vunpack.c.h.b16 %v946
    %v6017 = vunpack.c.l.b16 %v947
    %v6018 = vunpack.c.h.b16 %v947
    %v6019 = vunpack.c.l.b16 %v948
    %v6020 = vunpack.c.h.b16 %v948
    %v6021 = vunpack.c.l.b16 %v949
    %v6022 = vunpack.c.h.b16 %v949
    %v6023 = vunpack.c.l.b16 %v950
    %v6024 = vunpack.c.h.b16 %v950
    %v6025 = vunpack.c.l.b16 %v951
    %v6026 = vunpack.c.h.b16 %v951
    %v6027 = vunpack.c.l.b16 %v952
    %v6028 = vunpack.c.h.b16 %v952
    %v6029 = vunpack.c.l.b16 %v953
    %v6030 = vunpack.c.h.b16 %v953
    %v6031 = vunpack.c.l.b16 %v954
    %v6032 = vunpack.c.h.b16 %v954
    %v6033 = vunpack.c.l.b16 %v955
    %v6034 = vunpack.c.h.b16 %v955
    %v6035 = vunpack.c.l.b16 %v956
    %v6036 = vunpack.c.h.b16 %v956
    %v6037 = vunpack.c.l.b16 %v957
    %v6038 = vunpack.c.h.b16 %v957
    %v6039 = vunpack.c.l.b16 %v958
    %v6040 = vunpack.c.h.b16 %v958
    %v6041 = vunpack.c.l.b16 %v959
    %v6042 = vunpack.c.h.b16 %v959
    %v6043 = vunpack.c.l.b16 %v960
    %v6044 = vunpack.c.h.b16 %v960
    %v6045 = vunpack.c.l.b16 %v961
    %v6046 = vunpack.c.h.b16 %v961
    %v6047 = vunpack.c.l.b16 %v962
    %v6048 = vunpack.c.h.b16 %v962
    %v6049 = vunpack.c.l.b16 %v963
    %v6050 = vunpack.c.h.b16 %v963
    %v6051 = vunpack.c.l.b16 %v964
    %v6052 = vunpack.c.h.b16 %v964
    %v6053 = vunpack.c.l.b16 %v965
    %v6054 = vunpack.c.h.b16 %v965
    %v6055 = vunpack.c.l.b16 %v966
    %v6056 = vunpack.c.h.b16 %v966
    %v6057 = vunpack.c.l.b16 %v967
    %v6058 = vunpack.c.h.b16 %v967
    %v6059 = vunpack.c.l.b16 %v968
    %v6060 = vunpack.c.h.b16 %v968
    %v6061 = vunpack.c.l.b16 %v969
    %v6062 = vunpack.c.h.b16 %v969
    %v6063 = vunpack.c.l.b16 %v970
    %v6064 = vunpack.c.h.b16 %v970
    %v6065 = vunpack.c.l.b16 %v971
    %v6066 = vunpack.c.h.b16 %v971
    %v6067 = vunpack.c.l.b16 %v972
    %v6068 = vunpack.c.h.b16 %v972
    %v6069 = vunpack.c.l.b16 %v973
    %v6070 = vunpack.c.h.b16 %v973
    %v6071 = vunpack.c.l.b16 %v974
    %v6072 = vunpack.c.h.b16 %v974
    %v6073 = vunpack.c.l.b16 %v975
    %v6074 = vunpack.c.h.b16 %v975
    %v6075 = vunpack.c.l.b16 %v976
    %v6076 = vunpack.c.h.b16 %v976
    %v6077 = vunpack.c.l.b16 %v977
    %v6078 = vunpack.c.h.b16 %v977
    %v6079 = vunpack.c.l.b16 %v978
    %v6080 = vunpack.c.h.b16 %v978
    %v6081 = vunpack.c.l.b16 %v979
    %v6082 = vunpack.c.h.b16 %v979
    %v6083 = vunpack.c.l.b16 %v980
    %v6084 = vunpack.c.h.b16 %v980
    %v6085 = vunpack.c.l.b16 %v981
    %v6086 = vunpack.c.h.b16 %v981
    %v6087 = vunpack.c.l.b16 %v982
    %v6088 = vunpack.c.h.b16 %v982
    %v6089 = vunpack.c.l.b16 %v983
    %v6090 = vunpack.c.h.b16 %v983
    %v6091 = vunpack.c.l.b16 %v984
    %v6092 = vunpack.c.h.b16 %v984
    %v6093 = vunpack.c.l.b16 %v985
    %v6094 = vunpack.c.h.b16 %v985
    %v6095 = vunpack.c.l.b16 %v986
    %v6096 = vunpack.c.h.b16 %v986
    %v6097 = vunpack.c.l.b16 %v987
    %v6098 = vunpack.c.h.b16 %v987
    %v6099 = vunpack.c.l.b16 %v988
    %v6100 = vunpack.c.h.b16 %v988
    %v6101 = vunpack.c.l.b16 %v989
    %v6102 = vunpack.c.h.b16 %v989
    %v6103 = vunpack.c.l.b16 %v990
    %v6104 = vunpack.c.h.b16 %v990
    %v6105 = vunpack.c.l.b16 %v991
    %v6106 = vunpack.c.h.b16 %v991
    %v6107 = vunpack.c.l.b16 %v992
    %v6108 = vunpack.c.h.b16 %v992
    %v6109 = vpack.c.b16 %v5605, %v5597
    %v6110 = vpack.c.b16 %v5606, %v5598
    %v6111 = vpack.c.b16 %v5607, %v5599
    %v6112 = vpack.c.b16 %v5608, %v5600
    %v6113 = vpack.c.b16 %v5609, %v5601
    %v6114 = vpack.c.b16 %v5610, %v5602
    %v6115 = vpack.c.b16 %v5611, %v5603
    %v6116 = vpack.c.b16 %v5612, %v5604
    %v6117 = vpack.c.b16 %v5621, %v5613
    %v6118 = vpack.c.b16 %v5622, %v5614
    %v6119 = vpack.c.b16 %v5623, %v5615
    %v6120 = vpack.c.b16 %v5624, %v5616
    %v6121 = vpack.c.b16 %v5625, %v5617
    %v6122 = vpack.c.b16 %v5626, %v5618
    %v6123 = vpack.c.b16 %v5627, %v5619
    %v6124 = vpack.c.b16 %v5628, %v5620
    %v6125 = vpack.c.b16 %v5637, %v5629
    %v6126 = vpack.c.b16 %v5638, %v5630
    %v6127 = vpack.c.b16 %v5639, %v5631
    %v6128 = vpack.c.b16 %v5640, %v5632
    %v6129 = vpack.c.b16 %v5641, %v5633
    %v6130 = vpack.c.b16 %v5642, %v5634
    %v6131 = vpack.c.b16 %v5643, %v5635
    %v6132 = vpack.c.b16 %v5644, %v5636
    %v6133 = vpack.c.b16 %v5653, %v5645
    %v6134 = vpack.c.b16 %v5654, %v5646
    %v6135 = vpack.c.b16 %v5655, %v5647
    %v6136 = vpack.c.b16 %v5656, %v5648
    %v6137 = vpack.c.b16 %v5657, %v5649
    %v6138 = vpack.c.b16 %v5658, %v5650
    %v6139 = vpack.c.b16 %v5659, %v5651
    %v6140 = vpack.c.b16 %v5660, %v5652
    %v6141 = vpack.c.b16 %v5669, %v5661
    %v6142 = vpack.c.b16 %v5670, %v5662
    %v6143 = vpack.c.b16 %v5671, %v5663
    %v6144 = vpack.c.b16 %v5672, %v5664
    %v6145 = vpack.c.b16 %v5673, %v5665
    %v6146 = vpack.c.b16 %v5674, %v5666
    %v6147 = vpack.c.b16 %v5675, %v5667
    %v6148 = vpack.c.b16 %v5676, %v5668
    %v6149 = vpack.c.b16 %v5685, %v5677
    %v6150 = vpack.c.b16 %v5686, %v5678
    %v6151 = vpack.c.b16 %v5687, %v5679
    %v6152 = vpack.c.b16 %v5688, %v5680
    %v6153 = vpack.c.b16 %v5689, %v5681
    %v6154 = vpack.c.b16 %v5690, %v5682
    %v6155 = vpack.c.b16 %v5691, %v5683
    %v6156 = vpack.c.b16 %v5692, %v5684
    %v6157 = vpack.c.b16 %v5701, %v5693
    %v6158 = vpack.c.b16 %v5702, %v5694
    %v6159 = vpack.c.b16 %v5703, %v5695
    %v6160 = vpack.c.b16 %v5704, %v5696
    %v6161 = vpack.c.b16 %v5705, %v5697
    %v6162 = vpack.c.b16 %v5706, %v5698
    %v6163 = vpack.c.b16 %v5707, %v5699
    %v6164 = vpack.c.b16 %v5708, %v5700
    %v6165 = vpack.c.b16 %v5717, %v5709
    %v6166 = vpack.c.b16 %v5718, %v5710
    %v6167 = vpack.c.b16 %v5719, %v5711
    %v6168 = vpack.c.b16 %v5720, %v5712
    %v6169 = vpack.c.b16 %v5721, %v5713
    %v6170 = vpack.c.b16 %v5722, %v5714
    %v6171 = vpack.c.b16 %v5723, %v5715
    %v6172 = vpack.c.b16 %v5724, %v5716
    %v6173 = vpack.c.b16 %v5733, %v5725
    %v6174 = vpack.c.b16 %v5734, %v5726
    %v6175 = vpack.c.b16 %v5735, %v5727
    %v6176 = vpack.c.b16 %v5736, %v5728
    %v6177 = vpack.c.b16 %v5737, %v5729
    %v6178 = vpack.c.b16 %v5738, %v5730
    %v6179 = vpack.c.b16 %v5739, %v5731
    %v6180 = vpack.c.b16 %v5740, %v5732
    %v6181 = vpack.c.b16 %v5749, %v5741
    %v6182 = vpack.c.b16 %v5750, %v5742
    %v6183 = vpack.c.b16 %v5751, %v5743
    %v6184 = vpack.c.b16 %v5752, %v5744
    %v6185 = vpack.c.b16 %v5753, %v5745
    %v6186 = vpack.c.b16 %v5754, %v5746
    %v6187 = vpack.c.b16 %v5755, %v5747
    %v6188 = vpack.c.b16 %v5756, %v5748
    %v6189 = vpack.c.b16 %v5765, %v5757
    %v6190 = vpack.c.b16 %v5766, %v5758
    %v6191 = vpack.c.b16 %v5767, %v5759
    %v6192 = vpack.c.b16 %v5768, %v5760
    %v6193 = vpack.c.b16 %v5769, %v5761
    %v6194 = vpack.c.b16 %v5770, %v5762
    %v6195 = vpack.c.b16 %v5771, %v5763
    %v6196 = vpack.c.b16 %v5772, %v5764
    %v6197 = vpack.c.b16 %v5781, %v5773
    %v6198 = vpack.c.b16 %v5782, %v5774
    %v6199 = vpack.c.b16 %v5783, %v5775
    %v6200 = vpack.c.b16 %v5784, %v5776
    %v6201 = vpack.c.b16 %v5785, %v5777
    %v6202 = vpack.c.b16 %v5786, %v5778
    %v6203 = vpack.c.b16 %v5787, %v5779
    %v6204 = vpack.c.b16 %v5788, %v5780
    %v6205 = vpack.c.b16 %v5797, %v5789
    %v6206 = vpack.c.b16 %v5798, %v5790
    %v6207 = vpack.c.b16 %v5799, %v5791
    %v6208 = vpack.c.b16 %v5800, %v5792
    %v6209 = vpack.c.b16 %v5801, %v5793
    %v6210 = vpack.c.b16 %v5802, %v5794
    %v6211 = vpack.c.b16 %v5803, %v5795
    %v6212 = vpack.c.b16 %v5804, %v5796
    %v6213 = vpack.c.b16 %v5813, %v5805
    %v6214 = vpack.c.b16 %v5814, %v5806
    %v6215 = vpack.c.b16 %v5815, %v5807
    %v6216 = vpack.c.b16 %v5816, %v5808
    %v6217 = vpack.c.b16 %v5817, %v5809
    %v6218 = vpack.c.b16 %v5818, %v5810
    %v6219 = vpack.c.b16 %v5819, %v5811
    %v6220 = vpack.c.b16 %v5820, %v5812
    %v6221 = vpack.c.b16 %v5829, %v5821
    %v6222 = vpack.c.b16 %v5830, %v5822
    %v6223 = vpack.c.b16 %v5831, %v5823
    %v6224 = vpack.c.b16 %v5832, %v5824
    %v6225 = vpack.c.b16 %v5833, %v5825
    %v6226 = vpack.c.b16 %v5834, %v5826
    %v6227 = vpack.c.b16 %v5835, %v5827
    %v6228 = vpack.c.b16 %v5836, %v5828
    %v6229 = vpack.c.b16 %v5845, %v5837
    %v6230 = vpack.c.b16 %v5846, %v5838
    %v6231 = vpack.c.b16 %v5847, %v5839
    %v6232 = vpack.c.b16 %v5848, %v5840
    %v6233 = vpack.c.b16 %v5849, %v5841
    %v6234 = vpack.c.b16 %v5850, %v5842
    %v6235 = vpack.c.b16 %v5851, %v5843
    %v6236 = vpack.c.b16 %v5852, %v5844
    %v6237 = vpack.c.b16 %v5861, %v5853
    %v6238 = vpack.c.b16 %v5862, %v5854
    %v6239 = vpack.c.b16 %v5863, %v5855
    %v6240 = vpack.c.b16 %v5864, %v5856
    %v6241 = vpack.c.b16 %v5865, %v5857
    %v6242 = vpack.c.b16 %v5866, %v5858
    %v6243 = vpack.c.b16 %v5867, %v5859
    %v6244 = vpack.c.b16 %v5868, %v5860
    %v6245 = vpack.c.b16 %v5877, %v5869
    %v6246 = vpack.c.b16 %v5878, %v5870
    %v6247 = vpack.c.b16 %v5879, %v5871
    %v6248 = vpack.c.b16 %v5880, %v5872
    %v6249 = vpack.c.b16 %v5881, %v5873
    %v6250 = vpack.c.b16 %v5882, %v5874
    %v6251 = vpack.c.b16 %v5883, %v5875
    %v6252 = vpack.c.b16 %v5884, %v5876
    %v6253 = vpack.c.b16 %v5893, %v5885
    %v6254 = vpack.c.b16 %v5894, %v5886
    %v6255 = vpack.c.b16 %v5895, %v5887
    %v6256 = vpack.c.b16 %v5896, %v5888
    %v6257 = vpack.c.b16 %v5897, %v5889
    %v6258 = vpack.c.b16 %v5898, %v5890
    %v6259 = vpack.c.b16 %v5899, %v5891
    %v6260 = vpack.c.b16 %v5900, %v5892
    %v6261 = vpack.c.b16 %v5909, %v5901
    %v6262 = vpack.c.b16 %v5910, %v5902
    %v6263 = vpack.c.b16 %v5911, %v5903
    %v6264 = vpack.c.b16 %v5912, %v5904
    %v6265 = vpack.c.b16 %v5913, %v5905
    %v6266 = vpack.c.b16 %v5914, %v5906
    %v6267 = vpack.c.b16 %v5915, %v5907
    %v6268 = vpack.c.b16 %v5916, %v5908
    %v6269 = vpack.c.b16 %v5925, %v5917
    %v6270 = vpack.c.b16 %v5926, %v5918
    %v6271 = vpack.c.b16 %v5927, %v5919
    %v6272 = vpack.c.b16 %v5928, %v5920
    %v6273 = vpack.c.b16 %v5929, %v5921
    %v6274 = vpack.c.b16 %v5930, %v5922
    %v6275 = vpack.c.b16 %v5931, %v5923
    %v6276 = vpack.c.b16 %v5932, %v5924
    %v6277 = vpack.c.b16 %v5941, %v5933
    %v6278 = vpack.c.b16 %v5942, %v5934
    %v6279 = vpack.c.b16 %v5943, %v5935
    %v6280 = vpack.c.b16 %v5944, %v5936
    %v6281 = vpack.c.b16 %v5945, %v5937
    %v6282 = vpack.c.b16 %v5946, %v5938
    %v6283 = vpack.c.b16 %v5947, %v5939
    %v6284 = vpack.c.b16 %v5948, %v5940
    %v6285 = vpack.c.b16 %v5957, %v5949
    %v6286 = vpack.c.b16 %v5958, %v5950
    %v6287 = vpack.c.b16 %v5959, %v5951
    %v6288 = vpack.c.b16 %v5960, %v5952
    %v6289 = vpack.c.b16 %v5961, %v5953
    %v6290 = vpack.c.b16 %v5962, %v5954
    %v6291 = vpack.c.b16 %v5963, %v5955
    %v6292 = vpack.c.b16 %v5964, %v5956
    %v6293 = vpack.c.b16 %v5973, %v5965
    %v6294 = vpack.c.b16 %v5974, %v5966
    %v6295 = vpack.c.b16 %v5975, %v5967
    %v6296 = vpack.c.b16 %v5976, %v5968
    %v6297 = vpack.c.b16 %v5977, %v5969
    %v6298 = vpack.c.b16 %v5978, %v5970
    %v6299 = vpack.c.b16 %v5979, %v5971
    %v6300 = vpack.c.b16 %v5980, %v5972
    %v6301 = vpack.c.b16 %v5989, %v5981
    %v6302 = vpack.c.b16 %v5990, %v5982
    %v6303 = vpack.c.b16 %v5991, %v5983
    %v6304 = vpack.c.b16 %v5992, %v5984
    %v6305 = vpack.c.b16 %v5993, %v5985
    %v6306 = vpack.c.b16 %v5994, %v5986
    %v6307 = vpack.c.b16 %v5995, %v5987
    %v6308 = vpack.c.b16 %v5996, %v5988
    %v6309 = vpack.c.b16 %v6005, %v5997
    %v6310 = vpack.c.b16 %v6006, %v5998
    %v6311 = vpack.c.b16 %v6007, %v5999
    %v6312 = vpack.c.b16 %v6008, %v6000
    %v6313 = vpack.c.b16 %v6009, %v6001
    %v6314 = vpack.c.b16 %v6010, %v6002
    %v6315 = vpack.c.b16 %v6011, %v6003
    %v6316 = vpack.c.b16 %v6012, %v6004
    %v6317 = vpack.c.b16 %v6021, %v6013
    %v6318 = vpack.c.b16 %v6022, %v6014
    %v6319 = vpack.c.b16 %v6023, %v6015
    %v6320 = vpack.c.b16 %v6024, %v6016
    %v6321 = vpack.c.b16 %v6025, %v6017
    %v6322 = vpack.c.b16 %v6026, %v6018
    %v6323 = vpack.c.b16 %v6027, %v6019
    %v6324 = vpack.c.b16 %v6028, %v6020
    %v6325 = vpack.c.b16 %v6037, %v6029
    %v6326 = vpack.c.b16 %v6038, %v6030
    %v6327 = vpack.c.b16 %v6039, %v6031
    %v6328 = vpack.c.b16 %v6040, %v6032
    %v6329 = vpack.c.b16 %v6041, %v6033
    %v6330 = vpack.c.b16 %v6042, %v6034
    %v6331 = vpack.c.b16 %v6043, %v6035
    %v6332 = vpack.c.b16 %v6044, %v6036
    %v6333 = vpack.c.b16 %v6053, %v6045
    %v6334 = vpack.c.b16 %v6054, %v6046
    %v6335 = vpack.c.b16 %v6055, %v6047
    %v6336 = vpack.c.b16 %v6056, %v6048
    %v6337 = vpack.c.b16 %v6057, %v6049
    %v6338 = vpack.c.b16 %v6058, %v6050
    %v6339 = vpack.c.b16 %v6059, %v6051
    %v6340 = vpack.c.b16 %v6060, %v6052
    %v6341 = vpack.c.b16 %v6069, %v6061
    %v6342 = vpack.c.b16 %v6070, %v6062
    %v6343 = vpack.c.b16 %v6071, %v6063
    %v6344 = vpack.c.b16 %v6072, %v6064
    %v6345 = vpack.c.b16 %v6073, %v6065
    %v6346 = vpack.c.b16 %v6074, %v6066
    %v6347 = vpack.c.b16 %v6075, %v6067
    %v6348 = vpack.c.b16 %v6076, %v6068
    %v6349 = vpack.c.b16 %v6085, %v6077
    %v6350 = vpack.c.b16 %v6086, %v6078
    %v6351 = vpack.c.b16 %v6087, %v6079
    %v6352 = vpack.c.b16 %v6088, %v6080
    %v6353 = vpack.c.b16 %v6089, %v6081
    %v6354 = vpack.c.b16 %v6090, %v6082
    %v6355 = vpack.c.b16 %v6091, %v6083
    %v6356 = vpack.c.b16 %v6092, %v6084
    %v6357 = vpack.c.b16 %v6101, %v6093
    %v6358 = vpack.c.b16 %v6102, %v6094
    %v6359 = vpack.c.b16 %v6103, %v6095
    %v6360 = vpack.c.b16 %v6104, %v6096
    %v6361 = vpack.c.b16 %v6105, %v6097
    %v6362 = vpack.c.b16 %v6106, %v6098
    %v6363 = vpack.c.b16 %v6107, %v6099
    %v6364 = vpack.c.b16 %v6108, %v6100
    %6621 = vmatprep.subr.bf16.mxu0 %v6110
    %6622 = vmatpush1.bf16.msra.mxu0 %v6109
    %6623 = vmatprep.subr.bf16.mxu0 %v6118
    %6624 = vmatpush1.bf16.msra.mxu0 %v6117
    %6625 = vmatprep.subr.bf16.mxu0 %v6126
    %6626 = vmatpush1.bf16.msra.mxu0 %v6125
    %6627 = vmatprep.subr.bf16.mxu0 %v6134
    %6628 = vmatpush1.bf16.msra.mxu0 %v6133
    %6629 = vmatprep.subr.bf16.mxu0 %v6142
    %6630 = vmatpush1.bf16.msra.mxu0 %v6141
    %6631 = vmatprep.subr.bf16.mxu0 %v6150
    %6632 = vmatpush1.bf16.msra.mxu0 %v6149
    %6633 = vmatprep.subr.bf16.mxu0 %v6158
    %6634 = vmatpush1.bf16.msra.mxu0 %v6157
    %6635 = vmatprep.subr.bf16.mxu0 %v6166
    %6636 = vmatpush1.bf16.msra.mxu0 %v6165
    %6637 = vmatprep.subr.bf16.mxu0 %v6174
    %6638 = vmatpush1.bf16.msra.mxu0 %v6173
    %6639 = vmatprep.subr.bf16.mxu0 %v6182
    %6640 = vmatpush1.bf16.msra.mxu0 %v6181
    %6641 = vmatprep.subr.bf16.mxu0 %v6190
    %6642 = vmatpush1.bf16.msra.mxu0 %v6189
    %6643 = vmatprep.subr.bf16.mxu0 %v6198
    %6644 = vmatpush1.bf16.msra.mxu0 %v6197
    %6645 = vmatprep.subr.bf16.mxu0 %v6206
    %6646 = vmatpush1.bf16.msra.mxu0 %v6205
    %6647 = vmatprep.subr.bf16.mxu0 %v6214
    %6648 = vmatpush1.bf16.msra.mxu0 %v6213
    %6649 = vmatprep.subr.bf16.mxu0 %v6222
    %6650 = vmatpush1.bf16.msra.mxu0 %v6221
    %6651 = vmatprep.subr.bf16.mxu0 %v6230
    %6652 = vmatpush1.bf16.msra.mxu0 %v6229
    %6653 = vmatprep.mubr.bf16.mxu0 %v5293
    %6654 = vmatmul.mubr.bf16.gmra.mrb[0].mxu0 %v5292
    %v6655 = vpop.f32.mrb[0].mxu0
    %v6656 = vadd.f32 %v5304, %v6655
    %v6657 = vpop.f32.mrb[0].mxu0
    %v6658 = vadd.f32 %v5308, %v6657
    %v6659 = vpop.f32.mrb[0].mxu0
    %v6660 = vpop.f32.mrb[0].mxu0
    %6661 = vdwg.mxu0
    %6662 = vmatprep.subr.bf16.mxu0 %v6238
    %6663 = vmatpush1.bf16.msra.mxu0 %v6237
    %6664 = vmatprep.subr.bf16.mxu0 %v6246
    %6665 = vmatpush1.bf16.msra.mxu0 %v6245
    %6666 = vmatprep.subr.bf16.mxu0 %v6254
    %6667 = vmatpush1.bf16.msra.mxu0 %v6253
    %6668 = vmatprep.subr.bf16.mxu0 %v6262
    %6669 = vmatpush1.bf16.msra.mxu0 %v6261
    %6670 = vmatprep.subr.bf16.mxu0 %v6270
    %6671 = vmatpush1.bf16.msra.mxu0 %v6269
    %6672 = vmatprep.subr.bf16.mxu0 %v6278
    %6673 = vmatpush1.bf16.msra.mxu0 %v6277
    %6674 = vmatprep.subr.bf16.mxu0 %v6286
    %6675 = vmatpush1.bf16.msra.mxu0 %v6285
    %6676 = vmatprep.subr.bf16.mxu0 %v6294
    %6677 = vmatpush1.bf16.msra.mxu0 %v6293
    %6678 = vmatprep.subr.bf16.mxu0 %v6302
    %6679 = vmatpush1.bf16.msra.mxu0 %v6301
    %6680 = vmatprep.subr.bf16.mxu0 %v6310
    %6681 = vmatpush1.bf16.msra.mxu0 %v6309
    %6682 = vmatprep.subr.bf16.mxu0 %v6318
    %6683 = vmatpush1.bf16.msra.mxu0 %v6317
    %6684 = vmatprep.subr.bf16.mxu0 %v6326
    %6685 = vmatpush1.bf16.msra.mxu0 %v6325
    %6686 = vmatprep.subr.bf16.mxu0 %v6334
    %6687 = vmatpush1.bf16.msra.mxu0 %v6333
    %6688 = vmatprep.subr.bf16.mxu0 %v6342
    %6689 = vmatpush1.bf16.msra.mxu0 %v6341
    %6690 = vmatprep.subr.bf16.mxu0 %v6350
    %6691 = vmatpush1.bf16.msra.mxu0 %v6349
    %6692 = vmatprep.subr.bf16.mxu0 %v6358
    %6693 = vmatpush1.bf16.msra.mxu0 %v6357
    %6694 = vmatprep.mubr.bf16.mxu0 %v5295
    %6695 = vmatmul.mubr.bf16.gmra.mrb[0].mxu0 %v5294
    %v6696 = vpop.f32.mrb[0].mxu0
    %v6697 = vadd.f32 %v6656, %v6696
    %v6698 = vpop.f32.mrb[0].mxu0
    %v6699 = vadd.f32 %v6658, %v6698
    %v6700 = vpop.f32.mrb[0].mxu0
    %v6701 = vpop.f32.mrb[0].mxu0
    %6702 = vdwg.mxu0
    %6703 = vmatprep.subr.bf16.mxu0 %v6112
    %6704 = vmatpush1.bf16.msra.mxu0 %v6111
    %6705 = vmatprep.subr.bf16.mxu0 %v6120
    %6706 = vmatpush1.bf16.msra.mxu0 %v6119
    %6707 = vmatprep.subr.bf16.mxu0 %v6128
    %6708 = vmatpush1.bf16.msra.mxu0 %v6127
    %6709 = vmatprep.subr.bf16.mxu0 %v6136
    %6710 = vmatpush1.bf16.msra.mxu0 %v6135
    %6711 = vmatprep.subr.bf16.mxu0 %v6144
    %6712 = vmatpush1.bf16.msra.mxu0 %v6143
    %6713 = vmatprep.subr.bf16.mxu0 %v6152
    %6714 = vmatpush1.bf16.msra.mxu0 %v6151
    %6715 = vmatprep.subr.bf16.mxu0 %v6160
    %6716 = vmatpush1.bf16.msra.mxu0 %v6159
    %6717 = vmatprep.subr.bf16.mxu0 %v6168
    %6718 = vmatpush1.bf16.msra.mxu0 %v6167
    %6719 = vmatprep.subr.bf16.mxu0 %v6176
    %6720 = vmatpush1.bf16.msra.mxu0 %v6175
    %6721 = vmatprep.subr.bf16.mxu0 %v6184
    %6722 = vmatpush1.bf16.msra.mxu0 %v6183
    %6723 = vmatprep.subr.bf16.mxu0 %v6192
    %6724 = vmatpush1.bf16.msra.mxu0 %v6191
    %6725 = vmatprep.subr.bf16.mxu0 %v6200
    %6726 = vmatpush1.bf16.msra.mxu0 %v6199
    %6727 = vmatprep.subr.bf16.mxu0 %v6208
    %6728 = vmatpush1.bf16.msra.mxu0 %v6207
    %6729 = vmatprep.subr.bf16.mxu0 %v6216
    %6730 = vmatpush1.bf16.msra.mxu0 %v6215
    %6731 = vmatprep.subr.bf16.mxu0 %v6224
    %6732 = vmatpush1.bf16.msra.mxu0 %v6223
    %6733 = vmatprep.subr.bf16.mxu0 %v6232
    %6734 = vmatpush1.bf16.msra.mxu0 %v6231
    %6735 = vmatprep.mubr.bf16.mxu0 %v5293
    %6736 = vmatmul.mubr.bf16.gmra.mrb[0].mxu0 %v5292
    %v6737 = vpop.f32.mrb[0].mxu0
    %v6738 = vadd.f32 %v5312, %v6737
    %v6739 = vpop.f32.mrb[0].mxu0
    %v6740 = vadd.f32 %v5316, %v6739
    %v6741 = vpop.f32.mrb[0].mxu0
    %v6742 = vpop.f32.mrb[0].mxu0
    %6743 = vdwg.mxu0
    %6744 = vmatprep.subr.bf16.mxu0 %v6240
    %6745 = vmatpush1.bf16.msra.mxu0 %v6239
    %6746 = vmatprep.subr.bf16.mxu0 %v6248
    %6747 = vmatpush1.bf16.msra.mxu0 %v6247
    %6748 = vmatprep.subr.bf16.mxu0 %v6256
    %6749 = vmatpush1.bf16.msra.mxu0 %v6255
    %6750 = vmatprep.subr.bf16.mxu0 %v6264
    %6751 = vmatpush1.bf16.msra.mxu0 %v6263
    %6752 = vmatprep.subr.bf16.mxu0 %v6272
    %6753 = vmatpush1.bf16.msra.mxu0 %v6271
    %6754 = vmatprep.subr.bf16.mxu0 %v6280
    %6755 = vmatpush1.bf16.msra.mxu0 %v6279
    %6756 = vmatprep.subr.bf16.mxu0 %v6288
    %6757 = vmatpush1.bf16.msra.mxu0 %v6287
    %6758 = vmatprep.subr.bf16.mxu0 %v6296
    %6759 = vmatpush1.bf16.msra.mxu0 %v6295
    %6760 = vmatprep.subr.bf16.mxu0 %v6304
    %6761 = vmatpush1.bf16.msra.mxu0 %v6303
    %6762 = vmatprep.subr.bf16.mxu0 %v6312
    %6763 = vmatpush1.bf16.msra.mxu0 %v6311
    %6764 = vmatprep.subr.bf16.mxu0 %v6320
    %6765 = vmatpush1.bf16.msra.mxu0 %v6319
    %6766 = vmatprep.subr.bf16.mxu0 %v6328
    %6767 = vmatpush1.bf16.msra.mxu0 %v6327
    %6768 = vmatprep.subr.bf16.mxu0 %v6336
    %6769 = vmatpush1.bf16.msra.mxu0 %v6335
    %6770 = vmatprep.subr.bf16.mxu0 %v6344
    %6771 = vmatpush1.bf16.msra.mxu0 %v6343
    %6772 = vmatprep.subr.bf16.mxu0 %v6352
    %6773 = vmatpush1.bf16.msra.mxu0 %v6351
    %6774 = vmatprep.subr.bf16.mxu0 %v6360
    %6775 = vmatpush1.bf16.msra.mxu0 %v6359
    %6776 = vmatprep.mubr.bf16.mxu0 %v5295
    %6777 = vmatmul.mubr.bf16.gmra.mrb[0].mxu0 %v5294
    %v6778 = vpop.f32.mrb[0].mxu0
    %v6779 = vadd.f32 %v6738, %v6778
    %v6780 = vpop.f32.mrb[0].mxu0
    %v6781 = vadd.f32 %v6740, %v6780
    %v6782 = vpop.f32.mrb[0].mxu0
    %v6783 = vpop.f32.mrb[0].mxu0
    %6784 = vdwg.mxu0
    %6785 = vmatprep.subr.bf16.mxu0 %v6114
    %6786 = vmatpush1.bf16.msra.mxu0 %v6113
    %6787 = vmatprep.subr.bf16.mxu0 %v6122
    %6788 = vmatpush1.bf16.msra.mxu0 %v6121
    %6789 = vmatprep.subr.bf16.mxu0 %v6130
    %6790 = vmatpush1.bf16.msra.mxu0 %v6129
    %6791 = vmatprep.subr.bf16.mxu0 %v6138
    %6792 = vmatpush1.bf16.msra.mxu0 %v6137
    %6793 = vmatprep.subr.bf16.mxu0 %v6146
    %6794 = vmatpush1.bf16.msra.mxu0 %v6145
    %6795 = vmatprep.subr.bf16.mxu0 %v6154
    %6796 = vmatpush1.bf16.msra.mxu0 %v6153
    %6797 = vmatprep.subr.bf16.mxu0 %v6162
    %6798 = vmatpush1.bf16.msra.mxu0 %v6161
    %6799 = vmatprep.subr.bf16.mxu0 %v6170
    %6800 = vmatpush1.bf16.msra.mxu0 %v6169
    %6801 = vmatprep.subr.bf16.mxu0 %v6178
    %6802 = vmatpush1.bf16.msra.mxu0 %v6177
    %6803 = vmatprep.subr.bf16.mxu0 %v6186
    %6804 = vmatpush1.bf16.msra.mxu0 %v6185
    %6805 = vmatprep.subr.bf16.mxu0 %v6194
    %6806 = vmatpush1.bf16.msra.mxu0 %v6193
    %6807 = vmatprep.subr.bf16.mxu0 %v6202
    %6808 = vmatpush1.bf16.msra.mxu0 %v6201
    %6809 = vmatprep.subr.bf16.mxu0 %v6210
    %6810 = vmatpush1.bf16.msra.mxu0 %v6209
    %6811 = vmatprep.subr.bf16.mxu0 %v6218
    %6812 = vmatpush1.bf16.msra.mxu0 %v6217
    %6813 = vmatprep.subr.bf16.mxu0 %v6226
    %6814 = vmatpush1.bf16.msra.mxu0 %v6225
    %6815 = vmatprep.subr.bf16.mxu0 %v6234
    %6816 = vmatpush1.bf16.msra.mxu0 %v6233
    %6817 = vmatprep.mubr.bf16.mxu0 %v5293
    %6818 = vmatmul.mubr.bf16.gmra.mrb[0].mxu0 %v5292
    %v6819 = vpop.f32.mrb[0].mxu0
    %v6820 = vadd.f32 %v5320, %v6819
    %v6821 = vpop.f32.mrb[0].mxu0
    %v6822 = vadd.f32 %v5324, %v6821
    %v6823 = vpop.f32.mrb[0].mxu0
    %v6824 = vpop.f32.mrb[0].mxu0
    %6825 = vdwg.mxu0
    %6826 = vmatprep.subr.bf16.mxu0 %v6242
    %6827 = vmatpush1.bf16.msra.mxu0 %v6241
    %6828 = vmatprep.subr.bf16.mxu0 %v6250
    %6829 = vmatpush1.bf16.msra.mxu0 %v6249
    %6830 = vmatprep.subr.bf16.mxu0 %v6258
    %6831 = vmatpush1.bf16.msra.mxu0 %v6257
    %6832 = vmatprep.subr.bf16.mxu0 %v6266
    %6833 = vmatpush1.bf16.msra.mxu0 %v6265
    %6834 = vmatprep.subr.bf16.mxu0 %v6274
    %6835 = vmatpush1.bf16.msra.mxu0 %v6273
    %6836 = vmatprep.subr.bf16.mxu0 %v6282
    %6837 = vmatpush1.bf16.msra.mxu0 %v6281
    %6838 = vmatprep.subr.bf16.mxu0 %v6290
    %6839 = vmatpush1.bf16.msra.mxu0 %v6289
    %6840 = vmatprep.subr.bf16.mxu0 %v6298
    %6841 = vmatpush1.bf16.msra.mxu0 %v6297
    %6842 = vmatprep.subr.bf16.mxu0 %v6306
    %6843 = vmatpush1.bf16.msra.mxu0 %v6305
    %6844 = vmatprep.subr.bf16.mxu0 %v6314
    %6845 = vmatpush1.bf16.msra.mxu0 %v6313
    %6846 = vmatprep.subr.bf16.mxu0 %v6322
    %6847 = vmatpush1.bf16.msra.mxu0 %v6321
    %6848 = vmatprep.subr.bf16.mxu0 %v6330
    %6849 = vmatpush1.bf16.msra.mxu0 %v6329
    %6850 = vmatprep.subr.bf16.mxu0 %v6338
    %6851 = vmatpush1.bf16.msra.mxu0 %v6337
    %6852 = vmatprep.subr.bf16.mxu0 %v6346
    %6853 = vmatpush1.bf16.msra.mxu0 %v6345
    %6854 = vmatprep.subr.bf16.mxu0 %v6354
    %6855 = vmatpush1.bf16.msra.mxu0 %v6353
    %6856 = vmatprep.subr.bf16.mxu0 %v6362
    %6857 = vmatpush1.bf16.msra.mxu0 %v6361
    %6858 = vmatprep.mubr.bf16.mxu0 %v5295
    %6859 = vmatmul.mubr.bf16.gmra.mrb[0].mxu0 %v5294
    %v6860 = vpop.f32.mrb[0].mxu0
    %v6861 = vadd.f32 %v6820, %v6860
    %v6862 = vpop.f32.mrb[0].mxu0
    %v6863 = vadd.f32 %v6822, %v6862
    %v6864 = vpop.f32.mrb[0].mxu0
    %v6865 = vpop.f32.mrb[0].mxu0
    %6866 = vdwg.mxu0
    %6867 = vmatprep.subr.bf16.mxu0 %v6116
    %6868 = vmatpush1.bf16.msra.mxu0 %v6115
    %6869 = vmatprep.subr.bf16.mxu0 %v6124
    %6870 = vmatpush1.bf16.msra.mxu0 %v6123
    %6871 = vmatprep.subr.bf16.mxu0 %v6132
    %6872 = vmatpush1.bf16.msra.mxu0 %v6131
    %6873 = vmatprep.subr.bf16.mxu0 %v6140
    %6874 = vmatpush1.bf16.msra.mxu0 %v6139
    %6875 = vmatprep.subr.bf16.mxu0 %v6148
    %6876 = vmatpush1.bf16.msra.mxu0 %v6147
    %6877 = vmatprep.subr.bf16.mxu0 %v6156
    %6878 = vmatpush1.bf16.msra.mxu0 %v6155
    %6879 = vmatprep.subr.bf16.mxu0 %v6164
    %6880 = vmatpush1.bf16.msra.mxu0 %v6163
    %6881 = vmatprep.subr.bf16.mxu0 %v6172
    %6882 = vmatpush1.bf16.msra.mxu0 %v6171
    %6883 = vmatprep.subr.bf16.mxu0 %v6180
    %6884 = vmatpush1.bf16.msra.mxu0 %v6179
    %6885 = vmatprep.subr.bf16.mxu0 %v6188
    %6886 = vmatpush1.bf16.msra.mxu0 %v6187
    %6887 = vmatprep.subr.bf16.mxu0 %v6196
    %6888 = vmatpush1.bf16.msra.mxu0 %v6195
    %6889 = vmatprep.subr.bf16.mxu0 %v6204
    %6890 = vmatpush1.bf16.msra.mxu0 %v6203
    %6891 = vmatprep.subr.bf16.mxu0 %v6212
    %6892 = vmatpush1.bf16.msra.mxu0 %v6211
    %6893 = vmatprep.subr.bf16.mxu0 %v6220
    %6894 = vmatpush1.bf16.msra.mxu0 %v6219
    %6895 = vmatprep.subr.bf16.mxu0 %v6228
    %6896 = vmatpush1.bf16.msra.mxu0 %v6227
    %6897 = vmatprep.subr.bf16.mxu0 %v6236
    %6898 = vmatpush1.bf16.msra.mxu0 %v6235
    %6899 = vmatprep.mubr.bf16.mxu0 %v5293
    %6900 = vmatmul.mubr.bf16.gmra.mrb[0].mxu0 %v5292
    %v6901 = vpop.f32.mrb[0].mxu0
    %v6902 = vadd.f32 %v5328, %v6901
    %v6903 = vpop.f32.mrb[0].mxu0
    %v6904 = vadd.f32 %v5332, %v6903
    %v6905 = vpop.f32.mrb[0].mxu0
    %v6906 = vpop.f32.mrb[0].mxu0
    %6907 = vdwg.mxu0
    %6908 = vmatprep.subr.bf16.mxu0 %v6244
    %6909 = vmatpush1.bf16.msra.mxu0 %v6243
    %6910 = vmatprep.subr.bf16.mxu0 %v6252
    %6911 = vmatpush1.bf16.msra.mxu0 %v6251
    %6912 = vmatprep.subr.bf16.mxu0 %v6260
    %6913 = vmatpush1.bf16.msra.mxu0 %v6259
    %6914 = vmatprep.subr.bf16.mxu0 %v6268
    %6915 = vmatpush1.bf16.msra.mxu0 %v6267
    %6916 = vmatprep.subr.bf16.mxu0 %v6276
    %6917 = vmatpush1.bf16.msra.mxu0 %v6275
    %6918 = vmatprep.subr.bf16.mxu0 %v6284
    %6919 = vmatpush1.bf16.msra.mxu0 %v6283
    %6920 = vmatprep.subr.bf16.mxu0 %v6292
    %6921 = vmatpush1.bf16.msra.mxu0 %v6291
    %6922 = vmatprep.subr.bf16.mxu0 %v6300
    %6923 = vmatpush1.bf16.msra.mxu0 %v6299
    %6924 = vmatprep.subr.bf16.mxu0 %v6308
    %6925 = vmatpush1.bf16.msra.mxu0 %v6307
    %6926 = vmatprep.subr.bf16.mxu0 %v6316
    %6927 = vmatpush1.bf16.msra.mxu0 %v6315
    %6928 = vmatprep.subr.bf16.mxu0 %v6324
    %6929 = vmatpush1.bf16.msra.mxu0 %v6323
    %6930 = vmatprep.subr.bf16.mxu0 %v6332
    %6931 = vmatpush1.bf16.msra.mxu0 %v6331
    %6932 = vmatprep.subr.bf16.mxu0 %v6340
    %6933 = vmatpush1.bf16.msra.mxu0 %v6339
    %6934 = vmatprep.subr.bf16.mxu0 %v6348
    %6935 = vmatpush1.bf16.msra.mxu0 %v6347
    %6936 = vmatprep.subr.bf16.mxu0 %v6356
    %6937 = vmatpush1.bf16.msra.mxu0 %v6355
    %6938 = vmatprep.subr.bf16.mxu0 %v6364
    %6939 = vmatpush1.bf16.msra.mxu0 %v6363
    %6940 = vmatprep.mubr.bf16.mxu0 %v5295
    %6941 = vmatmul.mubr.bf16.gmra.mrb[0].mxu0 %v5294
    %v6942 = vpop.f32.mrb[0].mxu0
    %v6943 = vadd.f32 %v6902, %v6942
    %v6944 = vpop.f32.mrb[0].mxu0
    %v6945 = vadd.f32 %v6904, %v6944
    %v6946 = vpop.f32.mrb[0].mxu0
    %v6947 = vpop.f32.mrb[0].mxu0
    %6948 = vdwg.mxu0
    %v6949 = vmax.f32 %v6697, 0.0
    %v6950 = vmax.f32 %v6699, 0.0
    %v6951 = vmax.f32 %v6779, 0.0
    %v6952 = vmax.f32 %v6781, 0.0
    %v6953 = vmax.f32 %v6861, 0.0
    %v6954 = vmax.f32 %v6863, 0.0
    %v6955 = vmax.f32 %v6943, 0.0
    %v6956 = vmax.f32 %v6945, 0.0
    %v6957 = vpack.c.bf16 %v6949, %v6949
    %v6958 = vpack.c.bf16 %v6950, %v6950
    %v6959 = vpack.c.bf16 %v6951, %v6951
    %v6960 = vpack.c.bf16 %v6952, %v6952
    %v6961 = vpack.c.bf16 %v6953, %v6953
    %v6962 = vpack.c.bf16 %v6954, %v6954
    %v6963 = vpack.c.bf16 %v6955, %v6955
    %v6964 = vpack.c.bf16 %v6956, %v6956
    %s6965 = scalar_lea.vmem %s6, 5
    %v6966 = vld [vmem:[%s6965] ss:$8 sm:$0x3]
    %v6968 = vlaneseq
    %v6969 = vshrl.u32 %v6968, 7
    %v6970 = vsub.s32 0, %v6969
    %v6971 = vrot.slane %v6966, %v6970
    %v6972 = vlaneseq
    %v6973 = vshrl.u32 %v6972, 7
    %v6974 = vsub.s32 1, %v6973
    %v6975 = vrot.slane %v6966, %v6974
    %v7106 = vunpack.c.l.b16 %v993
    %v7107 = vunpack.c.h.b16 %v993
    %v7108 = vunpack.c.l.b16 %v994
    %v7109 = vunpack.c.h.b16 %v994
    %v7110 = vunpack.c.l.b16 %v995
    %v7111 = vunpack.c.h.b16 %v995
    %v7112 = vunpack.c.l.b16 %v996
    %v7113 = vunpack.c.h.b16 %v996
    %v7114 = vunpack.c.l.b16 %v997
    %v7115 = vunpack.c.h.b16 %v997
    %v7116 = vunpack.c.l.b16 %v998
    %v7117 = vunpack.c.h.b16 %v998
    %v7118 = vunpack.c.l.b16 %v999
    %v7119 = vunpack.c.h.b16 %v999
    %v7120 = vunpack.c.l.b16 %v1000
    %v7121 = vunpack.c.h.b16 %v1000
    %v7122 = vunpack.c.l.b16 %v1001
    %v7123 = vunpack.c.h.b16 %v1001
    %v7124 = vunpack.c.l.b16 %v1002
    %v7125 = vunpack.c.h.b16 %v1002
    %v7126 = vunpack.c.l.b16 %v1003
    %v7127 = vunpack.c.h.b16 %v1003
    %v7128 = vunpack.c.l.b16 %v1004
    %v7129 = vunpack.c.h.b16 %v1004
    %v7130 = vunpack.c.l.b16 %v1005
    %v7131 = vunpack.c.h.b16 %v1005
    %v7132 = vunpack.c.l.b16 %v1006
    %v7133 = vunpack.c.h.b16 %v1006
    %v7134 = vunpack.c.l.b16 %v1007
    %v7135 = vunpack.c.h.b16 %v1007
    %v7136 = vunpack.c.l.b16 %v1008
    %v7137 = vunpack.c.h.b16 %v1008
    %v7138 = vunpack.c.l.b16 %v1009
    %v7139 = vunpack.c.h.b16 %v1009
    %v7140 = vunpack.c.l.b16 %v1010
    %v7141 = vunpack.c.h.b16 %v1010
    %v7142 = vunpack.c.l.b16 %v1011
    %v7143 = vunpack.c.h.b16 %v1011
    %v7144 = vunpack.c.l.b16 %v1012
    %v7145 = vunpack.c.h.b16 %v1012
    %v7146 = vunpack.c.l.b16 %v1013
    %v7147 = vunpack.c.h.b16 %v1013
    %v7148 = vunpack.c.l.b16 %v1014
    %v7149 = vunpack.c.h.b16 %v1014
    %v7150 = vunpack.c.l.b16 %v1015
    %v7151 = vunpack.c.h.b16 %v1015
    %v7152 = vunpack.c.l.b16 %v1016
    %v7153 = vunpack.c.h.b16 %v1016
    %v7154 = vunpack.c.l.b16 %v1017
    %v7155 = vunpack.c.h.b16 %v1017
    %v7156 = vunpack.c.l.b16 %v1018
    %v7157 = vunpack.c.h.b16 %v1018
    %v7158 = vunpack.c.l.b16 %v1019
    %v7159 = vunpack.c.h.b16 %v1019
    %v7160 = vunpack.c.l.b16 %v1020
    %v7161 = vunpack.c.h.b16 %v1020
    %v7162 = vunpack.c.l.b16 %v1021
    %v7163 = vunpack.c.h.b16 %v1021
    %v7164 = vunpack.c.l.b16 %v1022
    %v7165 = vunpack.c.h.b16 %v1022
    %v7166 = vunpack.c.l.b16 %v1023
    %v7167 = vunpack.c.h.b16 %v1023
    %v7168 = vunpack.c.l.b16 %v1024
    %v7169 = vunpack.c.h.b16 %v1024
    %v7170 = vunpack.c.l.b16 %v1025
    %v7171 = vunpack.c.h.b16 %v1025
    %v7172 = vunpack.c.l.b16 %v1026
    %v7173 = vunpack.c.h.b16 %v1026
    %v7174 = vunpack.c.l.b16 %v1027
    %v7175 = vunpack.c.h.b16 %v1027
    %v7176 = vunpack.c.l.b16 %v1028
    %v7177 = vunpack.c.h.b16 %v1028
    %v7178 = vunpack.c.l.b16 %v1029
    %v7179 = vunpack.c.h.b16 %v1029
    %v7180 = vunpack.c.l.b16 %v1030
    %v7181 = vunpack.c.h.b16 %v1030
    %v7182 = vunpack.c.l.b16 %v1031
    %v7183 = vunpack.c.h.b16 %v1031
    %v7184 = vunpack.c.l.b16 %v1032
    %v7185 = vunpack.c.h.b16 %v1032
    %v7186 = vunpack.c.l.b16 %v1033
    %v7187 = vunpack.c.h.b16 %v1033
    %v7188 = vunpack.c.l.b16 %v1034
    %v7189 = vunpack.c.h.b16 %v1034
    %v7190 = vunpack.c.l.b16 %v1035
    %v7191 = vunpack.c.h.b16 %v1035
    %v7192 = vunpack.c.l.b16 %v1036
    %v7193 = vunpack.c.h.b16 %v1036
    %v7194 = vunpack.c.l.b16 %v1037
    %v7195 = vunpack.c.h.b16 %v1037
    %v7196 = vunpack.c.l.b16 %v1038
    %v7197 = vunpack.c.h.b16 %v1038
    %v7198 = vunpack.c.l.b16 %v1039
    %v7199 = vunpack.c.h.b16 %v1039
    %v7200 = vunpack.c.l.b16 %v1040
    %v7201 = vunpack.c.h.b16 %v1040
    %v7202 = vunpack.c.l.b16 %v1041
    %v7203 = vunpack.c.h.b16 %v1041
    %v7204 = vunpack.c.l.b16 %v1042
    %v7205 = vunpack.c.h.b16 %v1042
    %v7206 = vunpack.c.l.b16 %v1043
    %v7207 = vunpack.c.h.b16 %v1043
    %v7208 = vunpack.c.l.b16 %v1044
    %v7209 = vunpack.c.h.b16 %v1044
    %v7210 = vunpack.c.l.b16 %v1045
    %v7211 = vunpack.c.h.b16 %v1045
    %v7212 = vunpack.c.l.b16 %v1046
    %v7213 = vunpack.c.h.b16 %v1046
    %v7214 = vunpack.c.l.b16 %v1047
    %v7215 = vunpack.c.h.b16 %v1047
    %v7216 = vunpack.c.l.b16 %v1048
    %v7217 = vunpack.c.h.b16 %v1048
    %v7218 = vunpack.c.l.b16 %v1049
    %v7219 = vunpack.c.h.b16 %v1049
    %v7220 = vunpack.c.l.b16 %v1050
    %v7221 = vunpack.c.h.b16 %v1050
    %v7222 = vunpack.c.l.b16 %v1051
    %v7223 = vunpack.c.h.b16 %v1051
    %v7224 = vunpack.c.l.b16 %v1052
    %v7225 = vunpack.c.h.b16 %v1052
    %v7226 = vunpack.c.l.b16 %v1053
    %v7227 = vunpack.c.h.b16 %v1053
    %v7228 = vunpack.c.l.b16 %v1054
    %v7229 = vunpack.c.h.b16 %v1054
    %v7230 = vunpack.c.l.b16 %v1055
    %v7231 = vunpack.c.h.b16 %v1055
    %v7232 = vunpack.c.l.b16 %v1056
    %v7233 = vunpack.c.h.b16 %v1056
    %v7234 = vunpack.c.l.b16 %v1057
    %v7235 = vunpack.c.h.b16 %v1057
    %v7236 = vunpack.c.l.b16 %v1058
    %v7237 = vunpack.c.h.b16 %v1058
    %v7238 = vunpack.c.l.b16 %v1059
    %v7239 = vunpack.c.h.b16 %v1059
    %v7240 = vunpack.c.l.b16 %v1060
    %v7241 = vunpack.c.h.b16 %v1060
    %v7242 = vunpack.c.l.b16 %v1061
    %v7243 = vunpack.c.h.b16 %v1061
    %v7244 = vunpack.c.l.b16 %v1062
    %v7245 = vunpack.c.h.b16 %v1062
    %v7246 = vunpack.c.l.b16 %v1063
    %v7247 = vunpack.c.h.b16 %v1063
    %v7248 = vunpack.c.l.b16 %v1064
    %v7249 = vunpack.c.h.b16 %v1064
    %v7250 = vunpack.c.l.b16 %v1065
    %v7251 = vunpack.c.h.b16 %v1065
    %v7252 = vunpack.c.l.b16 %v1066
    %v7253 = vunpack.c.h.b16 %v1066
    %v7254 = vunpack.c.l.b16 %v1067
    %v7255 = vunpack.c.h.b16 %v1067
    %v7256 = vunpack.c.l.b16 %v1068
    %v7257 = vunpack.c.h.b16 %v1068
    %v7258 = vunpack.c.l.b16 %v1069
    %v7259 = vunpack.c.h.b16 %v1069
    %v7260 = vunpack.c.l.b16 %v1070
    %v7261 = vunpack.c.h.b16 %v1070
    %v7262 = vunpack.c.l.b16 %v1071
    %v7263 = vunpack.c.h.b16 %v1071
    %v7264 = vunpack.c.l.b16 %v1072
    %v7265 = vunpack.c.h.b16 %v1072
    %v7266 = vunpack.c.l.b16 %v1073
    %v7267 = vunpack.c.h.b16 %v1073
    %v7268 = vunpack.c.l.b16 %v1074
    %v7269 = vunpack.c.h.b16 %v1074
    %v7270 = vunpack.c.l.b16 %v1075
    %v7271 = vunpack.c.h.b16 %v1075
    %v7272 = vunpack.c.l.b16 %v1076
    %v7273 = vunpack.c.h.b16 %v1076
    %v7274 = vunpack.c.l.b16 %v1077
    %v7275 = vunpack.c.h.b16 %v1077
    %v7276 = vunpack.c.l.b16 %v1078
    %v7277 = vunpack.c.h.b16 %v1078
    %v7278 = vunpack.c.l.b16 %v1079
    %v7279 = vunpack.c.h.b16 %v1079
    %v7280 = vunpack.c.l.b16 %v1080
    %v7281 = vunpack.c.h.b16 %v1080
    %v7282 = vunpack.c.l.b16 %v1081
    %v7283 = vunpack.c.h.b16 %v1081
    %v7284 = vunpack.c.l.b16 %v1082
    %v7285 = vunpack.c.h.b16 %v1082
    %v7286 = vunpack.c.l.b16 %v1083
    %v7287 = vunpack.c.h.b16 %v1083
    %v7288 = vunpack.c.l.b16 %v1084
    %v7289 = vunpack.c.h.b16 %v1084
    %v7290 = vunpack.c.l.b16 %v1085
    %v7291 = vunpack.c.h.b16 %v1085
    %v7292 = vunpack.c.l.b16 %v1086
    %v7293 = vunpack.c.h.b16 %v1086
    %v7294 = vunpack.c.l.b16 %v1087
    %v7295 = vunpack.c.h.b16 %v1087
    %v7296 = vunpack.c.l.b16 %v1088
    %v7297 = vunpack.c.h.b16 %v1088
    %v7298 = vunpack.c.l.b16 %v1089
    %v7299 = vunpack.c.h.b16 %v1089
    %v7300 = vunpack.c.l.b16 %v1090
    %v7301 = vunpack.c.h.b16 %v1090
    %v7302 = vunpack.c.l.b16 %v1091
    %v7303 = vunpack.c.h.b16 %v1091
    %v7304 = vunpack.c.l.b16 %v1092
    %v7305 = vunpack.c.h.b16 %v1092
    %v7306 = vunpack.c.l.b16 %v1093
    %v7307 = vunpack.c.h.b16 %v1093
    %v7308 = vunpack.c.l.b16 %v1094
    %v7309 = vunpack.c.h.b16 %v1094
    %v7310 = vunpack.c.l.b16 %v1095
    %v7311 = vunpack.c.h.b16 %v1095
    %v7312 = vunpack.c.l.b16 %v1096
    %v7313 = vunpack.c.h.b16 %v1096
    %v7314 = vunpack.c.l.b16 %v1097
    %v7315 = vunpack.c.h.b16 %v1097
    %v7316 = vunpack.c.l.b16 %v1098
    %v7317 = vunpack.c.h.b16 %v1098
    %v7318 = vunpack.c.l.b16 %v1099
    %v7319 = vunpack.c.h.b16 %v1099
    %v7320 = vunpack.c.l.b16 %v1100
    %v7321 = vunpack.c.h.b16 %v1100
    %v7322 = vunpack.c.l.b16 %v1101
    %v7323 = vunpack.c.h.b16 %v1101
    %v7324 = vunpack.c.l.b16 %v1102
    %v7325 = vunpack.c.h.b16 %v1102
    %v7326 = vunpack.c.l.b16 %v1103
    %v7327 = vunpack.c.h.b16 %v1103
    %v7328 = vunpack.c.l.b16 %v1104
    %v7329 = vunpack.c.h.b16 %v1104
    %v7330 = vunpack.c.l.b16 %v1105
    %v7331 = vunpack.c.h.b16 %v1105
    %v7332 = vunpack.c.l.b16 %v1106
    %v7333 = vunpack.c.h.b16 %v1106
    %v7334 = vunpack.c.l.b16 %v1107
    %v7335 = vunpack.c.h.b16 %v1107
    %v7336 = vunpack.c.l.b16 %v1108
    %v7337 = vunpack.c.h.b16 %v1108
    %v7338 = vunpack.c.l.b16 %v1109
    %v7339 = vunpack.c.h.b16 %v1109
    %v7340 = vunpack.c.l.b16 %v1110
    %v7341 = vunpack.c.h.b16 %v1110
    %v7342 = vunpack.c.l.b16 %v1111
    %v7343 = vunpack.c.h.b16 %v1111
    %v7344 = vunpack.c.l.b16 %v1112
    %v7345 = vunpack.c.h.b16 %v1112
    %v7346 = vunpack.c.l.b16 %v1113
    %v7347 = vunpack.c.h.b16 %v1113
    %v7348 = vunpack.c.l.b16 %v1114
    %v7349 = vunpack.c.h.b16 %v1114
    %v7350 = vunpack.c.l.b16 %v1115
    %v7351 = vunpack.c.h.b16 %v1115
    %v7352 = vunpack.c.l.b16 %v1116
    %v7353 = vunpack.c.h.b16 %v1116
    %v7354 = vunpack.c.l.b16 %v1117
    %v7355 = vunpack.c.h.b16 %v1117
    %v7356 = vunpack.c.l.b16 %v1118
    %v7357 = vunpack.c.h.b16 %v1118
    %v7358 = vunpack.c.l.b16 %v1119
    %v7359 = vunpack.c.h.b16 %v1119
    %v7360 = vunpack.c.l.b16 %v1120
    %v7361 = vunpack.c.h.b16 %v1120
    %v7362 = vpack.c.b16 %v7108, %v7106
    %v7363 = vpack.c.b16 %v7109, %v7107
    %v7364 = vpack.c.b16 %v7112, %v7110
    %v7365 = vpack.c.b16 %v7113, %v7111
    %v7366 = vpack.c.b16 %v7116, %v7114
    %v7367 = vpack.c.b16 %v7117, %v7115
    %v7368 = vpack.c.b16 %v7120, %v7118
    %v7369 = vpack.c.b16 %v7121, %v7119
    %v7370 = vpack.c.b16 %v7124, %v7122
    %v7371 = vpack.c.b16 %v7125, %v7123
    %v7372 = vpack.c.b16 %v7128, %v7126
    %v7373 = vpack.c.b16 %v7129, %v7127
    %v7374 = vpack.c.b16 %v7132, %v7130
    %v7375 = vpack.c.b16 %v7133, %v7131
    %v7376 = vpack.c.b16 %v7136, %v7134
    %v7377 = vpack.c.b16 %v7137, %v7135
    %v7378 = vpack.c.b16 %v7140, %v7138
    %v7379 = vpack.c.b16 %v7141, %v7139
    %v7380 = vpack.c.b16 %v7144, %v7142
    %v7381 = vpack.c.b16 %v7145, %v7143
    %v7382 = vpack.c.b16 %v7148, %v7146
    %v7383 = vpack.c.b16 %v7149, %v7147
    %v7384 = vpack.c.b16 %v7152, %v7150
    %v7385 = vpack.c.b16 %v7153, %v7151
    %v7386 = vpack.c.b16 %v7156, %v7154
    %v7387 = vpack.c.b16 %v7157, %v7155
    %v7388 = vpack.c.b16 %v7160, %v7158
    %v7389 = vpack.c.b16 %v7161, %v7159
    %v7390 = vpack.c.b16 %v7164, %v7162
    %v7391 = vpack.c.b16 %v7165, %v7163
    %v7392 = vpack.c.b16 %v7168, %v7166
    %v7393 = vpack.c.b16 %v7169, %v7167
    %v7394 = vpack.c.b16 %v7172, %v7170
    %v7395 = vpack.c.b16 %v7173, %v7171
    %v7396 = vpack.c.b16 %v7176, %v7174
    %v7397 = vpack.c.b16 %v7177, %v7175
    %v7398 = vpack.c.b16 %v7180, %v7178
    %v7399 = vpack.c.b16 %v7181, %v7179
    %v7400 = vpack.c.b16 %v7184, %v7182
    %v7401 = vpack.c.b16 %v7185, %v7183
    %v7402 = vpack.c.b16 %v7188, %v7186
    %v7403 = vpack.c.b16 %v7189, %v7187
    %v7404 = vpack.c.b16 %v7192, %v7190
    %v7405 = vpack.c.b16 %v7193, %v7191
    %v7406 = vpack.c.b16 %v7196, %v7194
    %v7407 = vpack.c.b16 %v7197, %v7195
    %v7408 = vpack.c.b16 %v7200, %v7198
    %v7409 = vpack.c.b16 %v7201, %v7199
    %v7410 = vpack.c.b16 %v7204, %v7202
    %v7411 = vpack.c.b16 %v7205, %v7203
    %v7412 = vpack.c.b16 %v7208, %v7206
    %v7413 = vpack.c.b16 %v7209, %v7207
    %v7414 = vpack.c.b16 %v7212, %v7210
    %v7415 = vpack.c.b16 %v7213, %v7211
    %v7416 = vpack.c.b16 %v7216, %v7214
    %v7417 = vpack.c.b16 %v7217, %v7215
    %v7418 = vpack.c.b16 %v7220, %v7218
    %v7419 = vpack.c.b16 %v7221, %v7219
    %v7420 = vpack.c.b16 %v7224, %v7222
    %v7421 = vpack.c.b16 %v7225, %v7223
    %v7422 = vpack.c.b16 %v7228, %v7226
    %v7423 = vpack.c.b16 %v7229, %v7227
    %v7424 = vpack.c.b16 %v7232, %v7230
    %v7425 = vpack.c.b16 %v7233, %v7231
    %v7426 = vpack.c.b16 %v7236, %v7234
    %v7427 = vpack.c.b16 %v7237, %v7235
    %v7428 = vpack.c.b16 %v7240, %v7238
    %v7429 = vpack.c.b16 %v7241, %v7239
    %v7430 = vpack.c.b16 %v7244, %v7242
    %v7431 = vpack.c.b16 %v7245, %v7243
    %v7432 = vpack.c.b16 %v7248, %v7246
    %v7433 = vpack.c.b16 %v7249, %v7247
    %v7434 = vpack.c.b16 %v7252, %v7250
    %v7435 = vpack.c.b16 %v7253, %v7251
    %v7436 = vpack.c.b16 %v7256, %v7254
    %v7437 = vpack.c.b16 %v7257, %v7255
    %v7438 = vpack.c.b16 %v7260, %v7258
    %v7439 = vpack.c.b16 %v7261, %v7259
    %v7440 = vpack.c.b16 %v7264, %v7262
    %v7441 = vpack.c.b16 %v7265, %v7263
    %v7442 = vpack.c.b16 %v7268, %v7266
    %v7443 = vpack.c.b16 %v7269, %v7267
    %v7444 = vpack.c.b16 %v7272, %v7270
    %v7445 = vpack.c.b16 %v7273, %v7271
    %v7446 = vpack.c.b16 %v7276, %v7274
    %v7447 = vpack.c.b16 %v7277, %v7275
    %v7448 = vpack.c.b16 %v7280, %v7278
    %v7449 = vpack.c.b16 %v7281, %v7279
    %v7450 = vpack.c.b16 %v7284, %v7282
    %v7451 = vpack.c.b16 %v7285, %v7283
    %v7452 = vpack.c.b16 %v7288, %v7286
    %v7453 = vpack.c.b16 %v7289, %v7287
    %v7454 = vpack.c.b16 %v7292, %v7290
    %v7455 = vpack.c.b16 %v7293, %v7291
    %v7456 = vpack.c.b16 %v7296, %v7294
    %v7457 = vpack.c.b16 %v7297, %v7295
    %v7458 = vpack.c.b16 %v7300, %v7298
    %v7459 = vpack.c.b16 %v7301, %v7299
    %v7460 = vpack.c.b16 %v7304, %v7302
    %v7461 = vpack.c.b16 %v7305, %v7303
    %v7462 = vpack.c.b16 %v7308, %v7306
    %v7463 = vpack.c.b16 %v7309, %v7307
    %v7464 = vpack.c.b16 %v7312, %v7310
    %v7465 = vpack.c.b16 %v7313, %v7311
    %v7466 = vpack.c.b16 %v7316, %v7314
    %v7467 = vpack.c.b16 %v7317, %v7315
    %v7468 = vpack.c.b16 %v7320, %v7318
    %v7469 = vpack.c.b16 %v7321, %v7319
    %v7470 = vpack.c.b16 %v7324, %v7322
    %v7471 = vpack.c.b16 %v7325, %v7323
    %v7472 = vpack.c.b16 %v7328, %v7326
    %v7473 = vpack.c.b16 %v7329, %v7327
    %v7474 = vpack.c.b16 %v7332, %v7330
    %v7475 = vpack.c.b16 %v7333, %v7331
    %v7476 = vpack.c.b16 %v7336, %v7334
    %v7477 = vpack.c.b16 %v7337, %v7335
    %v7478 = vpack.c.b16 %v7340, %v7338
    %v7479 = vpack.c.b16 %v7341, %v7339
    %v7480 = vpack.c.b16 %v7344, %v7342
    %v7481 = vpack.c.b16 %v7345, %v7343
    %v7482 = vpack.c.b16 %v7348, %v7346
    %v7483 = vpack.c.b16 %v7349, %v7347
    %v7484 = vpack.c.b16 %v7352, %v7350
    %v7485 = vpack.c.b16 %v7353, %v7351
    %v7486 = vpack.c.b16 %v7356, %v7354
    %v7487 = vpack.c.b16 %v7357, %v7355
    %v7488 = vpack.c.b16 %v7360, %v7358
    %v7489 = vpack.c.b16 %v7361, %v7359
    %7618 = vmatprep.subr.bf16.mxu0 %v7363
    %7619 = vmatpush1.bf16.msra.mxu0 %v7362
    %7620 = vmatprep.subr.bf16.mxu0 %v7365
    %7621 = vmatpush1.bf16.msra.mxu0 %v7364
    %7622 = vmatprep.subr.bf16.mxu0 %v7367
    %7623 = vmatpush1.bf16.msra.mxu0 %v7366
    %7624 = vmatprep.subr.bf16.mxu0 %v7369
    %7625 = vmatpush1.bf16.msra.mxu0 %v7368
    %7626 = vmatprep.subr.bf16.mxu0 %v7371
    %7627 = vmatpush1.bf16.msra.mxu0 %v7370
    %7628 = vmatprep.subr.bf16.mxu0 %v7373
    %7629 = vmatpush1.bf16.msra.mxu0 %v7372
    %7630 = vmatprep.subr.bf16.mxu0 %v7375
    %7631 = vmatpush1.bf16.msra.mxu0 %v7374
    %7632 = vmatprep.subr.bf16.mxu0 %v7377
    %7633 = vmatpush1.bf16.msra.mxu0 %v7376
    %7634 = vmatprep.subr.bf16.mxu0 %v7379
    %7635 = vmatpush1.bf16.msra.mxu0 %v7378
    %7636 = vmatprep.subr.bf16.mxu0 %v7381
    %7637 = vmatpush1.bf16.msra.mxu0 %v7380
    %7638 = vmatprep.subr.bf16.mxu0 %v7383
    %7639 = vmatpush1.bf16.msra.mxu0 %v7382
    %7640 = vmatprep.subr.bf16.mxu0 %v7385
    %7641 = vmatpush1.bf16.msra.mxu0 %v7384
    %7642 = vmatprep.subr.bf16.mxu0 %v7387
    %7643 = vmatpush1.bf16.msra.mxu0 %v7386
    %7644 = vmatprep.subr.bf16.mxu0 %v7389
    %7645 = vmatpush1.bf16.msra.mxu0 %v7388
    %7646 = vmatprep.subr.bf16.mxu0 %v7391
    %7647 = vmatpush1.bf16.msra.mxu0 %v7390
    %7648 = vmatprep.subr.bf16.mxu0 %v7393
    %7649 = vmatpush1.bf16.msra.mxu0 %v7392
    %7650 = vmatprep.mubr.bf16.mxu0 %v6958
    %7651 = vmatmul.mubr.bf16.gmra.mrb[0].mxu0 %v6957
    %v7652 = vpop.f32.mrb[0].mxu0
    %v7653 = vadd.f32 %v6971, %v7652
    %v7654 = vpop.f32.mrb[0].mxu0
    %v7655 = vadd.f32 %v6975, %v7654
    %v7656 = vpop.f32.mrb[0].mxu0
    %v7657 = vpop.f32.mrb[0].mxu0
    %7658 = vdwg.mxu0
    %7659 = vmatprep.subr.bf16.mxu0 %v7395
    %7660 = vmatpush1.bf16.msra.mxu0 %v7394
    %7661 = vmatprep.subr.bf16.mxu0 %v7397
    %7662 = vmatpush1.bf16.msra.mxu0 %v7396
    %7663 = vmatprep.subr.bf16.mxu0 %v7399
    %7664 = vmatpush1.bf16.msra.mxu0 %v7398
    %7665 = vmatprep.subr.bf16.mxu0 %v7401
    %7666 = vmatpush1.bf16.msra.mxu0 %v7400
    %7667 = vmatprep.subr.bf16.mxu0 %v7403
    %7668 = vmatpush1.bf16.msra.mxu0 %v7402
    %7669 = vmatprep.subr.bf16.mxu0 %v7405
    %7670 = vmatpush1.bf16.msra.mxu0 %v7404
    %7671 = vmatprep.subr.bf16.mxu0 %v7407
    %7672 = vmatpush1.bf16.msra.mxu0 %v7406
    %7673 = vmatprep.subr.bf16.mxu0 %v7409
    %7674 = vmatpush1.bf16.msra.mxu0 %v7408
    %7675 = vmatprep.subr.bf16.mxu0 %v7411
    %7676 = vmatpush1.bf16.msra.mxu0 %v7410
    %7677 = vmatprep.subr.bf16.mxu0 %v7413
    %7678 = vmatpush1.bf16.msra.mxu0 %v7412
    %7679 = vmatprep.subr.bf16.mxu0 %v7415
    %7680 = vmatpush1.bf16.msra.mxu0 %v7414
    %7681 = vmatprep.subr.bf16.mxu0 %v7417
    %7682 = vmatpush1.bf16.msra.mxu0 %v7416
    %7683 = vmatprep.subr.bf16.mxu0 %v7419
    %7684 = vmatpush1.bf16.msra.mxu0 %v7418
    %7685 = vmatprep.subr.bf16.mxu0 %v7421
    %7686 = vmatpush1.bf16.msra.mxu0 %v7420
    %7687 = vmatprep.subr.bf16.mxu0 %v7423
    %7688 = vmatpush1.bf16.msra.mxu0 %v7422
    %7689 = vmatprep.subr.bf16.mxu0 %v7425
    %7690 = vmatpush1.bf16.msra.mxu0 %v7424
    %7691 = vmatprep.mubr.bf16.mxu0 %v6960
    %7692 = vmatmul.mubr.bf16.gmra.mrb[0].mxu0 %v6959
    %v7693 = vpop.f32.mrb[0].mxu0
    %v7694 = vadd.f32 %v7653, %v7693
    %v7695 = vpop.f32.mrb[0].mxu0
    %v7696 = vadd.f32 %v7655, %v7695
    %v7697 = vpop.f32.mrb[0].mxu0
    %v7698 = vpop.f32.mrb[0].mxu0
    %7699 = vdwg.mxu0
    %7700 = vmatprep.subr.bf16.mxu0 %v7427
    %7701 = vmatpush1.bf16.msra.mxu0 %v7426
    %7702 = vmatprep.subr.bf16.mxu0 %v7429
    %7703 = vmatpush1.bf16.msra.mxu0 %v7428
    %7704 = vmatprep.subr.bf16.mxu0 %v7431
    %7705 = vmatpush1.bf16.msra.mxu0 %v7430
    %7706 = vmatprep.subr.bf16.mxu0 %v7433
    %7707 = vmatpush1.bf16.msra.mxu0 %v7432
    %7708 = vmatprep.subr.bf16.mxu0 %v7435
    %7709 = vmatpush1.bf16.msra.mxu0 %v7434
    %7710 = vmatprep.subr.bf16.mxu0 %v7437
    %7711 = vmatpush1.bf16.msra.mxu0 %v7436
    %7712 = vmatprep.subr.bf16.mxu0 %v7439
    %7713 = vmatpush1.bf16.msra.mxu0 %v7438
    %7714 = vmatprep.subr.bf16.mxu0 %v7441
    %7715 = vmatpush1.bf16.msra.mxu0 %v7440
    %7716 = vmatprep.subr.bf16.mxu0 %v7443
    %7717 = vmatpush1.bf16.msra.mxu0 %v7442
    %7718 = vmatprep.subr.bf16.mxu0 %v7445
    %7719 = vmatpush1.bf16.msra.mxu0 %v7444
    %7720 = vmatprep.subr.bf16.mxu0 %v7447
    %7721 = vmatpush1.bf16.msra.mxu0 %v7446
    %7722 = vmatprep.subr.bf16.mxu0 %v7449
    %7723 = vmatpush1.bf16.msra.mxu0 %v7448
    %7724 = vmatprep.subr.bf16.mxu0 %v7451
    %7725 = vmatpush1.bf16.msra.mxu0 %v7450
    %7726 = vmatprep.subr.bf16.mxu0 %v7453
    %7727 = vmatpush1.bf16.msra.mxu0 %v7452
    %7728 = vmatprep.subr.bf16.mxu0 %v7455
    %7729 = vmatpush1.bf16.msra.mxu0 %v7454
    %7730 = vmatprep.subr.bf16.mxu0 %v7457
    %7731 = vmatpush1.bf16.msra.mxu0 %v7456
    %7732 = vmatprep.mubr.bf16.mxu0 %v6962
    %7733 = vmatmul.mubr.bf16.gmra.mrb[0].mxu0 %v6961
    %v7734 = vpop.f32.mrb[0].mxu0
    %v7735 = vadd.f32 %v7694, %v7734
    %v7736 = vpop.f32.mrb[0].mxu0
    %v7737 = vadd.f32 %v7696, %v7736
    %v7738 = vpop.f32.mrb[0].mxu0
    %v7739 = vpop.f32.mrb[0].mxu0
    %7740 = vdwg.mxu0
    %7741 = vmatprep.subr.bf16.mxu0 %v7459
    %7742 = vmatpush1.bf16.msra.mxu0 %v7458
    %7743 = vmatprep.subr.bf16.mxu0 %v7461
    %7744 = vmatpush1.bf16.msra.mxu0 %v7460
    %7745 = vmatprep.subr.bf16.mxu0 %v7463
    %7746 = vmatpush1.bf16.msra.mxu0 %v7462
    %7747 = vmatprep.subr.bf16.mxu0 %v7465
    %7748 = vmatpush1.bf16.msra.mxu0 %v7464
    %7749 = vmatprep.subr.bf16.mxu0 %v7467
    %7750 = vmatpush1.bf16.msra.mxu0 %v7466
    %7751 = vmatprep.subr.bf16.mxu0 %v7469
    %7752 = vmatpush1.bf16.msra.mxu0 %v7468
    %7753 = vmatprep.subr.bf16.mxu0 %v7471
    %7754 = vmatpush1.bf16.msra.mxu0 %v7470
    %7755 = vmatprep.subr.bf16.mxu0 %v7473
    %7756 = vmatpush1.bf16.msra.mxu0 %v7472
    %7757 = vmatprep.subr.bf16.mxu0 %v7475
    %7758 = vmatpush1.bf16.msra.mxu0 %v7474
    %7759 = vmatprep.subr.bf16.mxu0 %v7477
    %7760 = vmatpush1.bf16.msra.mxu0 %v7476
    %7761 = vmatprep.subr.bf16.mxu0 %v7479
    %7762 = vmatpush1.bf16.msra.mxu0 %v7478
    %7763 = vmatprep.subr.bf16.mxu0 %v7481
    %7764 = vmatpush1.bf16.msra.mxu0 %v7480
    %7765 = vmatprep.subr.bf16.mxu0 %v7483
    %7766 = vmatpush1.bf16.msra.mxu0 %v7482
    %7767 = vmatprep.subr.bf16.mxu0 %v7485
    %7768 = vmatpush1.bf16.msra.mxu0 %v7484
    %7769 = vmatprep.subr.bf16.mxu0 %v7487
    %7770 = vmatpush1.bf16.msra.mxu0 %v7486
    %7771 = vmatprep.subr.bf16.mxu0 %v7489
    %7772 = vmatpush1.bf16.msra.mxu0 %v7488
    %7773 = vmatprep.mubr.bf16.mxu0 %v6964
    %7774 = vmatmul.mubr.bf16.gmra.mrb[0].mxu0 %v6963
    %v7775 = vpop.f32.mrb[0].mxu0
    %v7776 = vadd.f32 %v7735, %v7775
    %v7777 = vpop.f32.mrb[0].mxu0
    %v7778 = vadd.f32 %v7737, %v7777
    %v7779 = vpop.f32.mrb[0].mxu0
    %v7780 = vpop.f32.mrb[0].mxu0
    %7781 = vdwg.mxu0
    %v7782 = vmax.f32 %v7776, 0.0
    %v7783 = vmax.f32 %v7778, 0.0
    %7784 = vst [vmem:[#allocation11] sm:$0xff] %v7782
    %7785 = vst [vmem:[#allocation11 + $0x8] sm:$0xff] %v7783
    // Predicated region
    $region50: #{autoencoder_forward.1} parent=1 // pred_check
      _
    $region51: #{autoencoder_forward.1} parent=1 // pred_check_branch
      %7787 = sbr.rel (0) target = $region53
    $region52: #{autoencoder_forward.1} parent=1 // pred_region
      %s7789 = ssub.s32 256, 256
      %7790 = vsyncadd [#allocation4], %s7789
      %s7792 = sshll.u32 [#allocation11], 4
      %s7793 = int_to_ptr.vmem [resolvable:$true] %s7792
      %7795 = dma.vmem_to_hbm [thread:$0]  %s7793, 256, %s7, [#allocation4]
    $region53: #{autoencoder_forward.1} parent=1 // pred_fallthru
      _
    // Predicated region
    $region54: #{autoencoder_forward.1} parent=1 // pred_check
      _
    $region55: #{autoencoder_forward.1} parent=1 // pred_check_branch
      %7797 = sbr.rel (0) target = $region57
    $region56: #{autoencoder_forward.1} parent=1 // pred_region
      %7798 = dma.done [#allocation4], 256
    $region57: #{autoencoder_forward.1} parent=1 // pred_fallthru
      _
    %7799 = vsyncpa [#allocation3], 1
    %7800 = vsyncpa [#allocation6], 1
    %7801 = vsyncpa [#allocation9], 1
    %7802 = vsyncpa [#allocation4], 1

</llo_original>
